<compile_context>
chip_gen: v6e
topology: v6e:2x2x1
jax: 0.10.0
libtpu: 0.0.40
codegen_flags: <defaults>
</compile_context>

<pallas_src>
import jax
import jax.numpy as jnp
import numpy as np
from jax import lax
from jax.experimental import pallas as pl
from jax.experimental.pallas import tpu as pltpu

# Constants from the PyTorch module file.
EVENT_TYPE_EMB = 16
QUESTION_EMB = 16
HIDDEN_SIZE = 100
NUM_CORRECTNESS_STATES = 3

NEG_BIG = -1e30  # finite "-inf" so all-masked rows stay NaN-free


# ----------------------------- Pallas kernel ------------------------------ #
def rnn_attn_kernel(x_ref, lens_ref, labels_ref, roww_ref,
                    wih_ref, whh_ref,
                    aw_ref, ab_ref,
                    fw_ref, fb_ref, ow_ref, ob_ref,
                    loss_ref, pred_ref,
                    xproj_sc, out_sc, h_sc, c_sc, m_sc, l_sc, acc_sc):
    TCBP, H4 = xproj_sc.shape            # (time-chunk * padded batch, 4*HP)
    BP, HP = h_sc.shape                  # padded batch tile, padded hidden
    TC = TCBP // BP                      # time steps per chunk

    tci = pl.program_id(1)               # time-chunk index ("arbitrary" axis)
    n_chunks = pl.num_programs(1)

    # ---- init persistent per-batch-tile state on the first time-chunk ----
    @pl.when(tci == 0)
    def _init():
        h_sc[...] = jnp.zeros_like(h_sc)
        c_sc[...] = jnp.zeros_like(c_sc)
        acc_sc[...] = jnp.zeros_like(acc_sc)
        l_sc[...] = jnp.zeros_like(l_sc)
        m_sc[...] = jnp.full_like(m_sc, NEG_BIG)

    # ---- hoisted input projection (bias folded in via constant-1 column) ----
    # (TC*BP, DP) bf16 @ (DP, 4*HP) bf16 -> f32; includes b_ih + b_hh.
    xproj_sc[...] = jnp.dot(x_ref[...], wih_ref[...],
                            preferred_element_type=jnp.float32)

    whh = whh_ref[...]                   # (HP, 4*HP) bf16, loaded once per chunk
    lens = lens_ref[...]                 # (BP, 1) int32 sequence lengths

    h = h_sc[...]
    c = c_sc[...]

    def fast_sigmoid(z):                 # == sigmoid(z), one EUP pass not two
        return 0.5 * jnp.tanh(0.5 * z) + 0.5

    # ---- LSTM recurrence over the chunk (packed-seq semantics via lengths) ----
    for t in range(TC):
        gates = (xproj_sc[t * BP:(t + 1) * BP, :]        # x@Wih + bias (hoisted)
                 + jnp.dot(h.astype(jnp.bfloat16), whh,
                           preferred_element_type=jnp.float32))   # (BP, 4*HP)
        i_g = fast_sigmoid(gates[:, 0 * HP:1 * HP])      # PyTorch order i,f,g,o
        f_g = fast_sigmoid(gates[:, 1 * HP:2 * HP])
        g_g = jnp.tanh(gates[:, 2 * HP:3 * HP])
        o_g = fast_sigmoid(gates[:, 3 * HP:4 * HP])
        c_new = f_g * c + i_g * g_g
        h_new = o_g * jnp.tanh(c_new)

        valid = (tci * TC + t) < lens                    # (BP, 1) bool
        h = jnp.where(valid, h_new, h)                   # freeze past seq end
        c = jnp.where(valid, c_new, c)
        # pad_packed_sequence zero-pads; stash for chunk-level attention.
        out_sc[t * BP:(t + 1) * BP, :] = jnp.where(valid, h_new, 0.0)

    # ---- carry LSTM state to the next chunk ----
    h_sc[...] = h
    c_sc[...] = c

    # ---- chunk-level attention pooling (off the serial critical path) ----
    outs = out_sc[...].reshape(TC, BP, HP)                         # f32
    aw_b = aw_ref[...].reshape(1, 1, HP)
    acts = (jnp.sum(outs * aw_b, axis=-1, keepdims=True)
            + ab_ref[...].reshape(1, 1, 1))                        # (TC, BP, 1)
    t_iota = lax.broadcasted_iota(jnp.int32, (TC, BP, 1), 0) + tci * TC
    valid_chunk = t_iota < lens.reshape(1, BP, 1)
    acts = jnp.where(valid_chunk, acts, NEG_BIG)

    cmax = jnp.max(acts, axis=0)                                   # (BP, 1)
    p = jnp.where(valid_chunk, jnp.exp(acts - cmax[None, :, :]), 0.0)
    chunk_l = jnp.sum(p, axis=0)                                   # (BP, 1)
    chunk_acc = jnp.sum(outs * p, axis=0)                          # (BP, HP)

    # flash-style merge with running (max, denom, weighted-sum)
    m = m_sc[...]
    m_new = jnp.maximum(m, cmax)
    a_old = jnp.exp(m - m_new)
    a_chk = jnp.exp(cmax - m_new)
    l_new = a_old * l_sc[...] + a_chk * chunk_l
    acc_new = a_old * acc_sc[...] + a_chk * chunk_acc
    m_sc[...] = m_new
    l_sc[...] = l_new
    acc_sc[...] = acc_new

    # ---- finalize on the last chunk: attention normalize, FF, output, BCE ----
    @pl.when(tci == n_chunks - 1)
    def _finalize():
        denom = jnp.where(l_new > 0.0, l_new, 1.0)       # guard all-masked rows
        pred_state = acc_new / denom                     # (BP, HP)

        # hidden_layers: Dropout(eval) -> ReLU -> Linear(H, H)
        hidden = (jnp.dot(jnp.maximum(pred_state, 0.0), fw_ref[...],
                          preferred_element_type=jnp.float32) + fb_ref[...])

        # pred_output_layer: Dropout(eval) -> Linear(H, 1)
        preds = (jnp.dot(hidden, ow_ref[...],
                         preferred_element_type=jnp.float32) + ob_ref[...])
        pred_ref[...] = preds

        # BCEWithLogitsLoss(reduction='mean'): per-row weighted contributions,
        # summed in the wrapper (row weight = 1/B for real rows, 0 for pads).
        y = labels_ref[...]
        bce = (jnp.maximum(preds, 0.0) - preds * y
               + jnp.log(1.0 + jnp.exp(-jnp.abs(preds))))
        loss_ref[...] = bce * roww_ref[...]


def run_model(x, lens, labels_p, row_w, kp, *, time_chunk):
    """x: (NB, T*BPT, DP) bf16 (time-major inside each batch tile);
    lens/labels_p/row_w: (NB, BPT, 1)."""
    NB, TBP, DP = x.shape
    _, BPT, _ = lens.shape
    T = TBP // BPT
    TC = time_chunk
    assert T % TC == 0
    NC = T // TC
    HP = kp['whh'].shape[0]
    H4 = kp['whh'].shape[1]

    grid_spec = pltpu.PrefetchScalarGridSpec(
        num_scalar_prefetch=0,
        grid=(NB, NC),                                       # (batch-tile, time)
        in_specs=[
            pl.BlockSpec((None, TC * BPT, DP), lambda b, t: (b, t, 0)),  # x chunk
            pl.BlockSpec((None, BPT, 1), lambda b, t: (b, 0, 0)),        # lengths
            pl.BlockSpec((None, BPT, 1), lambda b, t: (b, 0, 0)),        # labels
            pl.BlockSpec((None, BPT, 1), lambda b, t: (b, 0, 0)),        # row weights
            pl.BlockSpec((DP, H4), lambda b, t: (0, 0)),                 # Wih+bias (bf16)
            pl.BlockSpec((HP, H4), lambda b, t: (0, 0)),                 # Whh (bf16)
            pl.BlockSpec((1, HP), lambda b, t: (0, 0)),                  # attention w
            pl.BlockSpec((1, 1), lambda b, t: (0, 0)),                   # attention b
            pl.BlockSpec((HP, HP), lambda b, t: (0, 0)),                 # ff w
            pl.BlockSpec((1, HP), lambda b, t: (0, 0)),                  # ff b
            pl.BlockSpec((HP, 1), lambda b, t: (0, 0)),                  # out w
            pl.BlockSpec((1, 1), lambda b, t: (0, 0)),                   # out b
        ],
        out_specs=(
            pl.BlockSpec((None, BPT, 1), lambda b, t: (b, 0, 0)),        # per-row loss
            pl.BlockSpec((None, BPT, 1), lambda b, t: (b, 0, 0)),        # preds
        ),
        scratch_shapes=[
            pltpu.VMEM((TC * BPT, H4), jnp.float32),   # x-projection slab
            pltpu.VMEM((TC * BPT, HP), jnp.float32),   # per-chunk lstm outputs
            pltpu.VMEM((BPT, HP), jnp.float32),        # h
            pltpu.VMEM((BPT, HP), jnp.float32),        # c
            pltpu.VMEM((BPT, 1), jnp.float32),         # attn running max
            pltpu.VMEM((BPT, 1), jnp.float32),         # attn running denom
            pltpu.VMEM((BPT, HP), jnp.float32),        # attn running sum
        ],
    )

    loss_rows, preds = pl.pallas_call(
        rnn_attn_kernel,
        out_shape=(jax.ShapeDtypeStruct((NB, BPT, 1), jnp.float32),
                   jax.ShapeDtypeStruct((NB, BPT, 1), jnp.float32)),
        grid_spec=grid_spec,
        compiler_params=pltpu.CompilerParams(
            dimension_semantics=("parallel", "arbitrary"),  # batch ∥, time sequential
            vmem_limit_bytes=32 * 1024 * 1024),
    )(x, lens, labels_p, row_w,
      kp['wih'], kp['whh'],
      kp['aw'], kp['ab'],
      kp['fw'], kp['fb'], kp['ow'], kp['ob'])
    return jnp.sum(loss_rows), preds.reshape(NB * BPT)


# --------------------------- parameter init (glue) ------------------------- #
def init_params(key, d_in, h):
    ks = jax.random.split(key, 9)
    k = 1.0 / np.sqrt(h)
    return dict(
        # LSTM weights, pre-transposed so the math is x @ W; gate order i,f,g,o
        wih=jax.random.uniform(ks[0], (4, d_in, h), jnp.float32, -k, k),
        whh=jax.random.uniform(ks[1], (4, h, h), jnp.float32, -k, k),
        b=(jax.random.uniform(ks[2], (4, 1, h), jnp.float32, -k, k)
           + jax.random.uniform(ks[3], (4, 1, h), jnp.float32, -k, k)),  # b_ih + b_hh
        # attention = nn.Linear(H, 1)
        aw=jax.random.uniform(ks[4], (1, 1, h), jnp.float32, -k, k),
        ab=jax.random.uniform(ks[5], (1, 1, 1), jnp.float32, -k, k),
        # hidden_layers Linear(H, H)   (stored as W^T)
        fw=jax.random.uniform(ks[6], (h, h), jnp.float32, -k, k),
        fb=jax.random.uniform(ks[7], (1, h), jnp.float32, -k, k),
        # pred_output_layer Linear(H, 1)  (stored as W^T)
        ow=jax.random.uniform(ks[8], (h, 1), jnp.float32, -k, k),
        ob=jnp.zeros((1, 1), jnp.float32),
    )


def build_kernel_params(p, d_in, h, DP, HP):
    """Fuse the 4 gates, zero-pad D_in->DP and H->HP, fold the fused bias into
    Wih row `d_in` (paired with a constant-1.0 column in x); MXU operands bf16."""
    wih = np.zeros((DP, 4 * HP), np.float32)
    whh = np.zeros((HP, 4 * HP), np.float32)
    for g in range(4):
        wih[:d_in, g * HP:g * HP + h] = np.asarray(p['wih'][g])
        wih[d_in, g * HP:g * HP + h] = np.asarray(p['b'][g, 0])   # folded bias row
        whh[:h, g * HP:g * HP + h] = np.asarray(p['whh'][g])
    aw = np.zeros((1, HP), np.float32); aw[0, :h] = np.asarray(p['aw']).reshape(h)
    fw = np.zeros((HP, HP), np.float32); fw[:h, :h] = np.asarray(p['fw'])
    fb = np.zeros((1, HP), np.float32); fb[0, :h] = np.asarray(p['fb']).reshape(h)
    ow = np.zeros((HP, 1), np.float32); ow[:h, 0] = np.asarray(p['ow']).reshape(h)
    return dict(
        wih=jnp.asarray(wih, jnp.bfloat16),
        whh=jnp.asarray(whh, jnp.bfloat16),
        aw=jnp.asarray(aw),
        ab=jnp.asarray(np.asarray(p['ab']).reshape(1, 1)),
        fw=jnp.asarray(fw),
        fb=jnp.asarray(fb),
        ow=jnp.asarray(ow),
        ob=jnp.asarray(np.asarray(p['ob']).reshape(1, 1)),
    )


# ------------------------- pure-JAX reference (check) ---------------------- #
def reference(lstm_input, mask, labels, params):
    B, T, _ = lstm_input.shape
    H = params['whh'].shape[-1]
    wih, whh, b = params['wih'], params['whh'], params['b']

    def cell(carry, inp):
        h, c = carry
        x_t, m_t = inp

        def gate(g):
            return x_t @ wih[g] + h @ whh[g] + b[g]

        i = jax.nn.sigmoid(gate(0)); f = jax.nn.sigmoid(gate(1))
        gg = jnp.tanh(gate(2)); o = jax.nn.sigmoid(gate(3))
        c_new = f * c + i * gg
        h_new = o * jnp.tanh(c_new)
        m = m_t[:, None]
        h2 = jnp.where(m > 0, h_new, h)
        c2 = jnp.where(m > 0, c_new, c)
        return (h2, c2), h2 * m

    xs = (jnp.transpose(lstm_input, (1, 0, 2)), jnp.transpose(mask, (1, 0)))
    _, outs = lax.scan(cell, (jnp.zeros((B, H)), jnp.zeros((B, H))), xs)
    out = jnp.transpose(outs, (1, 0, 2))                                   # (B,T,H)
    act = jnp.sum(out * params['aw'].reshape(1, 1, H), axis=-1) + params['ab'].reshape(())
    act = jnp.where(mask > 0, act, -jnp.inf)
    attn = jax.nn.softmax(act, axis=1)
    pred_state = jnp.sum(out * attn[..., None], axis=1)                    # (B,H)
    pred_state = jnp.maximum(pred_state, 0.0) @ params['fw'] + params['fb']
    preds = (pred_state @ params['ow'] + params['ob'])[:, 0]
    z, y = preds, labels
    loss = jnp.mean(jnp.maximum(z, 0.0) - z * y + jnp.log(1.0 + jnp.exp(-jnp.abs(z))))
    return loss, preds


# ----------------------------------- main ---------------------------------- #
if __name__ == "__main__":
    key = jax.random.PRNGKey(0)
    B, T = 4, 16
    NB = 1             # batch tiles (grid "parallel" axis; v7x uses >=2)
    BPT = 8            # padded batch rows per tile (f32 sublane count)
    TC = 8             # time-chunk per grid step (grid time extent = T // TC = 2)
    DP, HP = 128, 128  # padded D_in / hidden (lane-aligned)
    num_event_types, num_questions = 10, 20
    D_IN = EVENT_TYPE_EMB + 1 + QUESTION_EMB + NUM_CORRECTNESS_STATES  # = 36

    k_emb1, k_emb2, k_batch, k_params = jax.random.split(key, 4)
    event_emb = jax.random.normal(k_emb1, (num_event_types, EVENT_TYPE_EMB), jnp.float32)
    question_emb = jax.random.normal(k_emb2, (num_questions, QUESTION_EMB), jnp.float32)

    kb = jax.random.split(k_batch, 5)
    event_types = jax.random.randint(kb[0], (B, T), 0, num_event_types)
    question_ids = jax.random.randint(kb[1], (B, T), 0, num_questions)
    correctness = jax.random.randint(kb[2], (B, T), 0, NUM_CORRECTNESS_STATES)
    time_deltas = jax.random.uniform(kb[3], (B, T), jnp.float32)
    sequence_lengths = jnp.array([T, T - 3, 9, 5], dtype=jnp.int32)
    labels = jax.random.bernoulli(kb[4], 0.5, (B,)).astype(jnp.float32)

    params = init_params(k_params, D_IN, HIDDEN_SIZE)
    # Quantize MXU-facing weights through bf16 once so kernel (bf16 operands,
    # f32 acc) and reference (f32 on the same quantized values) match.
    params['wih'] = params['wih'].astype(jnp.bfloat16).astype(jnp.float32)
    params['whh'] = params['whh'].astype(jnp.bfloat16).astype(jnp.float32)
    params['b'] = params['b'].astype(jnp.bfloat16).astype(jnp.float32)  # bias folded -> bf16

    # glue: embedding lookups + concat (mirrors the PyTorch forward prologue)
    ev = event_emb[event_types]                                        # (B,T,16)
    td = time_deltas[..., None]                                        # (B,T,1)
    q = question_emb[question_ids]                                     # (B,T,16)
    corr = jnp.eye(NUM_CORRECTNESS_STATES, dtype=jnp.float32)[correctness]  # (B,T,3)
    lstm_input = jnp.concatenate([ev, td, q, corr], axis=-1)           # (B,T,36)
    lstm_input = lstm_input.astype(jnp.bfloat16).astype(jnp.float32)
    mask = (jnp.arange(T)[None, :] < sequence_lengths[:, None]).astype(jnp.float32)

    # ---- pad to kernel layout: time-major per batch tile, flattened, bf16 ----
    x_pad = np.zeros((T, BPT, DP), np.float32)
    x_pad[:, :B, :D_IN] = np.asarray(jnp.transpose(lstm_input, (1, 0, 2)))
    x_pad[:, :, D_IN] = 1.0            # constant-1 column pairs with folded bias row
    x = jnp.asarray(x_pad.reshape(1, T * BPT, DP), jnp.bfloat16)       # (NB, T*BPT, DP)

    lens_pad = np.zeros((NB, BPT, 1), np.int32)
    lens_pad[0, :B, 0] = np.asarray(sequence_lengths)
    lens_p = jnp.asarray(lens_pad)

    labels_pad = np.zeros((NB, BPT, 1), np.float32)
    labels_pad[0, :B, 0] = np.asarray(labels)
    labels_p = jnp.asarray(labels_pad)

    row_w = np.zeros((NB, BPT, 1), np.float32)                         # mean over real rows
    row_w[0, :B, 0] = 1.0 / B
    row_w = jnp.asarray(row_w)

    kparams = build_kernel_params(params, D_IN, HIDDEN_SIZE, DP, HP)

    loss, preds = run_model(x, lens_p, labels_p, row_w, kparams, time_chunk=TC)
    jax.block_until_ready((loss, preds))

    ref_loss, ref_preds = reference(lstm_input, mask, labels, params)
    np.testing.assert_allclose(np.asarray(preds[:B]), np.asarray(ref_preds),
                               rtol=5e-3, atol=5e-3)
    np.testing.assert_allclose(np.asarray(loss), np.asarray(ref_loss),
                               rtol=5e-3, atol=5e-3)

    print("KERNEL_OK")
</pallas_src>

<mosaic_0001>
module attributes {stable_mosaic.version = 11 : i64} {
  func.func @rnn_attn_kernel(%arg0: i32, %arg1: i32, %arg2: memref<1x64x128xbf16, #tpu.memory_space<vmem>>, %arg3: memref<1x8x1xi32, #tpu.memory_space<vmem>>, %arg4: memref<1x8x1xf32, #tpu.memory_space<vmem>>, %arg5: memref<1x8x1xf32, #tpu.memory_space<vmem>>, %arg6: memref<128x512xbf16, #tpu.memory_space<vmem>>, %arg7: memref<128x512xbf16, #tpu.memory_space<vmem>>, %arg8: memref<1x128xf32, #tpu.memory_space<vmem>>, %arg9: memref<1x1xf32, #tpu.memory_space<vmem>>, %arg10: memref<128x128xf32, #tpu.memory_space<vmem>>, %arg11: memref<1x128xf32, #tpu.memory_space<vmem>>, %arg12: memref<128x1xf32, #tpu.memory_space<vmem>>, %arg13: memref<1x1xf32, #tpu.memory_space<vmem>>, %arg14: memref<1x8x1xf32, #tpu.memory_space<vmem>>, %arg15: memref<1x8x1xf32, #tpu.memory_space<vmem>>, %arg16: memref<64x512xf32, #tpu.memory_space<vmem>>, %arg17: memref<64x128xf32, #tpu.memory_space<vmem>>, %arg18: memref<8x128xf32, #tpu.memory_space<vmem>>, %arg19: memref<8x128xf32, #tpu.memory_space<vmem>>, %arg20: memref<8x1xf32, #tpu.memory_space<vmem>>, %arg21: memref<8x1xf32, #tpu.memory_space<vmem>>, %arg22: memref<8x128xf32, #tpu.memory_space<vmem>>) attributes {dimension_semantics = [#tpu.dimension_semantics<parallel>, #tpu.dimension_semantics<arbitrary>], iteration_bounds = array<i64: 1, 2>, scalar_prefetch = 0 : i64, scratch_operands = 7 : i64, tpu.core_type = #tpu.core_type<tc>, window_params = [{transform_indices = @transform_0, window_bounds = array<i64: 1, 64, 128>}, {transform_indices = @transform_1, window_bounds = array<i64: 1, 8, 1>}, {transform_indices = @transform_2, window_bounds = array<i64: 1, 8, 1>}, {transform_indices = @transform_3, window_bounds = array<i64: 1, 8, 1>}, {pipeline_mode = #tpu.pipeline_mode<synchronous>, transform_indices = @transform_4, window_bounds = array<i64: 128, 512>}, {pipeline_mode = #tpu.pipeline_mode<synchronous>, transform_indices = @transform_5, window_bounds = array<i64: 128, 512>}, {pipeline_mode = #tpu.pipeline_mode<synchronous>, transform_indices = @transform_6, window_bounds = array<i64: 1, 128>}, {pipeline_mode = #tpu.pipeline_mode<synchronous>, transform_indices = @transform_7, window_bounds = array<i64: 1, 1>}, {pipeline_mode = #tpu.pipeline_mode<synchronous>, transform_indices = @transform_8, window_bounds = array<i64: 128, 128>}, {pipeline_mode = #tpu.pipeline_mode<synchronous>, transform_indices = @transform_9, window_bounds = array<i64: 1, 128>}, {pipeline_mode = #tpu.pipeline_mode<synchronous>, transform_indices = @transform_10, window_bounds = array<i64: 128, 1>}, {pipeline_mode = #tpu.pipeline_mode<synchronous>, transform_indices = @transform_11, window_bounds = array<i64: 1, 1>}, {transform_indices = @transform_12, window_bounds = array<i64: 1, 8, 1>}, {transform_indices = @transform_13, window_bounds = array<i64: 1, 8, 1>}]} {
    %c0_i32 = arith.constant 0 : i32
    %0 = arith.cmpi eq, %arg1, %c0_i32 : i32
    %1 = arith.extui %0 : i1 to i32
    %c0_i32_0 = arith.constant 0 : i32
    %2 = arith.cmpi ne, %1, %c0_i32_0 : i32
    scf.if %2 {
      %cst_168 = arith.constant 0.000000e+00 : f32
      %469 = vector.broadcast %cst_168 : f32 to vector<8x128xf32>
      %c0_169 = arith.constant 0 : index
      %c0_170 = arith.constant 0 : index
      %470 = vector.load %arg18[%c0_169, %c0_170] : memref<8x128xf32, #tpu.memory_space<vmem>>, vector<8x128xf32>
      tpu.vector_store %arg18[%c0_169, %c0_170], %469 {strides = array<i32>} : memref<8x128xf32, #tpu.memory_space<vmem>>, vector<8x128xf32>,
      %cst_171 = arith.constant 0.000000e+00 : f32
      %471 = vector.broadcast %cst_171 : f32 to vector<8x128xf32>
      %c0_172 = arith.constant 0 : index
      %c0_173 = arith.constant 0 : index
      %472 = vector.load %arg19[%c0_172, %c0_173] : memref<8x128xf32, #tpu.memory_space<vmem>>, vector<8x128xf32>
      tpu.vector_store %arg19[%c0_172, %c0_173], %471 {strides = array<i32>} : memref<8x128xf32, #tpu.memory_space<vmem>>, vector<8x128xf32>,
      %cst_174 = arith.constant 0.000000e+00 : f32
      %473 = vector.broadcast %cst_174 : f32 to vector<8x128xf32>
      %c0_175 = arith.constant 0 : index
      %c0_176 = arith.constant 0 : index
      %474 = vector.load %arg22[%c0_175, %c0_176] : memref<8x128xf32, #tpu.memory_space<vmem>>, vector<8x128xf32>
      tpu.vector_store %arg22[%c0_175, %c0_176], %473 {strides = array<i32>} : memref<8x128xf32, #tpu.memory_space<vmem>>, vector<8x128xf32>,
      %cst_177 = arith.constant 0.000000e+00 : f32
      %475 = vector.broadcast %cst_177 : f32 to vector<8x1xf32>
      %c0_178 = arith.constant 0 : index
      %c0_179 = arith.constant 0 : index
      %476 = vector.load %arg21[%c0_178, %c0_179] : memref<8x1xf32, #tpu.memory_space<vmem>>, vector<8x1xf32>
      tpu.vector_store %arg21[%c0_178, %c0_179], %475 {strides = array<i32>} : memref<8x1xf32, #tpu.memory_space<vmem>>, vector<8x1xf32>,
      %cst_180 = arith.constant -1.000000e+30 : f32
      %477 = vector.broadcast %cst_180 : f32 to vector<8x1xf32>
      %c0_181 = arith.constant 0 : index
      %c0_182 = arith.constant 0 : index
      %478 = vector.load %arg20[%c0_181, %c0_182] : memref<8x1xf32, #tpu.memory_space<vmem>>, vector<8x1xf32>
      tpu.vector_store %arg20[%c0_181, %c0_182], %477 {strides = array<i32>} : memref<8x1xf32, #tpu.memory_space<vmem>>, vector<8x1xf32>,
    } else {
    }
    %c0 = arith.constant 0 : index
    %c0_1 = arith.constant 0 : index
    %c0_2 = arith.constant 0 : index
    %3 = vector.load %arg2[%c0, %c0_1, %c0_2] : memref<1x64x128xbf16, #tpu.memory_space<vmem>>, vector<1x64x128xbf16>
    %4 = vector.shape_cast %3 : vector<1x64x128xbf16> to vector<64x128xbf16>
    %c0_3 = arith.constant 0 : index
    %c0_4 = arith.constant 0 : index
    %5 = vector.load %arg6[%c0_3, %c0_4] : memref<128x512xbf16, #tpu.memory_space<vmem>>, vector<128x512xbf16>
    %cst = arith.constant dense<0.000000e+00> : vector<64x512xf32>
    %6 = tpu.matmul %4, %5, %cst {dimension_numbers = #tpu.dot_dimension_numbers<[1], [0], [0], [1], [0, 0, 1, 1], [], []>} : vector<64x128xbf16>, vector<128x512xbf16>, vector<64x512xf32> -> vector<64x512xf32>
    %c0_5 = arith.constant 0 : index
    %c0_6 = arith.constant 0 : index
    %7 = vector.load %arg16[%c0_5, %c0_6] : memref<64x512xf32, #tpu.memory_space<vmem>>, vector<64x512xf32>
    tpu.vector_store %arg16[%c0_5, %c0_6], %6 {strides = array<i32>} : memref<64x512xf32, #tpu.memory_space<vmem>>, vector<64x512xf32>,
    %c0_7 = arith.constant 0 : index
    %c0_8 = arith.constant 0 : index
    %8 = vector.load %arg7[%c0_7, %c0_8] : memref<128x512xbf16, #tpu.memory_space<vmem>>, vector<128x512xbf16>
    %c0_9 = arith.constant 0 : index
    %c0_10 = arith.constant 0 : index
    %c0_11 = arith.constant 0 : index
    %9 = vector.load %arg3[%c0_9, %c0_10, %c0_11] : memref<1x8x1xi32, #tpu.memory_space<vmem>>, vector<1x8x1xi32>
    %10 = vector.shape_cast %9 : vector<1x8x1xi32> to vector<8x1xi32>
    %c0_12 = arith.constant 0 : index
    %c0_13 = arith.constant 0 : index
    %11 = vector.load %arg18[%c0_12, %c0_13] : memref<8x128xf32, #tpu.memory_space<vmem>>, vector<8x128xf32>
    %c0_14 = arith.constant 0 : index
    %c0_15 = arith.constant 0 : index
    %12 = vector.load %arg19[%c0_14, %c0_15] : memref<8x128xf32, #tpu.memory_space<vmem>>, vector<8x128xf32>
    %c0_16 = arith.constant 0 : index
    %c0_17 = arith.constant 0 : index
    %13 = vector.load %arg16[%c0_16, %c0_17] : memref<64x512xf32, #tpu.memory_space<vmem>>, vector<8x512xf32>
    %14 = arith.truncf %11 : vector<8x128xf32> to vector<8x128xbf16>
    %cst_18 = arith.constant dense<0.000000e+00> : vector<8x512xf32>
    %15 = tpu.matmul %14, %8, %cst_18 {dimension_numbers = #tpu.dot_dimension_numbers<[1], [0], [0], [1], [0, 0, 1, 1], [], []>} : vector<8x128xbf16>, vector<128x512xbf16>, vector<8x512xf32> -> vector<8x512xf32>
    %16 = arith.addf %13, %15 : vector<8x512xf32>
    %17 = vector.extract_strided_slice %16 {offsets = [0, 0], sizes = [8, 128], strides = [1, 1]} : vector<8x512xf32> to vector<8x128xf32>
    %cst_19 = arith.constant 5.000000e-01 : f32
    %18 = vector.broadcast %cst_19 : f32 to vector<8x128xf32>
    %19 = arith.mulf %18, %17 : vector<8x128xf32>
    %20 = math.tanh %19 : vector<8x128xf32>
    %cst_20 = arith.constant 5.000000e-01 : f32
    %21 = vector.broadcast %cst_20 : f32 to vector<8x128xf32>
    %22 = arith.mulf %21, %20 : vector<8x128xf32>
    %cst_21 = arith.constant 5.000000e-01 : f32
    %23 = vector.broadcast %cst_21 : f32 to vector<8x128xf32>
    %24 = arith.addf %22, %23 : vector<8x128xf32>
    %25 = vector.extract_strided_slice %16 {offsets = [0, 128], sizes = [8, 128], strides = [1, 1]} : vector<8x512xf32> to vector<8x128xf32>
    %cst_22 = arith.constant 5.000000e-01 : f32
    %26 = vector.broadcast %cst_22 : f32 to vector<8x128xf32>
    %27 = arith.mulf %26, %25 : vector<8x128xf32>
    %28 = math.tanh %27 : vector<8x128xf32>
    %cst_23 = arith.constant 5.000000e-01 : f32
    %29 = vector.broadcast %cst_23 : f32 to vector<8x128xf32>
    %30 = arith.mulf %29, %28 : vector<8x128xf32>
    %cst_24 = arith.constant 5.000000e-01 : f32
    %31 = vector.broadcast %cst_24 : f32 to vector<8x128xf32>
    %32 = arith.addf %30, %31 : vector<8x128xf32>
    %33 = vector.extract_strided_slice %16 {offsets = [0, 256], sizes = [8, 128], strides = [1, 1]} : vector<8x512xf32> to vector<8x128xf32>
    %34 = math.tanh %33 : vector<8x128xf32>
    %35 = vector.extract_strided_slice %16 {offsets = [0, 384], sizes = [8, 128], strides = [1, 1]} : vector<8x512xf32> to vector<8x128xf32>
    %cst_25 = arith.constant 5.000000e-01 : f32
    %36 = vector.broadcast %cst_25 : f32 to vector<8x128xf32>
    %37 = arith.mulf %36, %35 : vector<8x128xf32>
    %38 = math.tanh %37 : vector<8x128xf32>
    %cst_26 = arith.constant 5.000000e-01 : f32
    %39 = vector.broadcast %cst_26 : f32 to vector<8x128xf32>
    %40 = arith.mulf %39, %38 : vector<8x128xf32>
    %cst_27 = arith.constant 5.000000e-01 : f32
    %41 = vector.broadcast %cst_27 : f32 to vector<8x128xf32>
    %42 = arith.addf %40, %41 : vector<8x128xf32>
    %43 = arith.mulf %32, %12 : vector<8x128xf32>
    %44 = arith.mulf %24, %34 : vector<8x128xf32>
    %45 = arith.addf %43, %44 : vector<8x128xf32>
    %46 = math.tanh %45 : vector<8x128xf32>
    %47 = arith.mulf %42, %46 : vector<8x128xf32>
    %c8_i32 = arith.constant 8 : i32
    %48 = arith.muli %arg1, %c8_i32 : i32
    %c0_i32_28 = arith.constant 0 : i32
    %49 = arith.addi %48, %c0_i32_28 : i32
    %50 = vector.broadcast %49 : i32 to vector<8x1xi32>
    %51 = arith.cmpi slt, %50, %10 : vector<8x1xi32>
    %52 = vector.shape_cast %51 : vector<8x1xi1> to vector<8x1xi1>
    %53 = vector.broadcast %52 : vector<8x1xi1> to vector<8x128xi1>
    %54 = arith.select %53, %47, %11 : vector<8x128xi1>, vector<8x128xf32>
    %55 = vector.shape_cast %51 : vector<8x1xi1> to vector<8x1xi1>
    %56 = vector.broadcast %55 : vector<8x1xi1> to vector<8x128xi1>
    %57 = arith.select %56, %45, %12 : vector<8x128xi1>, vector<8x128xf32>
    %cst_29 = arith.constant 0.000000e+00 : f32
    %58 = vector.shape_cast %51 : vector<8x1xi1> to vector<8x1xi1>
    %59 = vector.broadcast %58 : vector<8x1xi1> to vector<8x128xi1>
    %60 = vector.broadcast %cst_29 : f32 to vector<8x128xf32>
    %61 = arith.select %59, %47, %60 : vector<8x128xi1>, vector<8x128xf32>
    %c0_30 = arith.constant 0 : index
    %c0_31 = arith.constant 0 : index
    %62 = vector.load %arg17[%c0_30, %c0_31] : memref<64x128xf32, #tpu.memory_space<vmem>>, vector<8x128xf32>
    tpu.vector_store %arg17[%c0_30, %c0_31], %61 {strides = array<i32>} : memref<64x128xf32, #tpu.memory_space<vmem>>, vector<8x128xf32>,
    %c8 = arith.constant 8 : index
    %c0_32 = arith.constant 0 : index
    %63 = vector.load %arg16[%c8, %c0_32] : memref<64x512xf32, #tpu.memory_space<vmem>>, vector<8x512xf32>
    %64 = arith.truncf %54 : vector<8x128xf32> to vector<8x128xbf16>
    %cst_33 = arith.constant dense<0.000000e+00> : vector<8x512xf32>
    %65 = tpu.matmul %64, %8, %cst_33 {dimension_numbers = #tpu.dot_dimension_numbers<[1], [0], [0], [1], [0, 0, 1, 1], [], []>} : vector<8x128xbf16>, vector<128x512xbf16>, vector<8x512xf32> -> vector<8x512xf32>
    %66 = arith.addf %63, %65 : vector<8x512xf32>
    %67 = vector.extract_strided_slice %66 {offsets = [0, 0], sizes = [8, 128], strides = [1, 1]} : vector<8x512xf32> to vector<8x128xf32>
    %cst_34 = arith.constant 5.000000e-01 : f32
    %68 = vector.broadcast %cst_34 : f32 to vector<8x128xf32>
    %69 = arith.mulf %68, %67 : vector<8x128xf32>
    %70 = math.tanh %69 : vector<8x128xf32>
    %cst_35 = arith.constant 5.000000e-01 : f32
    %71 = vector.broadcast %cst_35 : f32 to vector<8x128xf32>
    %72 = arith.mulf %71, %70 : vector<8x128xf32>
    %cst_36 = arith.constant 5.000000e-01 : f32
    %73 = vector.broadcast %cst_36 : f32 to vector<8x128xf32>
    %74 = arith.addf %72, %73 : vector<8x128xf32>
    %75 = vector.extract_strided_slice %66 {offsets = [0, 128], sizes = [8, 128], strides = [1, 1]} : vector<8x512xf32> to vector<8x128xf32>
    %cst_37 = arith.constant 5.000000e-01 : f32
    %76 = vector.broadcast %cst_37 : f32 to vector<8x128xf32>
    %77 = arith.mulf %76, %75 : vector<8x128xf32>
    %78 = math.tanh %77 : vector<8x128xf32>
    %cst_38 = arith.constant 5.000000e-01 : f32
    %79 = vector.broadcast %cst_38 : f32 to vector<8x128xf32>
    %80 = arith.mulf %79, %78 : vector<8x128xf32>
    %cst_39 = arith.constant 5.000000e-01 : f32
    %81 = vector.broadcast %cst_39 : f32 to vector<8x128xf32>
    %82 = arith.addf %80, %81 : vector<8x128xf32>
    %83 = vector.extract_strided_slice %66 {offsets = [0, 256], sizes = [8, 128], strides = [1, 1]} : vector<8x512xf32> to vector<8x128xf32>
    %84 = math.tanh %83 : vector<8x128xf32>
    %85 = vector.extract_strided_slice %66 {offsets = [0, 384], sizes = [8, 128], strides = [1, 1]} : vector<8x512xf32> to vector<8x128xf32>
    %cst_40 = arith.constant 5.000000e-01 : f32
    %86 = vector.broadcast %cst_40 : f32 to vector<8x128xf32>
    %87 = arith.mulf %86, %85 : vector<8x128xf32>
    %88 = math.tanh %87 : vector<8x128xf32>
    %cst_41 = arith.constant 5.000000e-01 : f32
    %89 = vector.broadcast %cst_41 : f32 to vector<8x128xf32>
    %90 = arith.mulf %89, %88 : vector<8x128xf32>
    %cst_42 = arith.constant 5.000000e-01 : f32
    %91 = vector.broadcast %cst_42 : f32 to vector<8x128xf32>
    %92 = arith.addf %90, %91 : vector<8x128xf32>
    %93 = arith.mulf %82, %57 : vector<8x128xf32>
    %94 = arith.mulf %74, %84 : vector<8x128xf32>
    %95 = arith.addf %93, %94 : vector<8x128xf32>
    %96 = math.tanh %95 : vector<8x128xf32>
    %97 = arith.mulf %92, %96 : vector<8x128xf32>
    %c8_i32_43 = arith.constant 8 : i32
    %98 = arith.muli %arg1, %c8_i32_43 : i32
    %c1_i32 = arith.constant 1 : i32
    %99 = arith.addi %98, %c1_i32 : i32
    %100 = vector.broadcast %99 : i32 to vector<8x1xi32>
    %101 = arith.cmpi slt, %100, %10 : vector<8x1xi32>
    %102 = vector.shape_cast %101 : vector<8x1xi1> to vector<8x1xi1>
    %103 = vector.broadcast %102 : vector<8x1xi1> to vector<8x128xi1>
    %104 = arith.select %103, %97, %54 : vector<8x128xi1>, vector<8x128xf32>
    %105 = vector.shape_cast %101 : vector<8x1xi1> to vector<8x1xi1>
    %106 = vector.broadcast %105 : vector<8x1xi1> to vector<8x128xi1>
    %107 = arith.select %106, %95, %57 : vector<8x128xi1>, vector<8x128xf32>
    %cst_44 = arith.constant 0.000000e+00 : f32
    %108 = vector.shape_cast %101 : vector<8x1xi1> to vector<8x1xi1>
    %109 = vector.broadcast %108 : vector<8x1xi1> to vector<8x128xi1>
    %110 = vector.broadcast %cst_44 : f32 to vector<8x128xf32>
    %111 = arith.select %109, %97, %110 : vector<8x128xi1>, vector<8x128xf32>
    %c8_45 = arith.constant 8 : index
    %c0_46 = arith.constant 0 : index
    %112 = vector.load %arg17[%c8_45, %c0_46] : memref<64x128xf32, #tpu.memory_space<vmem>>, vector<8x128xf32>
    tpu.vector_store %arg17[%c8_45, %c0_46], %111 {strides = array<i32>} : memref<64x128xf32, #tpu.memory_space<vmem>>, vector<8x128xf32>,
    %c16 = arith.constant 16 : index
    %c0_47 = arith.constant 0 : index
    %113 = vector.load %arg16[%c16, %c0_47] : memref<64x512xf32, #tpu.memory_space<vmem>>, vector<8x512xf32>
    %114 = arith.truncf %104 : vector<8x128xf32> to vector<8x128xbf16>
    %cst_48 = arith.constant dense<0.000000e+00> : vector<8x512xf32>
    %115 = tpu.matmul %114, %8, %cst_48 {dimension_numbers = #tpu.dot_dimension_numbers<[1], [0], [0], [1], [0, 0, 1, 1], [], []>} : vector<8x128xbf16>, vector<128x512xbf16>, vector<8x512xf32> -> vector<8x512xf32>
    %116 = arith.addf %113, %115 : vector<8x512xf32>
    %117 = vector.extract_strided_slice %116 {offsets = [0, 0], sizes = [8, 128], strides = [1, 1]} : vector<8x512xf32> to vector<8x128xf32>
    %cst_49 = arith.constant 5.000000e-01 : f32
    %118 = vector.broadcast %cst_49 : f32 to vector<8x128xf32>
    %119 = arith.mulf %118, %117 : vector<8x128xf32>
    %120 = math.tanh %119 : vector<8x128xf32>
    %cst_50 = arith.constant 5.000000e-01 : f32
    %121 = vector.broadcast %cst_50 : f32 to vector<8x128xf32>
    %122 = arith.mulf %121, %120 : vector<8x128xf32>
    %cst_51 = arith.constant 5.000000e-01 : f32
    %123 = vector.broadcast %cst_51 : f32 to vector<8x128xf32>
    %124 = arith.addf %122, %123 : vector<8x128xf32>
    %125 = vector.extract_strided_slice %116 {offsets = [0, 128], sizes = [8, 128], strides = [1, 1]} : vector<8x512xf32> to vector<8x128xf32>
    %cst_52 = arith.constant 5.000000e-01 : f32
    %126 = vector.broadcast %cst_52 : f32 to vector<8x128xf32>
    %127 = arith.mulf %126, %125 : vector<8x128xf32>
    %128 = math.tanh %127 : vector<8x128xf32>
    %cst_53 = arith.constant 5.000000e-01 : f32
    %129 = vector.broadcast %cst_53 : f32 to vector<8x128xf32>
    %130 = arith.mulf %129, %128 : vector<8x128xf32>
    %cst_54 = arith.constant 5.000000e-01 : f32
    %131 = vector.broadcast %cst_54 : f32 to vector<8x128xf32>
    %132 = arith.addf %130, %131 : vector<8x128xf32>
    %133 = vector.extract_strided_slice %116 {offsets = [0, 256], sizes = [8, 128], strides = [1, 1]} : vector<8x512xf32> to vector<8x128xf32>
    %134 = math.tanh %133 : vector<8x128xf32>
    %135 = vector.extract_strided_slice %116 {offsets = [0, 384], sizes = [8, 128], strides = [1, 1]} : vector<8x512xf32> to vector<8x128xf32>
    %cst_55 = arith.constant 5.000000e-01 : f32
    %136 = vector.broadcast %cst_55 : f32 to vector<8x128xf32>
    %137 = arith.mulf %136, %135 : vector<8x128xf32>
    %138 = math.tanh %137 : vector<8x128xf32>
    %cst_56 = arith.constant 5.000000e-01 : f32
    %139 = vector.broadcast %cst_56 : f32 to vector<8x128xf32>
    %140 = arith.mulf %139, %138 : vector<8x128xf32>
    %cst_57 = arith.constant 5.000000e-01 : f32
    %141 = vector.broadcast %cst_57 : f32 to vector<8x128xf32>
    %142 = arith.addf %140, %141 : vector<8x128xf32>
    %143 = arith.mulf %132, %107 : vector<8x128xf32>
    %144 = arith.mulf %124, %134 : vector<8x128xf32>
    %145 = arith.addf %143, %144 : vector<8x128xf32>
    %146 = math.tanh %145 : vector<8x128xf32>
    %147 = arith.mulf %142, %146 : vector<8x128xf32>
    %c8_i32_58 = arith.constant 8 : i32
    %148 = arith.muli %arg1, %c8_i32_58 : i32
    %c2_i32 = arith.constant 2 : i32
    %149 = arith.addi %148, %c2_i32 : i32
    %150 = vector.broadcast %149 : i32 to vector<8x1xi32>
    %151 = arith.cmpi slt, %150, %10 : vector<8x1xi32>
    %152 = vector.shape_cast %151 : vector<8x1xi1> to vector<8x1xi1>
    %153 = vector.broadcast %152 : vector<8x1xi1> to vector<8x128xi1>
    %154 = arith.select %153, %147, %104 : vector<8x128xi1>, vector<8x128xf32>
    %155 = vector.shape_cast %151 : vector<8x1xi1> to vector<8x1xi1>
    %156 = vector.broadcast %155 : vector<8x1xi1> to vector<8x128xi1>
    %157 = arith.select %156, %145, %107 : vector<8x128xi1>, vector<8x128xf32>
    %cst_59 = arith.constant 0.000000e+00 : f32
    %158 = vector.shape_cast %151 : vector<8x1xi1> to vector<8x1xi1>
    %159 = vector.broadcast %158 : vector<8x1xi1> to vector<8x128xi1>
    %160 = vector.broadcast %cst_59 : f32 to vector<8x128xf32>
    %161 = arith.select %159, %147, %160 : vector<8x128xi1>, vector<8x128xf32>
    %c16_60 = arith.constant 16 : index
    %c0_61 = arith.constant 0 : index
    %162 = vector.load %arg17[%c16_60, %c0_61] : memref<64x128xf32, #tpu.memory_space<vmem>>, vector<8x128xf32>
    tpu.vector_store %arg17[%c16_60, %c0_61], %161 {strides = array<i32>} : memref<64x128xf32, #tpu.memory_space<vmem>>, vector<8x128xf32>,
    %c24 = arith.constant 24 : index
    %c0_62 = arith.constant 0 : index
    %163 = vector.load %arg16[%c24, %c0_62] : memref<64x512xf32, #tpu.memory_space<vmem>>, vector<8x512xf32>
    %164 = arith.truncf %154 : vector<8x128xf32> to vector<8x128xbf16>
    %cst_63 = arith.constant dense<0.000000e+00> : vector<8x512xf32>
    %165 = tpu.matmul %164, %8, %cst_63 {dimension_numbers = #tpu.dot_dimension_numbers<[1], [0], [0], [1], [0, 0, 1, 1], [], []>} : vector<8x128xbf16>, vector<128x512xbf16>, vector<8x512xf32> -> vector<8x512xf32>
    %166 = arith.addf %163, %165 : vector<8x512xf32>
    %167 = vector.extract_strided_slice %166 {offsets = [0, 0], sizes = [8, 128], strides = [1, 1]} : vector<8x512xf32> to vector<8x128xf32>
    %cst_64 = arith.constant 5.000000e-01 : f32
    %168 = vector.broadcast %cst_64 : f32 to vector<8x128xf32>
    %169 = arith.mulf %168, %167 : vector<8x128xf32>
    %170 = math.tanh %169 : vector<8x128xf32>
    %cst_65 = arith.constant 5.000000e-01 : f32
    %171 = vector.broadcast %cst_65 : f32 to vector<8x128xf32>
    %172 = arith.mulf %171, %170 : vector<8x128xf32>
    %cst_66 = arith.constant 5.000000e-01 : f32
    %173 = vector.broadcast %cst_66 : f32 to vector<8x128xf32>
    %174 = arith.addf %172, %173 : vector<8x128xf32>
    %175 = vector.extract_strided_slice %166 {offsets = [0, 128], sizes = [8, 128], strides = [1, 1]} : vector<8x512xf32> to vector<8x128xf32>
    %cst_67 = arith.constant 5.000000e-01 : f32
    %176 = vector.broadcast %cst_67 : f32 to vector<8x128xf32>
    %177 = arith.mulf %176, %175 : vector<8x128xf32>
    %178 = math.tanh %177 : vector<8x128xf32>
    %cst_68 = arith.constant 5.000000e-01 : f32
    %179 = vector.broadcast %cst_68 : f32 to vector<8x128xf32>
    %180 = arith.mulf %179, %178 : vector<8x128xf32>
    %cst_69 = arith.constant 5.000000e-01 : f32
    %181 = vector.broadcast %cst_69 : f32 to vector<8x128xf32>
    %182 = arith.addf %180, %181 : vector<8x128xf32>
    %183 = vector.extract_strided_slice %166 {offsets = [0, 256], sizes = [8, 128], strides = [1, 1]} : vector<8x512xf32> to vector<8x128xf32>
    %184 = math.tanh %183 : vector<8x128xf32>
    %185 = vector.extract_strided_slice %166 {offsets = [0, 384], sizes = [8, 128], strides = [1, 1]} : vector<8x512xf32> to vector<8x128xf32>
    %cst_70 = arith.constant 5.000000e-01 : f32
    %186 = vector.broadcast %cst_70 : f32 to vector<8x128xf32>
    %187 = arith.mulf %186, %185 : vector<8x128xf32>
    %188 = math.tanh %187 : vector<8x128xf32>
    %cst_71 = arith.constant 5.000000e-01 : f32
    %189 = vector.broadcast %cst_71 : f32 to vector<8x128xf32>
    %190 = arith.mulf %189, %188 : vector<8x128xf32>
    %cst_72 = arith.constant 5.000000e-01 : f32
    %191 = vector.broadcast %cst_72 : f32 to vector<8x128xf32>
    %192 = arith.addf %190, %191 : vector<8x128xf32>
    %193 = arith.mulf %182, %157 : vector<8x128xf32>
    %194 = arith.mulf %174, %184 : vector<8x128xf32>
    %195 = arith.addf %193, %194 : vector<8x128xf32>
    %196 = math.tanh %195 : vector<8x128xf32>
    %197 = arith.mulf %192, %196 : vector<8x128xf32>
    %c8_i32_73 = arith.constant 8 : i32
    %198 = arith.muli %arg1, %c8_i32_73 : i32
    %c3_i32 = arith.constant 3 : i32
    %199 = arith.addi %198, %c3_i32 : i32
    %200 = vector.broadcast %199 : i32 to vector<8x1xi32>
    %201 = arith.cmpi slt, %200, %10 : vector<8x1xi32>
    %202 = vector.shape_cast %201 : vector<8x1xi1> to vector<8x1xi1>
    %203 = vector.broadcast %202 : vector<8x1xi1> to vector<8x128xi1>
    %204 = arith.select %203, %197, %154 : vector<8x128xi1>, vector<8x128xf32>
    %205 = vector.shape_cast %201 : vector<8x1xi1> to vector<8x1xi1>
    %206 = vector.broadcast %205 : vector<8x1xi1> to vector<8x128xi1>
    %207 = arith.select %206, %195, %157 : vector<8x128xi1>, vector<8x128xf32>
    %cst_74 = arith.constant 0.000000e+00 : f32
    %208 = vector.shape_cast %201 : vector<8x1xi1> to vector<8x1xi1>
    %209 = vector.broadcast %208 : vector<8x1xi1> to vector<8x128xi1>
    %210 = vector.broadcast %cst_74 : f32 to vector<8x128xf32>
    %211 = arith.select %209, %197, %210 : vector<8x128xi1>, vector<8x128xf32>
    %c24_75 = arith.constant 24 : index
    %c0_76 = arith.constant 0 : index
    %212 = vector.load %arg17[%c24_75, %c0_76] : memref<64x128xf32, #tpu.memory_space<vmem>>, vector<8x128xf32>
    tpu.vector_store %arg17[%c24_75, %c0_76], %211 {strides = array<i32>} : memref<64x128xf32, #tpu.memory_space<vmem>>, vector<8x128xf32>,
    %c32 = arith.constant 32 : index
    %c0_77 = arith.constant 0 : index
    %213 = vector.load %arg16[%c32, %c0_77] : memref<64x512xf32, #tpu.memory_space<vmem>>, vector<8x512xf32>
    %214 = arith.truncf %204 : vector<8x128xf32> to vector<8x128xbf16>
    %cst_78 = arith.constant dense<0.000000e+00> : vector<8x512xf32>
    %215 = tpu.matmul %214, %8, %cst_78 {dimension_numbers = #tpu.dot_dimension_numbers<[1], [0], [0], [1], [0, 0, 1, 1], [], []>} : vector<8x128xbf16>, vector<128x512xbf16>, vector<8x512xf32> -> vector<8x512xf32>
    %216 = arith.addf %213, %215 : vector<8x512xf32>
    %217 = vector.extract_strided_slice %216 {offsets = [0, 0], sizes = [8, 128], strides = [1, 1]} : vector<8x512xf32> to vector<8x128xf32>
    %cst_79 = arith.constant 5.000000e-01 : f32
    %218 = vector.broadcast %cst_79 : f32 to vector<8x128xf32>
    %219 = arith.mulf %218, %217 : vector<8x128xf32>
    %220 = math.tanh %219 : vector<8x128xf32>
    %cst_80 = arith.constant 5.000000e-01 : f32
    %221 = vector.broadcast %cst_80 : f32 to vector<8x128xf32>
    %222 = arith.mulf %221, %220 : vector<8x128xf32>
    %cst_81 = arith.constant 5.000000e-01 : f32
    %223 = vector.broadcast %cst_81 : f32 to vector<8x128xf32>
    %224 = arith.addf %222, %223 : vector<8x128xf32>
    %225 = vector.extract_strided_slice %216 {offsets = [0, 128], sizes = [8, 128], strides = [1, 1]} : vector<8x512xf32> to vector<8x128xf32>
    %cst_82 = arith.constant 5.000000e-01 : f32
    %226 = vector.broadcast %cst_82 : f32 to vector<8x128xf32>
    %227 = arith.mulf %226, %225 : vector<8x128xf32>
    %228 = math.tanh %227 : vector<8x128xf32>
    %cst_83 = arith.constant 5.000000e-01 : f32
    %229 = vector.broadcast %cst_83 : f32 to vector<8x128xf32>
    %230 = arith.mulf %229, %228 : vector<8x128xf32>
    %cst_84 = arith.constant 5.000000e-01 : f32
    %231 = vector.broadcast %cst_84 : f32 to vector<8x128xf32>
    %232 = arith.addf %230, %231 : vector<8x128xf32>
    %233 = vector.extract_strided_slice %216 {offsets = [0, 256], sizes = [8, 128], strides = [1, 1]} : vector<8x512xf32> to vector<8x128xf32>
    %234 = math.tanh %233 : vector<8x128xf32>
    %235 = vector.extract_strided_slice %216 {offsets = [0, 384], sizes = [8, 128], strides = [1, 1]} : vector<8x512xf32> to vector<8x128xf32>
    %cst_85 = arith.constant 5.000000e-01 : f32
    %236 = vector.broadcast %cst_85 : f32 to vector<8x128xf32>
    %237 = arith.mulf %236, %235 : vector<8x128xf32>
    %238 = math.tanh %237 : vector<8x128xf32>
    %cst_86 = arith.constant 5.000000e-01 : f32
    %239 = vector.broadcast %cst_86 : f32 to vector<8x128xf32>
    %240 = arith.mulf %239, %238 : vector<8x128xf32>
    %cst_87 = arith.constant 5.000000e-01 : f32
    %241 = vector.broadcast %cst_87 : f32 to vector<8x128xf32>
    %242 = arith.addf %240, %241 : vector<8x128xf32>
    %243 = arith.mulf %232, %207 : vector<8x128xf32>
    %244 = arith.mulf %224, %234 : vector<8x128xf32>
    %245 = arith.addf %243, %244 : vector<8x128xf32>
    %246 = math.tanh %245 : vector<8x128xf32>
    %247 = arith.mulf %242, %246 : vector<8x128xf32>
    %c8_i32_88 = arith.constant 8 : i32
    %248 = arith.muli %arg1, %c8_i32_88 : i32
    %c4_i32 = arith.constant 4 : i32
    %249 = arith.addi %248, %c4_i32 : i32
    %250 = vector.broadcast %249 : i32 to vector<8x1xi32>
    %251 = arith.cmpi slt, %250, %10 : vector<8x1xi32>
    %252 = vector.shape_cast %251 : vector<8x1xi1> to vector<8x1xi1>
    %253 = vector.broadcast %252 : vector<8x1xi1> to vector<8x128xi1>
    %254 = arith.select %253, %247, %204 : vector<8x128xi1>, vector<8x128xf32>
    %255 = vector.shape_cast %251 : vector<8x1xi1> to vector<8x1xi1>
    %256 = vector.broadcast %255 : vector<8x1xi1> to vector<8x128xi1>
    %257 = arith.select %256, %245, %207 : vector<8x128xi1>, vector<8x128xf32>
    %cst_89 = arith.constant 0.000000e+00 : f32
    %258 = vector.shape_cast %251 : vector<8x1xi1> to vector<8x1xi1>
    %259 = vector.broadcast %258 : vector<8x1xi1> to vector<8x128xi1>
    %260 = vector.broadcast %cst_89 : f32 to vector<8x128xf32>
    %261 = arith.select %259, %247, %260 : vector<8x128xi1>, vector<8x128xf32>
    %c32_90 = arith.constant 32 : index
    %c0_91 = arith.constant 0 : index
    %262 = vector.load %arg17[%c32_90, %c0_91] : memref<64x128xf32, #tpu.memory_space<vmem>>, vector<8x128xf32>
    tpu.vector_store %arg17[%c32_90, %c0_91], %261 {strides = array<i32>} : memref<64x128xf32, #tpu.memory_space<vmem>>, vector<8x128xf32>,
    %c40 = arith.constant 40 : index
    %c0_92 = arith.constant 0 : index
    %263 = vector.load %arg16[%c40, %c0_92] : memref<64x512xf32, #tpu.memory_space<vmem>>, vector<8x512xf32>
    %264 = arith.truncf %254 : vector<8x128xf32> to vector<8x128xbf16>
    %cst_93 = arith.constant dense<0.000000e+00> : vector<8x512xf32>
    %265 = tpu.matmul %264, %8, %cst_93 {dimension_numbers = #tpu.dot_dimension_numbers<[1], [0], [0], [1], [0, 0, 1, 1], [], []>} : vector<8x128xbf16>, vector<128x512xbf16>, vector<8x512xf32> -> vector<8x512xf32>
    %266 = arith.addf %263, %265 : vector<8x512xf32>
    %267 = vector.extract_strided_slice %266 {offsets = [0, 0], sizes = [8, 128], strides = [1, 1]} : vector<8x512xf32> to vector<8x128xf32>
    %cst_94 = arith.constant 5.000000e-01 : f32
    %268 = vector.broadcast %cst_94 : f32 to vector<8x128xf32>
    %269 = arith.mulf %268, %267 : vector<8x128xf32>
    %270 = math.tanh %269 : vector<8x128xf32>
    %cst_95 = arith.constant 5.000000e-01 : f32
    %271 = vector.broadcast %cst_95 : f32 to vector<8x128xf32>
    %272 = arith.mulf %271, %270 : vector<8x128xf32>
    %cst_96 = arith.constant 5.000000e-01 : f32
    %273 = vector.broadcast %cst_96 : f32 to vector<8x128xf32>
    %274 = arith.addf %272, %273 : vector<8x128xf32>
    %275 = vector.extract_strided_slice %266 {offsets = [0, 128], sizes = [8, 128], strides = [1, 1]} : vector<8x512xf32> to vector<8x128xf32>
    %cst_97 = arith.constant 5.000000e-01 : f32
    %276 = vector.broadcast %cst_97 : f32 to vector<8x128xf32>
    %277 = arith.mulf %276, %275 : vector<8x128xf32>
    %278 = math.tanh %277 : vector<8x128xf32>
    %cst_98 = arith.constant 5.000000e-01 : f32
    %279 = vector.broadcast %cst_98 : f32 to vector<8x128xf32>
    %280 = arith.mulf %279, %278 : vector<8x128xf32>
    %cst_99 = arith.constant 5.000000e-01 : f32
    %281 = vector.broadcast %cst_99 : f32 to vector<8x128xf32>
    %282 = arith.addf %280, %281 : vector<8x128xf32>
    %283 = vector.extract_strided_slice %266 {offsets = [0, 256], sizes = [8, 128], strides = [1, 1]} : vector<8x512xf32> to vector<8x128xf32>
    %284 = math.tanh %283 : vector<8x128xf32>
    %285 = vector.extract_strided_slice %266 {offsets = [0, 384], sizes = [8, 128], strides = [1, 1]} : vector<8x512xf32> to vector<8x128xf32>
    %cst_100 = arith.constant 5.000000e-01 : f32
    %286 = vector.broadcast %cst_100 : f32 to vector<8x128xf32>
    %287 = arith.mulf %286, %285 : vector<8x128xf32>
    %288 = math.tanh %287 : vector<8x128xf32>
    %cst_101 = arith.constant 5.000000e-01 : f32
    %289 = vector.broadcast %cst_101 : f32 to vector<8x128xf32>
    %290 = arith.mulf %289, %288 : vector<8x128xf32>
    %cst_102 = arith.constant 5.000000e-01 : f32
    %291 = vector.broadcast %cst_102 : f32 to vector<8x128xf32>
    %292 = arith.addf %290, %291 : vector<8x128xf32>
    %293 = arith.mulf %282, %257 : vector<8x128xf32>
    %294 = arith.mulf %274, %284 : vector<8x128xf32>
    %295 = arith.addf %293, %294 : vector<8x128xf32>
    %296 = math.tanh %295 : vector<8x128xf32>
    %297 = arith.mulf %292, %296 : vector<8x128xf32>
    %c8_i32_103 = arith.constant 8 : i32
    %298 = arith.muli %arg1, %c8_i32_103 : i32
    %c5_i32 = arith.constant 5 : i32
    %299 = arith.addi %298, %c5_i32 : i32
    %300 = vector.broadcast %299 : i32 to vector<8x1xi32>
    %301 = arith.cmpi slt, %300, %10 : vector<8x1xi32>
    %302 = vector.shape_cast %301 : vector<8x1xi1> to vector<8x1xi1>
    %303 = vector.broadcast %302 : vector<8x1xi1> to vector<8x128xi1>
    %304 = arith.select %303, %297, %254 : vector<8x128xi1>, vector<8x128xf32>
    %305 = vector.shape_cast %301 : vector<8x1xi1> to vector<8x1xi1>
    %306 = vector.broadcast %305 : vector<8x1xi1> to vector<8x128xi1>
    %307 = arith.select %306, %295, %257 : vector<8x128xi1>, vector<8x128xf32>
    %cst_104 = arith.constant 0.000000e+00 : f32
    %308 = vector.shape_cast %301 : vector<8x1xi1> to vector<8x1xi1>
    %309 = vector.broadcast %308 : vector<8x1xi1> to vector<8x128xi1>
    %310 = vector.broadcast %cst_104 : f32 to vector<8x128xf32>
    %311 = arith.select %309, %297, %310 : vector<8x128xi1>, vector<8x128xf32>
    %c40_105 = arith.constant 40 : index
    %c0_106 = arith.constant 0 : index
    %312 = vector.load %arg17[%c40_105, %c0_106] : memref<64x128xf32, #tpu.memory_space<vmem>>, vector<8x128xf32>
    tpu.vector_store %arg17[%c40_105, %c0_106], %311 {strides = array<i32>} : memref<64x128xf32, #tpu.memory_space<vmem>>, vector<8x128xf32>,
    %c48 = arith.constant 48 : index
    %c0_107 = arith.constant 0 : index
    %313 = vector.load %arg16[%c48, %c0_107] : memref<64x512xf32, #tpu.memory_space<vmem>>, vector<8x512xf32>
    %314 = arith.truncf %304 : vector<8x128xf32> to vector<8x128xbf16>
    %cst_108 = arith.constant dense<0.000000e+00> : vector<8x512xf32>
    %315 = tpu.matmul %314, %8, %cst_108 {dimension_numbers = #tpu.dot_dimension_numbers<[1], [0], [0], [1], [0, 0, 1, 1], [], []>} : vector<8x128xbf16>, vector<128x512xbf16>, vector<8x512xf32> -> vector<8x512xf32>
    %316 = arith.addf %313, %315 : vector<8x512xf32>
    %317 = vector.extract_strided_slice %316 {offsets = [0, 0], sizes = [8, 128], strides = [1, 1]} : vector<8x512xf32> to vector<8x128xf32>
    %cst_109 = arith.constant 5.000000e-01 : f32
    %318 = vector.broadcast %cst_109 : f32 to vector<8x128xf32>
    %319 = arith.mulf %318, %317 : vector<8x128xf32>
    %320 = math.tanh %319 : vector<8x128xf32>
    %cst_110 = arith.constant 5.000000e-01 : f32
    %321 = vector.broadcast %cst_110 : f32 to vector<8x128xf32>
    %322 = arith.mulf %321, %320 : vector<8x128xf32>
    %cst_111 = arith.constant 5.000000e-01 : f32
    %323 = vector.broadcast %cst_111 : f32 to vector<8x128xf32>
    %324 = arith.addf %322, %323 : vector<8x128xf32>
    %325 = vector.extract_strided_slice %316 {offsets = [0, 128], sizes = [8, 128], strides = [1, 1]} : vector<8x512xf32> to vector<8x128xf32>
    %cst_112 = arith.constant 5.000000e-01 : f32
    %326 = vector.broadcast %cst_112 : f32 to vector<8x128xf32>
    %327 = arith.mulf %326, %325 : vector<8x128xf32>
    %328 = math.tanh %327 : vector<8x128xf32>
    %cst_113 = arith.constant 5.000000e-01 : f32
    %329 = vector.broadcast %cst_113 : f32 to vector<8x128xf32>
    %330 = arith.mulf %329, %328 : vector<8x128xf32>
    %cst_114 = arith.constant 5.000000e-01 : f32
    %331 = vector.broadcast %cst_114 : f32 to vector<8x128xf32>
    %332 = arith.addf %330, %331 : vector<8x128xf32>
    %333 = vector.extract_strided_slice %316 {offsets = [0, 256], sizes = [8, 128], strides = [1, 1]} : vector<8x512xf32> to vector<8x128xf32>
    %334 = math.tanh %333 : vector<8x128xf32>
    %335 = vector.extract_strided_slice %316 {offsets = [0, 384], sizes = [8, 128], strides = [1, 1]} : vector<8x512xf32> to vector<8x128xf32>
    %cst_115 = arith.constant 5.000000e-01 : f32
    %336 = vector.broadcast %cst_115 : f32 to vector<8x128xf32>
    %337 = arith.mulf %336, %335 : vector<8x128xf32>
    %338 = math.tanh %337 : vector<8x128xf32>
    %cst_116 = arith.constant 5.000000e-01 : f32
    %339 = vector.broadcast %cst_116 : f32 to vector<8x128xf32>
    %340 = arith.mulf %339, %338 : vector<8x128xf32>
    %cst_117 = arith.constant 5.000000e-01 : f32
    %341 = vector.broadcast %cst_117 : f32 to vector<8x128xf32>
    %342 = arith.addf %340, %341 : vector<8x128xf32>
    %343 = arith.mulf %332, %307 : vector<8x128xf32>
    %344 = arith.mulf %324, %334 : vector<8x128xf32>
    %345 = arith.addf %343, %344 : vector<8x128xf32>
    %346 = math.tanh %345 : vector<8x128xf32>
    %347 = arith.mulf %342, %346 : vector<8x128xf32>
    %c8_i32_118 = arith.constant 8 : i32
    %348 = arith.muli %arg1, %c8_i32_118 : i32
    %c6_i32 = arith.constant 6 : i32
    %349 = arith.addi %348, %c6_i32 : i32
    %350 = vector.broadcast %349 : i32 to vector<8x1xi32>
    %351 = arith.cmpi slt, %350, %10 : vector<8x1xi32>
    %352 = vector.shape_cast %351 : vector<8x1xi1> to vector<8x1xi1>
    %353 = vector.broadcast %352 : vector<8x1xi1> to vector<8x128xi1>
    %354 = arith.select %353, %347, %304 : vector<8x128xi1>, vector<8x128xf32>
    %355 = vector.shape_cast %351 : vector<8x1xi1> to vector<8x1xi1>
    %356 = vector.broadcast %355 : vector<8x1xi1> to vector<8x128xi1>
    %357 = arith.select %356, %345, %307 : vector<8x128xi1>, vector<8x128xf32>
    %cst_119 = arith.constant 0.000000e+00 : f32
    %358 = vector.shape_cast %351 : vector<8x1xi1> to vector<8x1xi1>
    %359 = vector.broadcast %358 : vector<8x1xi1> to vector<8x128xi1>
    %360 = vector.broadcast %cst_119 : f32 to vector<8x128xf32>
    %361 = arith.select %359, %347, %360 : vector<8x128xi1>, vector<8x128xf32>
    %c48_120 = arith.constant 48 : index
    %c0_121 = arith.constant 0 : index
    %362 = vector.load %arg17[%c48_120, %c0_121] : memref<64x128xf32, #tpu.memory_space<vmem>>, vector<8x128xf32>
    tpu.vector_store %arg17[%c48_120, %c0_121], %361 {strides = array<i32>} : memref<64x128xf32, #tpu.memory_space<vmem>>, vector<8x128xf32>,
    %c56 = arith.constant 56 : index
    %c0_122 = arith.constant 0 : index
    %363 = vector.load %arg16[%c56, %c0_122] : memref<64x512xf32, #tpu.memory_space<vmem>>, vector<8x512xf32>
    %364 = arith.truncf %354 : vector<8x128xf32> to vector<8x128xbf16>
    %cst_123 = arith.constant dense<0.000000e+00> : vector<8x512xf32>
    %365 = tpu.matmul %364, %8, %cst_123 {dimension_numbers = #tpu.dot_dimension_numbers<[1], [0], [0], [1], [0, 0, 1, 1], [], []>} : vector<8x128xbf16>, vector<128x512xbf16>, vector<8x512xf32> -> vector<8x512xf32>
    %366 = arith.addf %363, %365 : vector<8x512xf32>
    %367 = vector.extract_strided_slice %366 {offsets = [0, 0], sizes = [8, 128], strides = [1, 1]} : vector<8x512xf32> to vector<8x128xf32>
    %cst_124 = arith.constant 5.000000e-01 : f32
    %368 = vector.broadcast %cst_124 : f32 to vector<8x128xf32>
    %369 = arith.mulf %368, %367 : vector<8x128xf32>
    %370 = math.tanh %369 : vector<8x128xf32>
    %cst_125 = arith.constant 5.000000e-01 : f32
    %371 = vector.broadcast %cst_125 : f32 to vector<8x128xf32>
    %372 = arith.mulf %371, %370 : vector<8x128xf32>
    %cst_126 = arith.constant 5.000000e-01 : f32
    %373 = vector.broadcast %cst_126 : f32 to vector<8x128xf32>
    %374 = arith.addf %372, %373 : vector<8x128xf32>
    %375 = vector.extract_strided_slice %366 {offsets = [0, 128], sizes = [8, 128], strides = [1, 1]} : vector<8x512xf32> to vector<8x128xf32>
    %cst_127 = arith.constant 5.000000e-01 : f32
    %376 = vector.broadcast %cst_127 : f32 to vector<8x128xf32>
    %377 = arith.mulf %376, %375 : vector<8x128xf32>
    %378 = math.tanh %377 : vector<8x128xf32>
    %cst_128 = arith.constant 5.000000e-01 : f32
    %379 = vector.broadcast %cst_128 : f32 to vector<8x128xf32>
    %380 = arith.mulf %379, %378 : vector<8x128xf32>
    %cst_129 = arith.constant 5.000000e-01 : f32
    %381 = vector.broadcast %cst_129 : f32 to vector<8x128xf32>
    %382 = arith.addf %380, %381 : vector<8x128xf32>
    %383 = vector.extract_strided_slice %366 {offsets = [0, 256], sizes = [8, 128], strides = [1, 1]} : vector<8x512xf32> to vector<8x128xf32>
    %384 = math.tanh %383 : vector<8x128xf32>
    %385 = vector.extract_strided_slice %366 {offsets = [0, 384], sizes = [8, 128], strides = [1, 1]} : vector<8x512xf32> to vector<8x128xf32>
    %cst_130 = arith.constant 5.000000e-01 : f32
    %386 = vector.broadcast %cst_130 : f32 to vector<8x128xf32>
    %387 = arith.mulf %386, %385 : vector<8x128xf32>
    %388 = math.tanh %387 : vector<8x128xf32>
    %cst_131 = arith.constant 5.000000e-01 : f32
    %389 = vector.broadcast %cst_131 : f32 to vector<8x128xf32>
    %390 = arith.mulf %389, %388 : vector<8x128xf32>
    %cst_132 = arith.constant 5.000000e-01 : f32
    %391 = vector.broadcast %cst_132 : f32 to vector<8x128xf32>
    %392 = arith.addf %390, %391 : vector<8x128xf32>
    %393 = arith.mulf %382, %357 : vector<8x128xf32>
    %394 = arith.mulf %374, %384 : vector<8x128xf32>
    %395 = arith.addf %393, %394 : vector<8x128xf32>
    %396 = math.tanh %395 : vector<8x128xf32>
    %397 = arith.mulf %392, %396 : vector<8x128xf32>
    %c8_i32_133 = arith.constant 8 : i32
    %398 = arith.muli %arg1, %c8_i32_133 : i32
    %c7_i32 = arith.constant 7 : i32
    %399 = arith.addi %398, %c7_i32 : i32
    %400 = vector.broadcast %399 : i32 to vector<8x1xi32>
    %401 = arith.cmpi slt, %400, %10 : vector<8x1xi32>
    %402 = vector.shape_cast %401 : vector<8x1xi1> to vector<8x1xi1>
    %403 = vector.broadcast %402 : vector<8x1xi1> to vector<8x128xi1>
    %404 = arith.select %403, %397, %354 : vector<8x128xi1>, vector<8x128xf32>
    %405 = vector.shape_cast %401 : vector<8x1xi1> to vector<8x1xi1>
    %406 = vector.broadcast %405 : vector<8x1xi1> to vector<8x128xi1>
    %407 = arith.select %406, %395, %357 : vector<8x128xi1>, vector<8x128xf32>
    %cst_134 = arith.constant 0.000000e+00 : f32
    %408 = vector.shape_cast %401 : vector<8x1xi1> to vector<8x1xi1>
    %409 = vector.broadcast %408 : vector<8x1xi1> to vector<8x128xi1>
    %410 = vector.broadcast %cst_134 : f32 to vector<8x128xf32>
    %411 = arith.select %409, %397, %410 : vector<8x128xi1>, vector<8x128xf32>
    %c56_135 = arith.constant 56 : index
    %c0_136 = arith.constant 0 : index
    %412 = vector.load %arg17[%c56_135, %c0_136] : memref<64x128xf32, #tpu.memory_space<vmem>>, vector<8x128xf32>
    tpu.vector_store %arg17[%c56_135, %c0_136], %411 {strides = array<i32>} : memref<64x128xf32, #tpu.memory_space<vmem>>, vector<8x128xf32>,
    %c0_137 = arith.constant 0 : index
    %c0_138 = arith.constant 0 : index
    %413 = vector.load %arg18[%c0_137, %c0_138] : memref<8x128xf32, #tpu.memory_space<vmem>>, vector<8x128xf32>
    tpu.vector_store %arg18[%c0_137, %c0_138], %404 {strides = array<i32>} : memref<8x128xf32, #tpu.memory_space<vmem>>, vector<8x128xf32>,
    %c0_139 = arith.constant 0 : index
    %c0_140 = arith.constant 0 : index
    %414 = vector.load %arg19[%c0_139, %c0_140] : memref<8x128xf32, #tpu.memory_space<vmem>>, vector<8x128xf32>
    tpu.vector_store %arg19[%c0_139, %c0_140], %407 {strides = array<i32>} : memref<8x128xf32, #tpu.memory_space<vmem>>, vector<8x128xf32>,
    %c0_141 = arith.constant 0 : index
    %c0_142 = arith.constant 0 : index
    %415 = vector.load %arg17[%c0_141, %c0_142] : memref<64x128xf32, #tpu.memory_space<vmem>>, vector<64x128xf32>
    %416 = vector.shape_cast %415 : vector<64x128xf32> to vector<8x8x128xf32>
    %c0_143 = arith.constant 0 : index
    %c0_144 = arith.constant 0 : index
    %417 = vector.load %arg8[%c0_143, %c0_144] : memref<1x128xf32, #tpu.memory_space<vmem>>, vector<1x128xf32>
    %418 = vector.shape_cast %417 : vector<1x128xf32> to vector<1x1x128xf32>
    %419 = vector.broadcast %418 : vector<1x1x128xf32> to vector<8x8x128xf32>
    %420 = arith.mulf %416, %419 : vector<8x8x128xf32>
    %cst_145 = arith.constant dense<0.000000e+00> : vector<8x8xf32>
    %421 = vector.multi_reduction <add>, %420, %cst_145 [2] : vector<8x8x128xf32> to vector<8x8xf32>
    %422 = vector.shape_cast %421 : vector<8x8xf32> to vector<8x8x1xf32>
    %c0_146 = arith.constant 0 : index
    %c0_147 = arith.constant 0 : index
    %423 = vector.load %arg9[%c0_146, %c0_147] : memref<1x1xf32, #tpu.memory_space<vmem>>, vector<1x1xf32>
    %424 = vector.shape_cast %423 : vector<1x1xf32> to vector<1x1x1xf32>
    %425 = vector.broadcast %424 : vector<1x1x1xf32> to vector<8x8x1xf32>
    %426 = arith.addf %422, %425 : vector<8x8x1xf32>
    %427 = tpu.iota {dimensions = array<i32: 0>} : vector<8x8x1xi32>
    %c8_i32_148 = arith.constant 8 : i32
    %428 = arith.muli %arg1, %c8_i32_148 : i32
    %429 = vector.broadcast %428 : i32 to vector<8x8x1xi32>
    %430 = arith.addi %427, %429 : vector<8x8x1xi32>
    %431 = vector.shape_cast %10 : vector<8x1xi32> to vector<1x8x1xi32>
    %432 = vector.broadcast %431 : vector<1x8x1xi32> to vector<8x8x1xi32>
    %433 = arith.cmpi slt, %430, %432 : vector<8x8x1xi32>
    %cst_149 = arith.constant -1.000000e+30 : f32
    %434 = vector.broadcast %cst_149 : f32 to vector<8x8x1xf32>
    %435 = arith.select %433, %426, %434 : vector<8x8x1xi1>, vector<8x8x1xf32>
    %cst_150 = arith.constant dense<0xFF800000> : vector<8x1xf32>
    %436 = vector.multi_reduction <maximumf>, %435, %cst_150 [0] : vector<8x8x1xf32> to vector<8x1xf32>
    %437 = vector.shape_cast %436 : vector<8x1xf32> to vector<1x8x1xf32>
    %438 = vector.broadcast %437 : vector<1x8x1xf32> to vector<8x8x1xf32>
    %439 = arith.subf %435, %438 : vector<8x8x1xf32>
    %440 = math.exp %439 : vector<8x8x1xf32>
    %cst_151 = arith.constant 0.000000e+00 : f32
    %441 = vector.broadcast %cst_151 : f32 to vector<8x8x1xf32>
    %442 = arith.select %433, %440, %441 : vector<8x8x1xi1>, vector<8x8x1xf32>
    %cst_152 = arith.constant dense<0.000000e+00> : vector<8x1xf32>
    %443 = vector.multi_reduction <add>, %442, %cst_152 [0] : vector<8x8x1xf32> to vector<8x1xf32>
    %444 = vector.broadcast %442 : vector<8x8x1xf32> to vector<8x8x128xf32>
    %445 = arith.mulf %416, %444 : vector<8x8x128xf32>
    %cst_153 = arith.constant dense<0.000000e+00> : vector<8x128xf32>
    %446 = vector.multi_reduction <add>, %445, %cst_153 [0] : vector<8x8x128xf32> to vector<8x128xf32>
    %c0_154 = arith.constant 0 : index
    %c0_155 = arith.constant 0 : index
    %447 = vector.load %arg20[%c0_154, %c0_155] : memref<8x1xf32, #tpu.memory_space<vmem>>, vector<8x1xf32>
    %448 = arith.maximumf %447, %436 : vector<8x1xf32>
    %449 = arith.subf %447, %448 : vector<8x1xf32>
    %450 = math.exp %449 : vector<8x1xf32>
    %451 = arith.subf %436, %448 : vector<8x1xf32>
    %452 = math.exp %451 : vector<8x1xf32>
    %c0_156 = arith.constant 0 : index
    %c0_157 = arith.constant 0 : index
    %453 = vector.load %arg21[%c0_156, %c0_157] : memref<8x1xf32, #tpu.memory_space<vmem>>, vector<8x1xf32>
    %454 = arith.mulf %450, %453 : vector<8x1xf32>
    %455 = arith.mulf %452, %443 : vector<8x1xf32>
    %456 = arith.addf %454, %455 : vector<8x1xf32>
    %c0_158 = arith.constant 0 : index
    %c0_159 = arith.constant 0 : index
    %457 = vector.load %arg22[%c0_158, %c0_159] : memref<8x128xf32, #tpu.memory_space<vmem>>, vector<8x128xf32>
    %458 = vector.broadcast %450 : vector<8x1xf32> to vector<8x128xf32>
    %459 = arith.mulf %458, %457 : vector<8x128xf32>
    %460 = vector.broadcast %452 : vector<8x1xf32> to vector<8x128xf32>
    %461 = arith.mulf %460, %446 : vector<8x128xf32>
    %462 = arith.addf %459, %461 : vector<8x128xf32>
    %c0_160 = arith.constant 0 : index
    %c0_161 = arith.constant 0 : index
    %463 = vector.load %arg20[%c0_160, %c0_161] : memref<8x1xf32, #tpu.memory_space<vmem>>, vector<8x1xf32>
    tpu.vector_store %arg20[%c0_160, %c0_161], %448 {strides = array<i32>} : memref<8x1xf32, #tpu.memory_space<vmem>>, vector<8x1xf32>,
    %c0_162 = arith.constant 0 : index
    %c0_163 = arith.constant 0 : index
    %464 = vector.load %arg21[%c0_162, %c0_163] : memref<8x1xf32, #tpu.memory_space<vmem>>, vector<8x1xf32>
    tpu.vector_store %arg21[%c0_162, %c0_163], %456 {strides = array<i32>} : memref<8x1xf32, #tpu.memory_space<vmem>>, vector<8x1xf32>,
    %c0_164 = arith.constant 0 : index
    %c0_165 = arith.constant 0 : index
    %465 = vector.load %arg22[%c0_164, %c0_165] : memref<8x128xf32, #tpu.memory_space<vmem>>, vector<8x128xf32>
    tpu.vector_store %arg22[%c0_164, %c0_165], %462 {strides = array<i32>} : memref<8x128xf32, #tpu.memory_space<vmem>>, vector<8x128xf32>,
    %c1_i32_166 = arith.constant 1 : i32
    %466 = arith.cmpi eq, %arg1, %c1_i32_166 : i32
    %467 = arith.extui %466 : i1 to i32
    %c0_i32_167 = arith.constant 0 : i32
    %468 = arith.cmpi ne, %467, %c0_i32_167 : i32
    scf.if %468 {
      %cst_168 = arith.constant 0.000000e+00 : f32
      %469 = vector.broadcast %cst_168 : f32 to vector<8x1xf32>
      %470 = arith.cmpf ogt, %456, %469 : vector<8x1xf32>
      %cst_169 = arith.constant 1.000000e+00 : f32
      %471 = vector.broadcast %cst_169 : f32 to vector<8x1xf32>
      %472 = arith.select %470, %456, %471 : vector<8x1xi1>, vector<8x1xf32>
      %473 = vector.broadcast %472 : vector<8x1xf32> to vector<8x128xf32>
      %474 = arith.divf %462, %473 : vector<8x128xf32>
      %cst_170 = arith.constant 0.000000e+00 : f32
      %475 = vector.broadcast %cst_170 : f32 to vector<8x128xf32>
      %476 = arith.maximumf %474, %475 : vector<8x128xf32>
      %c0_171 = arith.constant 0 : index
      %c0_172 = arith.constant 0 : index
      %477 = vector.load %arg10[%c0_171, %c0_172] : memref<128x128xf32, #tpu.memory_space<vmem>>, vector<128x128xf32>
      %cst_173 = arith.constant dense<0.000000e+00> : vector<8x128xf32>
      %478 = tpu.matmul %476, %477, %cst_173 {dimension_numbers = #tpu.dot_dimension_numbers<[1], [0], [0], [1], [0, 0, 1, 1], [], []>} : vector<8x128xf32>, vector<128x128xf32>, vector<8x128xf32> -> vector<8x128xf32>
      %c0_174 = arith.constant 0 : index
      %c0_175 = arith.constant 0 : index
      %479 = vector.load %arg11[%c0_174, %c0_175] : memref<1x128xf32, #tpu.memory_space<vmem>>, vector<1x128xf32>
      %480 = vector.broadcast %479 : vector<1x128xf32> to vector<8x128xf32>
      %481 = arith.addf %478, %480 : vector<8x128xf32>
      %c0_176 = arith.constant 0 : index
      %c0_177 = arith.constant 0 : index
      %482 = vector.load %arg12[%c0_176, %c0_177] : memref<128x1xf32, #tpu.memory_space<vmem>>, vector<128x1xf32>
      %cst_178 = arith.constant dense<0.000000e+00> : vector<8x1xf32>
      %483 = tpu.matmul %481, %482, %cst_178 {dimension_numbers = #tpu.dot_dimension_numbers<[1], [0], [0], [1], [0, 0, 1, 1], [], []>} : vector<8x128xf32>, vector<128x1xf32>, vector<8x1xf32> -> vector<8x1xf32>
      %c0_179 = arith.constant 0 : index
      %c0_180 = arith.constant 0 : index
      %484 = vector.load %arg13[%c0_179, %c0_180] : memref<1x1xf32, #tpu.memory_space<vmem>>, vector<1x1xf32>
      %485 = vector.broadcast %484 : vector<1x1xf32> to vector<8x1xf32>
      %486 = arith.addf %483, %485 : vector<8x1xf32>
      %c0_181 = arith.constant 0 : index
      %c0_182 = arith.constant 0 : index
      %c0_183 = arith.constant 0 : index
      %487 = vector.load %arg15[%c0_181, %c0_182, %c0_183] : memref<1x8x1xf32, #tpu.memory_space<vmem>>, vector<1x8x1xf32>
      %488 = vector.shape_cast %487 : vector<1x8x1xf32> to vector<8x1xf32>
      %489 = vector.shape_cast %486 : vector<8x1xf32> to vector<1x8x1xf32>
      tpu.vector_store %arg15[%c0_181, %c0_182, %c0_183], %489 {strides = array<i32>} : memref<1x8x1xf32, #tpu.memory_space<vmem>>, vector<1x8x1xf32>,
      %c0_184 = arith.constant 0 : index
      %c0_185 = arith.constant 0 : index
      %c0_186 = arith.constant 0 : index
      %490 = vector.load %arg4[%c0_184, %c0_185, %c0_186] : memref<1x8x1xf32, #tpu.memory_space<vmem>>, vector<1x8x1xf32>
      %491 = vector.shape_cast %490 : vector<1x8x1xf32> to vector<8x1xf32>
      %cst_187 = arith.constant 0.000000e+00 : f32
      %492 = vector.broadcast %cst_187 : f32 to vector<8x1xf32>
      %493 = arith.maximumf %486, %492 : vector<8x1xf32>
      %494 = arith.mulf %486, %491 : vector<8x1xf32>
      %495 = arith.subf %493, %494 : vector<8x1xf32>
      %496 = math.absf %486 : vector<8x1xf32>
      %cst_188 = arith.constant 0.000000e+00 : f32
      %497 = vector.broadcast %cst_188 : f32 to vector<8x1xf32>
      %498 = arith.subf %497, %496 : vector<8x1xf32>
      %499 = math.exp %498 : vector<8x1xf32>
      %cst_189 = arith.constant 1.000000e+00 : f32
      %500 = vector.broadcast %cst_189 : f32 to vector<8x1xf32>
      %501 = arith.addf %500, %499 : vector<8x1xf32>
      %502 = math.log %501 : vector<8x1xf32>
      %503 = arith.addf %495, %502 : vector<8x1xf32>
      %c0_190 = arith.constant 0 : index
      %c0_191 = arith.constant 0 : index
      %c0_192 = arith.constant 0 : index
      %504 = vector.load %arg5[%c0_190, %c0_191, %c0_192] : memref<1x8x1xf32, #tpu.memory_space<vmem>>, vector<1x8x1xf32>
      %505 = vector.shape_cast %504 : vector<1x8x1xf32> to vector<8x1xf32>
      %506 = arith.mulf %503, %505 : vector<8x1xf32>
      %c0_193 = arith.constant 0 : index
      %c0_194 = arith.constant 0 : index
      %c0_195 = arith.constant 0 : index
      %507 = vector.load %arg14[%c0_193, %c0_194, %c0_195] : memref<1x8x1xf32, #tpu.memory_space<vmem>>, vector<1x8x1xf32>
      %508 = vector.shape_cast %507 : vector<1x8x1xf32> to vector<8x1xf32>
      %509 = vector.shape_cast %506 : vector<8x1xf32> to vector<1x8x1xf32>
      tpu.vector_store %arg14[%c0_193, %c0_194, %c0_195], %509 {strides = array<i32>} : memref<1x8x1xf32, #tpu.memory_space<vmem>>, vector<1x8x1xf32>,
    } else {
    }
    return
  }
  func.func @transform_0(%arg0: i32, %arg1: i32) -> (i32, i32, i32) {
    %c0_i32 = arith.constant 0 : i32
    %c0_i32_0 = arith.constant 0 : i32
    return %arg0, %arg1, %c0_i32 : i32, i32, i32
  }
  func.func @transform_1(%arg0: i32, %arg1: i32) -> (i32, i32, i32) {
    %c0_i32 = arith.constant 0 : i32
    %c0_i32_0 = arith.constant 0 : i32
    %c0_i32_1 = arith.constant 0 : i32
    return %arg0, %c0_i32, %c0_i32_0 : i32, i32, i32
  }
  func.func @transform_2(%arg0: i32, %arg1: i32) -> (i32, i32, i32) {
    %c0_i32 = arith.constant 0 : i32
    %c0_i32_0 = arith.constant 0 : i32
    %c0_i32_1 = arith.constant 0 : i32
    return %arg0, %c0_i32, %c0_i32_0 : i32, i32, i32
  }
  func.func @transform_3(%arg0: i32, %arg1: i32) -> (i32, i32, i32) {
    %c0_i32 = arith.constant 0 : i32
    %c0_i32_0 = arith.constant 0 : i32
    %c0_i32_1 = arith.constant 0 : i32
    return %arg0, %c0_i32, %c0_i32_0 : i32, i32, i32
  }
  func.func @transform_4(%arg0: i32, %arg1: i32) -> (i32, i32) {
    %c0_i32 = arith.constant 0 : i32
    %c0_i32_0 = arith.constant 0 : i32
    %c0_i32_1 = arith.constant 0 : i32
    return %c0_i32, %c0_i32_0 : i32, i32
  }
  func.func @transform_5(%arg0: i32, %arg1: i32) -> (i32, i32) {
    %c0_i32 = arith.constant 0 : i32
    %c0_i32_0 = arith.constant 0 : i32
    %c0_i32_1 = arith.constant 0 : i32
    return %c0_i32, %c0_i32_0 : i32, i32
  }
  func.func @transform_6(%arg0: i32, %arg1: i32) -> (i32, i32) {
    %c0_i32 = arith.constant 0 : i32
    %c0_i32_0 = arith.constant 0 : i32
    %c0_i32_1 = arith.constant 0 : i32
    return %c0_i32, %c0_i32_0 : i32, i32
  }
  func.func @transform_7(%arg0: i32, %arg1: i32) -> (i32, i32) {
    %c0_i32 = arith.constant 0 : i32
    %c0_i32_0 = arith.constant 0 : i32
    %c0_i32_1 = arith.constant 0 : i32
    return %c0_i32, %c0_i32_0 : i32, i32
  }
  func.func @transform_8(%arg0: i32, %arg1: i32) -> (i32, i32) {
    %c0_i32 = arith.constant 0 : i32
    %c0_i32_0 = arith.constant 0 : i32
    %c0_i32_1 = arith.constant 0 : i32
    return %c0_i32, %c0_i32_0 : i32, i32
  }
  func.func @transform_9(%arg0: i32, %arg1: i32) -> (i32, i32) {
    %c0_i32 = arith.constant 0 : i32
    %c0_i32_0 = arith.constant 0 : i32
    %c0_i32_1 = arith.constant 0 : i32
    return %c0_i32, %c0_i32_0 : i32, i32
  }
  func.func @transform_10(%arg0: i32, %arg1: i32) -> (i32, i32) {
    %c0_i32 = arith.constant 0 : i32
    %c0_i32_0 = arith.constant 0 : i32
    %c0_i32_1 = arith.constant 0 : i32
    return %c0_i32, %c0_i32_0 : i32, i32
  }
  func.func @transform_11(%arg0: i32, %arg1: i32) -> (i32, i32) {
    %c0_i32 = arith.constant 0 : i32
    %c0_i32_0 = arith.constant 0 : i32
    %c0_i32_1 = arith.constant 0 : i32
    return %c0_i32, %c0_i32_0 : i32, i32
  }
  func.func @transform_12(%arg0: i32, %arg1: i32) -> (i32, i32, i32) {
    %c0_i32 = arith.constant 0 : i32
    %c0_i32_0 = arith.constant 0 : i32
    %c0_i32_1 = arith.constant 0 : i32
    return %arg0, %c0_i32, %c0_i32_0 : i32, i32, i32
  }
  func.func @transform_13(%arg0: i32, %arg1: i32) -> (i32, i32, i32) {
    %c0_i32 = arith.constant 0 : i32
    %c0_i32_0 = arith.constant 0 : i32
    %c0_i32_1 = arith.constant 0 : i32
    return %arg0, %c0_i32, %c0_i32_0 : i32, i32, i32
  }
}

</mosaic_0001>

<llo_original>
// kernel: tpu_custom_call.1
$region0: #{tpu_custom_call.1}
  #allocation0 [shape = 'u32[]', space=smem, size = 0x4, offset = 0x4, fixed_abs, tag = 'smem constant byte address 0x4 - core index']
  #allocation1 [shape = 'u32[144,128]{1,0:T(1,128)}', space=vmem, size = 0x12000, scoped, tag = 'internal scratch']
  #allocation2 [shape = 'f32[64,512]{1,0:T(8,128)}', space=vmem, size = 0x20000, scoped, tag = 'scratch operand']
  #allocation3 [shape = 'f32[64,128]{1,0:T(8,128)}', space=vmem, size = 0x8000, scoped, tag = 'scratch operand']
  #allocation4 [shape = 'f32[8,128]{1,0:T(8,128)}', space=vmem, size = 0x1000, scoped, tag = 'scratch operand']
  #allocation5 [shape = 'f32[8,128]{1,0:T(8,128)}', space=vmem, size = 0x1000, scoped, tag = 'scratch operand']
  #allocation6 [shape = 'f32[8,1]{1,0:T(8,128)}', space=vmem, size = 0x1000, scoped, tag = 'scratch operand']
  #allocation7 [shape = 'f32[8,1]{1,0:T(8,128)}', space=vmem, size = 0x1000, scoped, tag = 'scratch operand']
  #allocation8 [shape = 'f32[8,128]{1,0:T(8,128)}', space=vmem, size = 0x1000, scoped, tag = 'scratch operand']
  #allocation9 [shape = 'f32[1,1]{1,0:T(1,128)S(1)}', space=vmem, size = 0x200, scoped, tag = 'scoped memory for tpu_custom_call.1']
  #allocation10 [shape = 'f32[1,1]{1,0:T(1,128)S(1)}', space=vmem, size = 0x200, scoped, tag = 'scoped memory for tpu_custom_call.1']
  %s0 = inlined_call_operand.hbm [shape: bf16[1,128,128], index: 0, kind: input, shape index: {}]
  %s1 = inlined_call_operand.vmem [shape: s32[1,8,1], index: 1, kind: input, shape index: {}]
  %s2 = inlined_call_operand.vmem [shape: f32[1,8,1], index: 2, kind: input, shape index: {}]
  %s3 = inlined_call_operand.vmem [shape: f32[1,8,1], index: 3, kind: input, shape index: {}]
  %s4 = inlined_call_operand.hbm [shape: bf16[128,512], index: 4, kind: input, shape index: {}]
  %s5 = inlined_call_operand.hbm [shape: bf16[128,512], index: 5, kind: input, shape index: {}]
  %s6 = inlined_call_operand.vmem [shape: f32[1,128], index: 6, kind: input, shape index: {}]
  %s7 = inlined_call_operand.<no memory space> [shape: f32[1,1], index: 7, kind: input, shape index: {}]
  %s8 = inlined_call_operand.vmem [shape: f32[128,128], index: 8, kind: input, shape index: {}]
  %s9 = inlined_call_operand.vmem [shape: f32[1,128], index: 9, kind: input, shape index: {}]
  %s10 = inlined_call_operand.vmem [shape: f32[128,1], index: 10, kind: input, shape index: {}]
  %s11 = inlined_call_operand.<no memory space> [shape: f32[1,1], index: 11, kind: input, shape index: {}]
  %s12 = inlined_call_operand.vmem [shape: f32[1,8,1], index: 12, kind: output, shape index: {0}]
  %s13 = inlined_call_operand.vmem [shape: f32[1,8,1], index: 13, kind: output, shape index: {1}]
  %14 = xla_tuple %s12, %s13
  %s15 = sld [smem:[#allocation0]]
  $region109: #{tpu_custom_call.1} parent=0
    _
  %s17 = ssub.s32 1, %s15
  %s18 = scalar_select 0, %s17, %s15
  %v19 = vstv %s7
  %20 = vst [vmem:[#allocation9] sm:$0x1] %v19
  %v21 = vstv %s11
  %22 = vst [vmem:[#allocation10] sm:$0x1] %v21
  $region1: #{tpu_custom_call.1} parent=0
    #allocation11 [shape = 'u8[32768]{0}', space=vmem, size = 0x8000, scoped, tag = 'input window, operand 0']
    #allocation12 [shape = 's32[2]{0}', space=sflag, size = 0x8, scoped, tag = 'scoped memory for tpu_custom_call.1']
    #allocation13 [shape = 'u8[131072]{0}', space=vmem, size = 0x20000, scoped, tag = 'input window, operand 4, single buffered']
    #allocation14 [shape = 's32[1]{0}', space=sflag, size = 0x4, scoped, tag = 'scoped memory for tpu_custom_call.1']
    #allocation15 [shape = 'u8[131072]{0}', space=vmem, size = 0x20000, scoped, tag = 'input window, operand 5, single buffered']
    %23 = vsyncpa [#allocation12], 0
    %s24 = scalar_lea.sflag [#allocation12], 1
    %25 = vsyncpa %s24, 0
    %26 = vsyncpa [#allocation14], 0
    loop: start=0, step=1, limit=4
    $region2: #{tpu_custom_call.1} parent=1 // loop_pre_header
      _
    $region3: #{tpu_custom_call.1} parent=1 // loop_header
      %s28 = sphi 0, %s32
      %p29 = scmp.ge.s32.totalorder %s28, 4
      %s35 = sphi 0, %s47
      %s36 = sphi 0, %s43
      %s37 = sphi 0, %s35
      %s38 = sphi 0, %s36
      %s39 = sphi 0, %s37
      %s40 = sphi 0, %s38
      %s52 = sphi 0, %s54
      %s55 = sphi 0, %s52
      %s56 = sphi 0, %s55
      %s72 = sphi 0, %s56
      %s78 = sphi 0, %s80
      %s81 = sphi 0, %s78
      %s82 = sphi 0, %s81
      %s98 = sphi 0, %s82
      %s104 = sphi 0, %s106
      %s107 = sphi 0, %s104
      %s108 = sphi 0, %s107
      %s124 = sphi 0, %s108
      %s130 = sphi 0, %s132
      %s133 = sphi 0, %s130
      %s134 = sphi 0, %s133
      %s150 = sphi 0, %s134
      %s154 = sphi 0, %s154
      %s156 = sphi 0, %s154
      %s157 = sphi 0, %s156
      %s171 = sphi 0, %s157
      %s175 = sphi 0, %s175
      %s177 = sphi 0, %s175
      %s178 = sphi 0, %s177
      %s192 = sphi 0, %s178
      %s196 = sphi 0, %s196
      %s198 = sphi 0, %s196
      %s199 = sphi 0, %s198
      %s213 = sphi 0, %s199
      %s217 = sphi 0, %s217
      %s219 = sphi 0, %s217
      %s220 = sphi 0, %s219
      %s234 = sphi 0, %s220
      %s238 = sphi 0, %s238
      %s240 = sphi 0, %s238
      %s241 = sphi 0, %s240
      %s255 = sphi 0, %s241
      %s259 = sphi 0, %s259
      %s261 = sphi 0, %s259
      %s262 = sphi 0, %s261
      %s276 = sphi 0, %s262
      %s280 = sphi 0, %s280
      %s282 = sphi 0, %s280
      %s283 = sphi 0, %s282
      %s297 = sphi 0, %s283
      %s301 = sphi 0, %s301
      %s303 = sphi 0, %s301
      %s304 = sphi 0, %s303
      %s318 = sphi 0, %s304
      %s324 = sphi 0, %s326
      %s327 = sphi 0, %s324
      %s328 = sphi 0, %s327
      %s344 = sphi 0, %s328
      %s350 = sphi 0, %s352
      %s353 = sphi 0, %s350
      %s354 = sphi 0, %s353
      %s370 = sphi 0, %s354
    $region4: #{tpu_custom_call.1} parent=1 // loop_header_branch
      %31 = sbr.rel (%p29) target = $region8
    $region5: #{tpu_custom_call.1} parent=1 // loop_body
      %s33 = ssub.s32 %s28, 1
      %s34 = ssub.s32 %s28, 2
      %s41 = sadd.s32 1, %s36
      %p42 = scmp.ge.s32.totalorder %s41, 2
      %s43 = scalar_select %p42, 0, %s41
      %s44 = sadd.s32 1, %s35
      %s45 = scalar_select %p42, %s44, %s35
      %p46 = scmp.ge.s32.totalorder %s45, 1
      %s47 = scalar_select %p46, 0, %s45
      %s48 = ssub.s32 %s35, %s47
      %s49 = ssub.s32 %s36, %s43
      %s50 = sor.u32 %s48, %s49
      %p51 = scmp.eq.s32.totalorder %s50, 0
      %s53 = sadd.s32 %s52, 1
      %s54 = scalar_select %p51, %s52, %s53
      %p57 = pneg %p51
      %p58 = scmp.eq.s32.totalorder %s28, 1
      %p59 = por %p57, %p58
      %p60 = scmp.ne.s32.totalorder %s52, %s55
      %p61 = scmp.eq.s32.totalorder %s28, 0
      %p62 = por %p60, %p61
      %p63 = scmp.ne.s32.totalorder %s52, %s55
      %p64 = scmp.eq.s32.totalorder %s33, 1
      %p65 = por %p63, %p64
      %p66 = scmp.ne.s32.totalorder %s55, %s56
      %p67 = scmp.eq.s32.totalorder %s33, 0
      %p68 = por %p66, %p67
      %p69 = scmp.ne.s32.totalorder %s55, %s56
      %p70 = scmp.eq.s32.totalorder %s34, 1
      %p71 = por %p69, %p70
      %p73 = scmp.ne.s32.totalorder %s56, %s72
      %p74 = scmp.eq.s32.totalorder %s34, 0
      %p75 = por %p73, %p74
      %s76 = ssub.s32 %s35, %s47
      %p77 = scmp.eq.s32.totalorder %s76, 0
      %s79 = sadd.s32 %s78, 1
      %s80 = scalar_select %p77, %s78, %s79
      %p83 = pneg %p77
      %p84 = scmp.eq.s32.totalorder %s28, 1
      %p85 = por %p83, %p84
      %p86 = scmp.ne.s32.totalorder %s78, %s81
      %p87 = scmp.eq.s32.totalorder %s28, 0
      %p88 = por %p86, %p87
      %p89 = scmp.ne.s32.totalorder %s78, %s81
      %p90 = scmp.eq.s32.totalorder %s33, 1
      %p91 = por %p89, %p90
      %p92 = scmp.ne.s32.totalorder %s81, %s82
      %p93 = scmp.eq.s32.totalorder %s33, 0
      %p94 = por %p92, %p93
      %p95 = scmp.ne.s32.totalorder %s81, %s82
      %p96 = scmp.eq.s32.totalorder %s34, 1
      %p97 = por %p95, %p96
      %p99 = scmp.ne.s32.totalorder %s82, %s98
      %p100 = scmp.eq.s32.totalorder %s34, 0
      %p101 = por %p99, %p100
      %s102 = ssub.s32 %s35, %s47
      %p103 = scmp.eq.s32.totalorder %s102, 0
      %s105 = sadd.s32 %s104, 1
      %s106 = scalar_select %p103, %s104, %s105
      %p109 = pneg %p103
      %p110 = scmp.eq.s32.totalorder %s28, 1
      %p111 = por %p109, %p110
      %p112 = scmp.ne.s32.totalorder %s104, %s107
      %p113 = scmp.eq.s32.totalorder %s28, 0
      %p114 = por %p112, %p113
      %p115 = scmp.ne.s32.totalorder %s104, %s107
      %p116 = scmp.eq.s32.totalorder %s33, 1
      %p117 = por %p115, %p116
      %p118 = scmp.ne.s32.totalorder %s107, %s108
      %p119 = scmp.eq.s32.totalorder %s33, 0
      %p120 = por %p118, %p119
      %p121 = scmp.ne.s32.totalorder %s107, %s108
      %p122 = scmp.eq.s32.totalorder %s34, 1
      %p123 = por %p121, %p122
      %p125 = scmp.ne.s32.totalorder %s108, %s124
      %p126 = scmp.eq.s32.totalorder %s34, 0
      %p127 = por %p125, %p126
      %s128 = ssub.s32 %s35, %s47
      %p129 = scmp.eq.s32.totalorder %s128, 0
      %s131 = sadd.s32 %s130, 1
      %s132 = scalar_select %p129, %s130, %s131
      %p135 = pneg %p129
      %p136 = scmp.eq.s32.totalorder %s28, 1
      %p137 = por %p135, %p136
      %p138 = scmp.ne.s32.totalorder %s130, %s133
      %p139 = scmp.eq.s32.totalorder %s28, 0
      %p140 = por %p138, %p139
      %p141 = scmp.ne.s32.totalorder %s130, %s133
      %p142 = scmp.eq.s32.totalorder %s33, 1
      %p143 = por %p141, %p142
      %p144 = scmp.ne.s32.totalorder %s133, %s134
      %p145 = scmp.eq.s32.totalorder %s33, 0
      %p146 = por %p144, %p145
      %p147 = scmp.ne.s32.totalorder %s133, %s134
      %p148 = scmp.eq.s32.totalorder %s34, 1
      %p149 = por %p147, %p148
      %p151 = scmp.ne.s32.totalorder %s134, %s150
      %p152 = scmp.eq.s32.totalorder %s34, 0
      %p153 = por %p151, %p152
      %s155 = sadd.s32 %s154, 1
      %p158 = scmp.eq.s32.totalorder %s28, 1
      %p159 = scmp.ne.s32.totalorder %s154, %s156
      %p160 = scmp.eq.s32.totalorder %s28, 0
      %p161 = por %p159, %p160
      %p162 = scmp.ne.s32.totalorder %s154, %s156
      %p163 = scmp.eq.s32.totalorder %s33, 1
      %p164 = por %p162, %p163
      %p165 = scmp.ne.s32.totalorder %s156, %s157
      %p166 = scmp.eq.s32.totalorder %s33, 0
      %p167 = por %p165, %p166
      %p168 = scmp.ne.s32.totalorder %s156, %s157
      %p169 = scmp.eq.s32.totalorder %s34, 1
      %p170 = por %p168, %p169
      %p172 = scmp.ne.s32.totalorder %s157, %s171
      %p173 = scmp.eq.s32.totalorder %s34, 0
      %p174 = por %p172, %p173
      %s176 = sadd.s32 %s175, 1
      %p179 = scmp.eq.s32.totalorder %s28, 1
      %p180 = scmp.ne.s32.totalorder %s175, %s177
      %p181 = scmp.eq.s32.totalorder %s28, 0
      %p182 = por %p180, %p181
      %p183 = scmp.ne.s32.totalorder %s175, %s177
      %p184 = scmp.eq.s32.totalorder %s33, 1
      %p185 = por %p183, %p184
      %p186 = scmp.ne.s32.totalorder %s177, %s178
      %p187 = scmp.eq.s32.totalorder %s33, 0
      %p188 = por %p186, %p187
      %p189 = scmp.ne.s32.totalorder %s177, %s178
      %p190 = scmp.eq.s32.totalorder %s34, 1
      %p191 = por %p189, %p190
      %p193 = scmp.ne.s32.totalorder %s178, %s192
      %p194 = scmp.eq.s32.totalorder %s34, 0
      %p195 = por %p193, %p194
      %s197 = sadd.s32 %s196, 1
      %p200 = scmp.eq.s32.totalorder %s28, 1
      %p201 = scmp.ne.s32.totalorder %s196, %s198
      %p202 = scmp.eq.s32.totalorder %s28, 0
      %p203 = por %p201, %p202
      %p204 = scmp.ne.s32.totalorder %s196, %s198
      %p205 = scmp.eq.s32.totalorder %s33, 1
      %p206 = por %p204, %p205
      %p207 = scmp.ne.s32.totalorder %s198, %s199
      %p208 = scmp.eq.s32.totalorder %s33, 0
      %p209 = por %p207, %p208
      %p210 = scmp.ne.s32.totalorder %s198, %s199
      %p211 = scmp.eq.s32.totalorder %s34, 1
      %p212 = por %p210, %p211
      %p214 = scmp.ne.s32.totalorder %s199, %s213
      %p215 = scmp.eq.s32.totalorder %s34, 0
      %p216 = por %p214, %p215
      %s218 = sadd.s32 %s217, 1
      %p221 = scmp.eq.s32.totalorder %s28, 1
      %p222 = scmp.ne.s32.totalorder %s217, %s219
      %p223 = scmp.eq.s32.totalorder %s28, 0
      %p224 = por %p222, %p223
      %p225 = scmp.ne.s32.totalorder %s217, %s219
      %p226 = scmp.eq.s32.totalorder %s33, 1
      %p227 = por %p225, %p226
      %p228 = scmp.ne.s32.totalorder %s219, %s220
      %p229 = scmp.eq.s32.totalorder %s33, 0
      %p230 = por %p228, %p229
      %p231 = scmp.ne.s32.totalorder %s219, %s220
      %p232 = scmp.eq.s32.totalorder %s34, 1
      %p233 = por %p231, %p232
      %p235 = scmp.ne.s32.totalorder %s220, %s234
      %p236 = scmp.eq.s32.totalorder %s34, 0
      %p237 = por %p235, %p236
      %s239 = sadd.s32 %s238, 1
      %p242 = scmp.eq.s32.totalorder %s28, 1
      %p243 = scmp.ne.s32.totalorder %s238, %s240
      %p244 = scmp.eq.s32.totalorder %s28, 0
      %p245 = por %p243, %p244
      %p246 = scmp.ne.s32.totalorder %s238, %s240
      %p247 = scmp.eq.s32.totalorder %s33, 1
      %p248 = por %p246, %p247
      %p249 = scmp.ne.s32.totalorder %s240, %s241
      %p250 = scmp.eq.s32.totalorder %s33, 0
      %p251 = por %p249, %p250
      %p252 = scmp.ne.s32.totalorder %s240, %s241
      %p253 = scmp.eq.s32.totalorder %s34, 1
      %p254 = por %p252, %p253
      %p256 = scmp.ne.s32.totalorder %s241, %s255
      %p257 = scmp.eq.s32.totalorder %s34, 0
      %p258 = por %p256, %p257
      %s260 = sadd.s32 %s259, 1
      %p263 = scmp.eq.s32.totalorder %s28, 1
      %p264 = scmp.ne.s32.totalorder %s259, %s261
      %p265 = scmp.eq.s32.totalorder %s28, 0
      %p266 = por %p264, %p265
      %p267 = scmp.ne.s32.totalorder %s259, %s261
      %p268 = scmp.eq.s32.totalorder %s33, 1
      %p269 = por %p267, %p268
      %p270 = scmp.ne.s32.totalorder %s261, %s262
      %p271 = scmp.eq.s32.totalorder %s33, 0
      %p272 = por %p270, %p271
      %p273 = scmp.ne.s32.totalorder %s261, %s262
      %p274 = scmp.eq.s32.totalorder %s34, 1
      %p275 = por %p273, %p274
      %p277 = scmp.ne.s32.totalorder %s262, %s276
      %p278 = scmp.eq.s32.totalorder %s34, 0
      %p279 = por %p277, %p278
      %s281 = sadd.s32 %s280, 1
      %p284 = scmp.eq.s32.totalorder %s28, 1
      %p285 = scmp.ne.s32.totalorder %s280, %s282
      %p286 = scmp.eq.s32.totalorder %s28, 0
      %p287 = por %p285, %p286
      %p288 = scmp.ne.s32.totalorder %s280, %s282
      %p289 = scmp.eq.s32.totalorder %s33, 1
      %p290 = por %p288, %p289
      %p291 = scmp.ne.s32.totalorder %s282, %s283
      %p292 = scmp.eq.s32.totalorder %s33, 0
      %p293 = por %p291, %p292
      %p294 = scmp.ne.s32.totalorder %s282, %s283
      %p295 = scmp.eq.s32.totalorder %s34, 1
      %p296 = por %p294, %p295
      %p298 = scmp.ne.s32.totalorder %s283, %s297
      %p299 = scmp.eq.s32.totalorder %s34, 0
      %p300 = por %p298, %p299
      %s302 = sadd.s32 %s301, 1
      %p305 = scmp.eq.s32.totalorder %s28, 1
      %p306 = scmp.ne.s32.totalorder %s301, %s303
      %p307 = scmp.eq.s32.totalorder %s28, 0
      %p308 = por %p306, %p307
      %p309 = scmp.ne.s32.totalorder %s301, %s303
      %p310 = scmp.eq.s32.totalorder %s33, 1
      %p311 = por %p309, %p310
      %p312 = scmp.ne.s32.totalorder %s303, %s304
      %p313 = scmp.eq.s32.totalorder %s33, 0
      %p314 = por %p312, %p313
      %p315 = scmp.ne.s32.totalorder %s303, %s304
      %p316 = scmp.eq.s32.totalorder %s34, 1
      %p317 = por %p315, %p316
      %p319 = scmp.ne.s32.totalorder %s304, %s318
      %p320 = scmp.eq.s32.totalorder %s34, 0
      %p321 = por %p319, %p320
      %s322 = ssub.s32 %s35, %s47
      %p323 = scmp.eq.s32.totalorder %s322, 0
      %s325 = sadd.s32 %s324, 1
      %s326 = scalar_select %p323, %s324, %s325
      %p329 = pneg %p323
      %p330 = scmp.eq.s32.totalorder %s28, 1
      %p331 = por %p329, %p330
      %p332 = scmp.ne.s32.totalorder %s324, %s327
      %p333 = scmp.eq.s32.totalorder %s28, 0
      %p334 = por %p332, %p333
      %p335 = scmp.ne.s32.totalorder %s324, %s327
      %p336 = scmp.eq.s32.totalorder %s33, 1
      %p337 = por %p335, %p336
      %p338 = scmp.ne.s32.totalorder %s327, %s328
      %p339 = scmp.eq.s32.totalorder %s33, 0
      %p340 = por %p338, %p339
      %p341 = scmp.ne.s32.totalorder %s327, %s328
      %p342 = scmp.eq.s32.totalorder %s34, 1
      %p343 = por %p341, %p342
      %p345 = scmp.ne.s32.totalorder %s328, %s344
      %p346 = scmp.eq.s32.totalorder %s34, 0
      %p347 = por %p345, %p346
      %s348 = ssub.s32 %s35, %s47
      %p349 = scmp.eq.s32.totalorder %s348, 0
      %s351 = sadd.s32 %s350, 1
      %s352 = scalar_select %p349, %s350, %s351
      %p355 = pneg %p349
      %p356 = scmp.eq.s32.totalorder %s28, 1
      %p357 = por %p355, %p356
      %p358 = scmp.ne.s32.totalorder %s350, %s353
      %p359 = scmp.eq.s32.totalorder %s28, 0
      %p360 = por %p358, %p359
      %p361 = scmp.ne.s32.totalorder %s350, %s353
      %p362 = scmp.eq.s32.totalorder %s33, 1
      %p363 = por %p361, %p362
      %p364 = scmp.ne.s32.totalorder %s353, %s354
      %p365 = scmp.eq.s32.totalorder %s33, 0
      %p366 = por %p364, %p365
      %p367 = scmp.ne.s32.totalorder %s353, %s354
      %p368 = scmp.eq.s32.totalorder %s34, 1
      %p369 = por %p367, %p368
      %p371 = scmp.ne.s32.totalorder %s354, %s370
      %p372 = scmp.eq.s32.totalorder %s34, 0
      %p373 = por %p371, %p372
      %p374 = scmp.le.s32.totalorder 1, %s28
      %p375 = scmp.lt.s32.totalorder %s28, 3
      %p376 = pnand %p374, %p375
      %p377 = pneg %p376
      // Predicated region
      $region9: #{tpu_custom_call.1} parent=5 // pred_check
        _
      $region10: #{tpu_custom_call.1} parent=5 // pred_check_branch
        %379 = sbr.rel (%p376) target = $region12
      $region11: #{tpu_custom_call.1} parent=5 // pred_region
        %s380 = ssub.s32 %s28, 1
        // Predicated region
        $region13: #{tpu_custom_call.1} parent=11 // pred_check
          %p381 = pneg %p94
        $region14: #{tpu_custom_call.1} parent=11 // pred_check_branch
          %383 = sbr.rel (%p381) target = $region16
        $region15: #{tpu_custom_call.1} parent=11 // pred_region
          %p384 = scmp.lt.s32.totalorder %s37, 0
          %s385 = scalar_select %p384, %s37, 0
          %s386 = smul.addr %s385, 8
          %s387 = scalar_lea.vmem %s1, %s386
        $region16: #{tpu_custom_call.1} parent=11 // pred_fallthru
          _
        // Predicated region
        $region17: #{tpu_custom_call.1} parent=11 // pred_check
          %p388 = pneg %p120
        $region18: #{tpu_custom_call.1} parent=11 // pred_check_branch
          %390 = sbr.rel (%p388) target = $region20
        $region19: #{tpu_custom_call.1} parent=11 // pred_region
          %p391 = scmp.lt.s32.totalorder %s37, 0
          %s392 = scalar_select %p391, %s37, 0
          %s393 = smul.addr %s392, 8
          %s394 = scalar_lea.vmem %s2, %s393
        $region20: #{tpu_custom_call.1} parent=11 // pred_fallthru
          _
        // Predicated region
        $region21: #{tpu_custom_call.1} parent=11 // pred_check
          %p395 = pneg %p146
        $region22: #{tpu_custom_call.1} parent=11 // pred_check_branch
          %397 = sbr.rel (%p395) target = $region24
        $region23: #{tpu_custom_call.1} parent=11 // pred_region
          %p398 = scmp.lt.s32.totalorder %s37, 0
          %s399 = scalar_select %p398, %s37, 0
          %s400 = smul.addr %s399, 8
          %s401 = scalar_lea.vmem %s3, %s400
        $region24: #{tpu_custom_call.1} parent=11 // pred_fallthru
          _
        // Predicated region
        $region25: #{tpu_custom_call.1} parent=11 // pred_check
          %p402 = pneg %p167
        $region26: #{tpu_custom_call.1} parent=11 // pred_check_branch
          %404 = sbr.rel (%p402) target = $region28
        $region27: #{tpu_custom_call.1} parent=11 // pred_region
          %s406 = ssub.s32 4096, 4096
          %407 = vsyncadd [#allocation14], %s406
          %s408 = sshll.u32 [#allocation13], 4
          %s409 = int_to_ptr.vmem [resolvable:$true] %s408
          %414 = dma.hbm_to_vmem [thread:$0]  %s4, 4096, %s409, [#allocation14], 256, 256, 16
        $region28: #{tpu_custom_call.1} parent=11 // pred_fallthru
          _
        // Predicated region
        $region29: #{tpu_custom_call.1} parent=11 // pred_check
          %p415 = pneg %p188
        $region30: #{tpu_custom_call.1} parent=11 // pred_check_branch
          %417 = sbr.rel (%p415) target = $region32
        $region31: #{tpu_custom_call.1} parent=11 // pred_region
          %s419 = ssub.s32 4096, 4096
          %420 = vsyncadd [#allocation14], %s419
          %s421 = sshll.u32 [#allocation15], 4
          %s422 = int_to_ptr.vmem [resolvable:$true] %s421
          %427 = dma.hbm_to_vmem [thread:$0]  %s5, 4096, %s422, [#allocation14], 256, 256, 16
        $region32: #{tpu_custom_call.1} parent=11 // pred_fallthru
          _
        // Predicated region
        $region33: #{tpu_custom_call.1} parent=11 // pred_check
          %p428 = pneg %p209
        $region34: #{tpu_custom_call.1} parent=11 // pred_check_branch
          %430 = sbr.rel (%p428) target = $region36
        $region35: #{tpu_custom_call.1} parent=11 // pred_region
          _
        $region36: #{tpu_custom_call.1} parent=11 // pred_fallthru
          _
        // Predicated region
        $region37: #{tpu_custom_call.1} parent=11 // pred_check
          %p431 = pneg %p230
        $region38: #{tpu_custom_call.1} parent=11 // pred_check_branch
          %433 = sbr.rel (%p431) target = $region40
        $region39: #{tpu_custom_call.1} parent=11 // pred_region
          _
        $region40: #{tpu_custom_call.1} parent=11 // pred_fallthru
          _
        // Predicated region
        $region41: #{tpu_custom_call.1} parent=11 // pred_check
          %p434 = pneg %p251
        $region42: #{tpu_custom_call.1} parent=11 // pred_check_branch
          %436 = sbr.rel (%p434) target = $region44
        $region43: #{tpu_custom_call.1} parent=11 // pred_region
          _
        $region44: #{tpu_custom_call.1} parent=11 // pred_fallthru
          _
        // Predicated region
        $region45: #{tpu_custom_call.1} parent=11 // pred_check
          %p437 = pneg %p272
        $region46: #{tpu_custom_call.1} parent=11 // pred_check_branch
          %439 = sbr.rel (%p437) target = $region48
        $region47: #{tpu_custom_call.1} parent=11 // pred_region
          _
        $region48: #{tpu_custom_call.1} parent=11 // pred_fallthru
          _
        // Predicated region
        $region49: #{tpu_custom_call.1} parent=11 // pred_check
          %p440 = pneg %p293
        $region50: #{tpu_custom_call.1} parent=11 // pred_check_branch
          %442 = sbr.rel (%p440) target = $region52
        $region51: #{tpu_custom_call.1} parent=11 // pred_region
          _
        $region52: #{tpu_custom_call.1} parent=11 // pred_fallthru
          _
        // Predicated region
        $region53: #{tpu_custom_call.1} parent=11 // pred_check
          %p443 = pneg %p314
        $region54: #{tpu_custom_call.1} parent=11 // pred_check_branch
          %445 = sbr.rel (%p443) target = $region56
        $region55: #{tpu_custom_call.1} parent=11 // pred_region
          _
        $region56: #{tpu_custom_call.1} parent=11 // pred_fallthru
          _
      $region12: #{tpu_custom_call.1} parent=5 // pred_fallthru
        _
      %p446 = scmp.lt.s32.totalorder %s28, 2
      // Predicated region
      $region57: #{tpu_custom_call.1} parent=5 // pred_check
        %p447 = pneg %p446
      $region58: #{tpu_custom_call.1} parent=5 // pred_check_branch
        %449 = sbr.rel (%p447) target = $region60
      $region59: #{tpu_custom_call.1} parent=5 // pred_region
        // Predicated region
        $region61: #{tpu_custom_call.1} parent=59 // pred_check
          %p450 = pneg %p62
        $region62: #{tpu_custom_call.1} parent=59 // pred_check_branch
          %452 = sbr.rel (%p450) target = $region64
        $region63: #{tpu_custom_call.1} parent=59 // pred_region
          %s453 = sand.u32 %s52, 1
          %s454 = scalar_lea.sflag [#allocation12], %s453
          %s455 = sand.u32 %s52, 1
          %s456 = smul.addr %s455, 32
          %s457 = scalar_lea.vmem [#allocation11], %s456
          %s458 = smul.u32 8, %s36
          %s460 = ssub.s32 512, 512
          %461 = vsyncadd %s454, %s460
          %s462 = smul.addr %s35, 16
          %s463 = sadd.s32 %s458, %s462
          %s464 = smul.addr %s463, 64
          %s465 = scalar_lea.hbm %s0, %s464
          %s466 = sshll.u32 %s457, 4
          %s467 = int_to_ptr.vmem [resolvable:$true] %s466
          %472 = dma.hbm_to_vmem [thread:$0]  %s465, 512, %s467, %s454, 64, 64, 4
        $region64: #{tpu_custom_call.1} parent=59 // pred_fallthru
          _
      $region60: #{tpu_custom_call.1} parent=5 // pred_fallthru
        _
      %p473 = scmp.le.s32.totalorder 1, %s28
      %p474 = scmp.lt.s32.totalorder %s28, 3
      %p475 = pnand %p473, %p474
      %p476 = pneg %p475
      // Predicated region
      $region65: #{tpu_custom_call.1} parent=5 // pred_check
        _
      $region66: #{tpu_custom_call.1} parent=5 // pred_check_branch
        %478 = sbr.rel (%p475) target = $region68
      $region67: #{tpu_custom_call.1} parent=5 // pred_region
        %s479 = ssub.s32 %s28, 1
        %s480 = sand.u32 %s55, 1
        %s481 = scalar_lea.sflag [#allocation12], %s480
        %s482 = sand.u32 %s55, 1
        %s483 = smul.addr %s482, 32
        %s484 = scalar_lea.vmem [#allocation11], %s483
        // Predicated region
        $region69: #{tpu_custom_call.1} parent=67 // pred_check
          %p485 = pneg %p68
        $region70: #{tpu_custom_call.1} parent=67 // pred_check_branch
          %487 = sbr.rel (%p485) target = $region72
        $region71: #{tpu_custom_call.1} parent=67 // pred_region
          %488 = dma.done %s481, 512
        $region72: #{tpu_custom_call.1} parent=67 // pred_fallthru
          _
        // Predicated region
        $region73: #{tpu_custom_call.1} parent=67 // pred_check
          %p489 = pneg %p167
        $region74: #{tpu_custom_call.1} parent=67 // pred_check_branch
          %491 = sbr.rel (%p489) target = $region76
        $region75: #{tpu_custom_call.1} parent=67 // pred_region
          %492 = dma.done [#allocation14], 4096
        $region76: #{tpu_custom_call.1} parent=67 // pred_fallthru
          _
        // Predicated region
        $region77: #{tpu_custom_call.1} parent=67 // pred_check
          %p493 = pneg %p188
        $region78: #{tpu_custom_call.1} parent=67 // pred_check_branch
          %495 = sbr.rel (%p493) target = $region80
        $region79: #{tpu_custom_call.1} parent=67 // pred_region
          %496 = dma.done [#allocation14], 4096
        $region80: #{tpu_custom_call.1} parent=67 // pred_fallthru
          _
        %s497 = sand.u32 %s55, 1
        %s498 = scalar_lea.sflag [#allocation12], %s497
        %s499 = sand.u32 %s55, 1
        %s500 = smul.addr %s499, 32
        %s501 = scalar_lea.vmem [#allocation11], %s500
        %p502 = pneg %p68
        %p503 = pneg %p65
        %p504 = scmp.lt.s32.totalorder %s37, 0
        %s505 = scalar_select %p504, %s37, 0
        %s506 = smul.addr %s505, 8
        %s507 = scalar_lea.vmem %s1, %s506
        %p508 = pneg %p94
        %p509 = pneg %p91
        %p510 = scmp.lt.s32.totalorder %s37, 0
        %s511 = scalar_select %p510, %s37, 0
        %s512 = smul.addr %s511, 8
        %s513 = scalar_lea.vmem %s2, %s512
        %p514 = pneg %p120
        %p515 = pneg %p117
        %p516 = scmp.lt.s32.totalorder %s37, 0
        %s517 = scalar_select %p516, %s37, 0
        %s518 = smul.addr %s517, 8
        %s519 = scalar_lea.vmem %s3, %s518
        %p520 = pneg %p146
        %p521 = pneg %p143
        %p522 = pneg %p167
        %p523 = pneg %p164
        %p524 = pneg %p188
        %p525 = pneg %p185
        %p526 = pneg %p209
        %p527 = pneg %p206
        %p528 = pneg %p230
        %p529 = pneg %p227
        %p530 = pneg %p251
        %p531 = pneg %p248
        %p532 = pneg %p272
        %p533 = pneg %p269
        %p534 = pneg %p293
        %p535 = pneg %p290
        %p536 = pneg %p314
        %p537 = pneg %p311
        %p538 = pneg %p340
        %p539 = pneg %p337
        %p540 = scmp.lt.s32.totalorder %s37, 0
        %s541 = scalar_select %p540, %s37, 0
        %s542 = smul.addr %s541, 8
        %s543 = scalar_lea.vmem %s12, %s542
        %p544 = pneg %p366
        %p545 = pneg %p363
        %p546 = scmp.lt.s32.totalorder %s37, 0
        %s547 = scalar_select %p546, %s37, 0
        %s548 = smul.addr %s547, 8
        %s549 = scalar_lea.vmem %s13, %s548
        %s550 = smul.u32 8, %s38
        %p551 = scmp.lt.s32.totalorder %s37, 0
        %s552 = scalar_select %p551, %s37, 0
        %s553 = smul.addr %s552, 8
        %s554 = scalar_lea.vmem %s1, %s553
        %p555 = scmp.lt.s32.totalorder %s37, 0
        %s556 = scalar_select %p555, %s37, 0
        %s557 = smul.addr %s556, 8
        %s558 = scalar_lea.vmem %s2, %s557
        %p559 = scmp.lt.s32.totalorder %s37, 0
        %s560 = scalar_select %p559, %s37, 0
        %s561 = smul.addr %s560, 8
        %s562 = scalar_lea.vmem %s3, %s561
        %p563 = scmp.lt.s32.totalorder %s37, 0
        %s564 = scalar_select %p563, %s37, 0
        %s565 = smul.addr %s564, 8
        %s566 = scalar_lea.vmem %s12, %s565
        %p567 = scmp.lt.s32.totalorder %s37, 0
        %s568 = scalar_select %p567, %s37, 0
        %s569 = smul.addr %s568, 8
        %s570 = scalar_lea.vmem %s13, %s569
        %p572 = scmp.eq.s32.totalorder %s38, 0
        // Predicated region
        $region81: #{tpu_custom_call.1} parent=67 // pred_check
          %p573 = pneg %p572
        $region82: #{tpu_custom_call.1} parent=67 // pred_check_branch
          %575 = sbr.rel (%p573) target = $region84
        $region83: #{tpu_custom_call.1} parent=67 // pred_region
          %576 = vst [vmem:[#allocation4] sm:$0xff] 0.0
          %577 = vst [vmem:[#allocation5] sm:$0xff] 0.0
          %578 = vst [vmem:[#allocation8] sm:$0xff] 0.0
          %vm579 = vcmask 7168
          %580 = vst.msk [vmem:[#allocation7] sm:$0xff] %vm579, 0.0
          %581 = vst.msk [vmem:[#allocation6] sm:$0xff] %vm579, -1e+30
        $region84: #{tpu_custom_call.1} parent=67 // pred_fallthru
          _
        %v582 = vld [vmem:[%s484] sm:$0xf]
        %v583 = vld [vmem:[%s484 + $0x4] sm:$0xf]
        %v584 = vld [vmem:[%s484 + $0x8] sm:$0xf]
        %v585 = vld [vmem:[%s484 + $0xc] sm:$0xf]
        %v586 = vld [vmem:[%s484 + $0x10] sm:$0xf]
        %v587 = vld [vmem:[%s484 + $0x14] sm:$0xf]
        %v588 = vld [vmem:[%s484 + $0x18] sm:$0xf]
        %v589 = vld [vmem:[%s484 + $0x1c] sm:$0xf]
        %v590 = vld [vmem:[#allocation13] sm:$0xff]
        %v591 = vld [vmem:[#allocation13 + $0x8] sm:$0xff]
        %v592 = vld [vmem:[#allocation13 + $0x10] sm:$0xff]
        %v593 = vld [vmem:[#allocation13 + $0x18] sm:$0xff]
        %v594 = vld [vmem:[#allocation13 + $0x20] sm:$0xff]
        %v595 = vld [vmem:[#allocation13 + $0x28] sm:$0xff]
        %v596 = vld [vmem:[#allocation13 + $0x30] sm:$0xff]
        %v597 = vld [vmem:[#allocation13 + $0x38] sm:$0xff]
        %v598 = vld [vmem:[#allocation13 + $0x40] sm:$0xff]
        %v599 = vld [vmem:[#allocation13 + $0x48] sm:$0xff]
        %v600 = vld [vmem:[#allocation13 + $0x50] sm:$0xff]
        %v601 = vld [vmem:[#allocation13 + $0x58] sm:$0xff]
        %v602 = vld [vmem:[#allocation13 + $0x60] sm:$0xff]
        %v603 = vld [vmem:[#allocation13 + $0x68] sm:$0xff]
        %v604 = vld [vmem:[#allocation13 + $0x70] sm:$0xff]
        %v605 = vld [vmem:[#allocation13 + $0x78] sm:$0xff]
        %v606 = vld [vmem:[#allocation13 + $0x80] sm:$0xff]
        %v607 = vld [vmem:[#allocation13 + $0x88] sm:$0xff]
        %v608 = vld [vmem:[#allocation13 + $0x90] sm:$0xff]
        %v609 = vld [vmem:[#allocation13 + $0x98] sm:$0xff]
        %v610 = vld [vmem:[#allocation13 + $0xa0] sm:$0xff]
        %v611 = vld [vmem:[#allocation13 + $0xa8] sm:$0xff]
        %v612 = vld [vmem:[#allocation13 + $0xb0] sm:$0xff]
        %v613 = vld [vmem:[#allocation13 + $0xb8] sm:$0xff]
        %v614 = vld [vmem:[#allocation13 + $0xc0] sm:$0xff]
        %v615 = vld [vmem:[#allocation13 + $0xc8] sm:$0xff]
        %v616 = vld [vmem:[#allocation13 + $0xd0] sm:$0xff]
        %v617 = vld [vmem:[#allocation13 + $0xd8] sm:$0xff]
        %v618 = vld [vmem:[#allocation13 + $0xe0] sm:$0xff]
        %v619 = vld [vmem:[#allocation13 + $0xe8] sm:$0xff]
        %v620 = vld [vmem:[#allocation13 + $0xf0] sm:$0xff]
        %v621 = vld [vmem:[#allocation13 + $0xf8] sm:$0xff]
        %v630 = vunpack.c.l.b16 %v582
        %v631 = vunpack.c.l.b16 %v583
        %v632 = vunpack.c.l.b16 %v584
        %v633 = vunpack.c.l.b16 %v585
        %v634 = vunpack.c.l.b16 %v586
        %v635 = vunpack.c.l.b16 %v587
        %v636 = vunpack.c.l.b16 %v588
        %v637 = vunpack.c.l.b16 %v589
        %v638 = vpack.c.b16 %v631, %v630
        %v639 = vpack.c.b16 %v633, %v632
        %v640 = vpack.c.b16 %v635, %v634
        %v641 = vpack.c.b16 %v637, %v636
        %v678 = vunpack.c.l.b16 %v590
        %v679 = vunpack.c.h.b16 %v590
        %v680 = vunpack.c.l.b16 %v591
        %v681 = vunpack.c.h.b16 %v591
        %v682 = vunpack.c.l.b16 %v592
        %v683 = vunpack.c.h.b16 %v592
        %v684 = vunpack.c.l.b16 %v593
        %v685 = vunpack.c.h.b16 %v593
        %v686 = vunpack.c.l.b16 %v594
        %v687 = vunpack.c.h.b16 %v594
        %v688 = vunpack.c.l.b16 %v595
        %v689 = vunpack.c.h.b16 %v595
        %v690 = vunpack.c.l.b16 %v596
        %v691 = vunpack.c.h.b16 %v596
        %v692 = vunpack.c.l.b16 %v597
        %v693 = vunpack.c.h.b16 %v597
        %v694 = vunpack.c.l.b16 %v598
        %v695 = vunpack.c.h.b16 %v598
        %v696 = vunpack.c.l.b16 %v599
        %v697 = vunpack.c.h.b16 %v599
        %v698 = vunpack.c.l.b16 %v600
        %v699 = vunpack.c.h.b16 %v600
        %v700 = vunpack.c.l.b16 %v601
        %v701 = vunpack.c.h.b16 %v601
        %v702 = vunpack.c.l.b16 %v602
        %v703 = vunpack.c.h.b16 %v602
        %v704 = vunpack.c.l.b16 %v603
        %v705 = vunpack.c.h.b16 %v603
        %v706 = vunpack.c.l.b16 %v604
        %v707 = vunpack.c.h.b16 %v604
        %v708 = vunpack.c.l.b16 %v605
        %v709 = vunpack.c.h.b16 %v605
        %v710 = vunpack.c.l.b16 %v606
        %v711 = vunpack.c.h.b16 %v606
        %v712 = vunpack.c.l.b16 %v607
        %v713 = vunpack.c.h.b16 %v607
        %v714 = vunpack.c.l.b16 %v608
        %v715 = vunpack.c.h.b16 %v608
        %v716 = vunpack.c.l.b16 %v609
        %v717 = vunpack.c.h.b16 %v609
        %v718 = vunpack.c.l.b16 %v610
        %v719 = vunpack.c.h.b16 %v610
        %v720 = vunpack.c.l.b16 %v611
        %v721 = vunpack.c.h.b16 %v611
        %v722 = vunpack.c.l.b16 %v612
        %v723 = vunpack.c.h.b16 %v612
        %v724 = vunpack.c.l.b16 %v613
        %v725 = vunpack.c.h.b16 %v613
        %v726 = vunpack.c.l.b16 %v614
        %v727 = vunpack.c.h.b16 %v614
        %v728 = vunpack.c.l.b16 %v615
        %v729 = vunpack.c.h.b16 %v615
        %v730 = vunpack.c.l.b16 %v616
        %v731 = vunpack.c.h.b16 %v616
        %v732 = vunpack.c.l.b16 %v617
        %v733 = vunpack.c.h.b16 %v617
        %v734 = vunpack.c.l.b16 %v618
        %v735 = vunpack.c.h.b16 %v618
        %v736 = vunpack.c.l.b16 %v619
        %v737 = vunpack.c.h.b16 %v619
        %v738 = vunpack.c.l.b16 %v620
        %v739 = vunpack.c.h.b16 %v620
        %v740 = vunpack.c.l.b16 %v621
        %v741 = vunpack.c.h.b16 %v621
        %v742 = vpack.c.b16 %v682, %v678
        %v743 = vpack.c.b16 %v683, %v679
        %v744 = vpack.c.b16 %v684, %v680
        %v745 = vpack.c.b16 %v685, %v681
        %v746 = vpack.c.b16 %v690, %v686
        %v747 = vpack.c.b16 %v691, %v687
        %v748 = vpack.c.b16 %v692, %v688
        %v749 = vpack.c.b16 %v693, %v689
        %v750 = vpack.c.b16 %v698, %v694
        %v751 = vpack.c.b16 %v699, %v695
        %v752 = vpack.c.b16 %v700, %v696
        %v753 = vpack.c.b16 %v701, %v697
        %v754 = vpack.c.b16 %v706, %v702
        %v755 = vpack.c.b16 %v707, %v703
        %v756 = vpack.c.b16 %v708, %v704
        %v757 = vpack.c.b16 %v709, %v705
        %v758 = vpack.c.b16 %v714, %v710
        %v759 = vpack.c.b16 %v715, %v711
        %v760 = vpack.c.b16 %v716, %v712
        %v761 = vpack.c.b16 %v717, %v713
        %v762 = vpack.c.b16 %v722, %v718
        %v763 = vpack.c.b16 %v723, %v719
        %v764 = vpack.c.b16 %v724, %v720
        %v765 = vpack.c.b16 %v725, %v721
        %v766 = vpack.c.b16 %v730, %v726
        %v767 = vpack.c.b16 %v731, %v727
        %v768 = vpack.c.b16 %v732, %v728
        %v769 = vpack.c.b16 %v733, %v729
        %v770 = vpack.c.b16 %v738, %v734
        %v771 = vpack.c.b16 %v739, %v735
        %v772 = vpack.c.b16 %v740, %v736
        %v773 = vpack.c.b16 %v741, %v737
        %806 = vmatprep.subr.bf16.mxu0 %v771
        %807 = vmatpush1.bf16.msra.mxu0 %v770
        %808 = vmatprep.subr.bf16.mxu0 %v767
        %809 = vmatpush1.bf16.msra.mxu0 %v766
        %810 = vmatprep.subr.bf16.mxu0 %v763
        %811 = vmatpush1.bf16.msra.mxu0 %v762
        %812 = vmatprep.subr.bf16.mxu0 %v759
        %813 = vmatpush1.bf16.msra.mxu0 %v758
        %814 = vmatprep.subr.bf16.mxu0 %v755
        %815 = vmatpush1.bf16.msra.mxu0 %v754
        %816 = vmatprep.subr.bf16.mxu0 %v751
        %817 = vmatpush1.bf16.msra.mxu0 %v750
        %818 = vmatprep.subr.bf16.mxu0 %v747
        %819 = vmatpush1.bf16.msra.mxu0 %v746
        %820 = vmatprep.subr.bf16.mxu0 %v743
        %821 = vmatpush1.bf16.msra.mxu0 %v742
        %822 = vmatprep.subr.bf16.mxu0 0
        %823 = vmatpush2.bf16.msra.mxu0 0
        %824 = vmatprep.subr.bf16.mxu0 0
        %825 = vmatpush2.bf16.msra.mxu0 0
        %826 = vmatprep.subr.bf16.mxu0 0
        %827 = vmatpush2.bf16.msra.mxu0 0
        %828 = vmatprep.subr.bf16.mxu0 0
        %829 = vmatpush2.bf16.msra.mxu0 0
        %830 = vmatprep.subr.bf16.mxu0 0
        %831 = vmatpush2.bf16.msra.mxu0 0
        %832 = vmatprep.subr.bf16.mxu0 0
        %833 = vmatpush2.bf16.msra.mxu0 0
        %834 = vmatprep.subr.bf16.mxu0 0
        %835 = vmatpush2.bf16.msra.mxu0 0
        %836 = vmatprep.subr.bf16.mxu0 0
        %837 = vmatpush2.bf16.msra.mxu0 0
        %838 = vmatprep.mubr.bf16.mxu0 0
        %839 = vmatmul.mubr.bf16.gmra.mxu0 %v638
        %v840 = vpop.f32.mrf.mxu0
        %v841 = vadd.f32 0.0, %v840
        %v842 = vpop.f32.mrf.mxu0
        %v843 = vadd.f32 0.0, %v842
        %v844 = vpop.f32.mrf.mxu0
        %v845 = vadd.f32 0.0, %v844
        %v846 = vpop.f32.mrf.mxu0
        %v847 = vadd.f32 0.0, %v846
        %848 = vmatprep.mubr.bf16.mxu0 0
        %849 = vmatmul.mubr.bf16.gmra.mxu0 %v639
        %v850 = vpop.f32.mrf.mxu0
        %v851 = vadd.f32 0.0, %v850
        %v852 = vpop.f32.mrf.mxu0
        %v853 = vadd.f32 0.0, %v852
        %v854 = vpop.f32.mrf.mxu0
        %v855 = vadd.f32 0.0, %v854
        %v856 = vpop.f32.mrf.mxu0
        %v857 = vadd.f32 0.0, %v856
        %858 = vmatprep.mubr.bf16.mxu0 0
        %859 = vmatmul.mubr.bf16.gmra.mxu0 %v640
        %v860 = vpop.f32.mrf.mxu0
        %v861 = vadd.f32 0.0, %v860
        %v862 = vpop.f32.mrf.mxu0
        %v863 = vadd.f32 0.0, %v862
        %v864 = vpop.f32.mrf.mxu0
        %v865 = vadd.f32 0.0, %v864
        %v866 = vpop.f32.mrf.mxu0
        %v867 = vadd.f32 0.0, %v866
        %868 = vmatprep.mubr.bf16.mxu0 0
        %869 = vmatmul.mubr.bf16.gmra.mxu0 %v641
        %v870 = vpop.f32.mrf.mxu0
        %v871 = vadd.f32 0.0, %v870
        %v872 = vpop.f32.mrf.mxu0
        %v873 = vadd.f32 0.0, %v872
        %v874 = vpop.f32.mrf.mxu0
        %v875 = vadd.f32 0.0, %v874
        %v876 = vpop.f32.mrf.mxu0
        %v877 = vadd.f32 0.0, %v876
        %878 = vdwg.mxu0
        %879 = vmatprep.subr.bf16.mxu0 %v773
        %880 = vmatpush1.bf16.msra.mxu0 %v772
        %881 = vmatprep.subr.bf16.mxu0 %v769
        %882 = vmatpush1.bf16.msra.mxu0 %v768
        %883 = vmatprep.subr.bf16.mxu0 %v765
        %884 = vmatpush1.bf16.msra.mxu0 %v764
        %885 = vmatprep.subr.bf16.mxu0 %v761
        %886 = vmatpush1.bf16.msra.mxu0 %v760
        %887 = vmatprep.subr.bf16.mxu0 %v757
        %888 = vmatpush1.bf16.msra.mxu0 %v756
        %889 = vmatprep.subr.bf16.mxu0 %v753
        %890 = vmatpush1.bf16.msra.mxu0 %v752
        %891 = vmatprep.subr.bf16.mxu0 %v749
        %892 = vmatpush1.bf16.msra.mxu0 %v748
        %893 = vmatprep.subr.bf16.mxu0 %v745
        %894 = vmatpush1.bf16.msra.mxu0 %v744
        %895 = vmatprep.subr.bf16.mxu0 0
        %896 = vmatpush2.bf16.msra.mxu0 0
        %897 = vmatprep.subr.bf16.mxu0 0
        %898 = vmatpush2.bf16.msra.mxu0 0
        %899 = vmatprep.subr.bf16.mxu0 0
        %900 = vmatpush2.bf16.msra.mxu0 0
        %901 = vmatprep.subr.bf16.mxu0 0
        %902 = vmatpush2.bf16.msra.mxu0 0
        %903 = vmatprep.subr.bf16.mxu0 0
        %904 = vmatpush2.bf16.msra.mxu0 0
        %905 = vmatprep.subr.bf16.mxu0 0
        %906 = vmatpush2.bf16.msra.mxu0 0
        %907 = vmatprep.subr.bf16.mxu0 0
        %908 = vmatpush2.bf16.msra.mxu0 0
        %909 = vmatprep.subr.bf16.mxu0 0
        %910 = vmatpush2.bf16.msra.mxu0 0
        %911 = vmatprep.mubr.bf16.mxu0 0
        %912 = vmatmul.mubr.bf16.gmra.mxu0 %v638
        %v913 = vpop.f32.mrf.mxu0
        %v914 = vadd.f32 0.0, %v913
        %v915 = vpop.f32.mrf.mxu0
        %v916 = vadd.f32 0.0, %v915
        %v917 = vpop.f32.mrf.mxu0
        %v918 = vadd.f32 0.0, %v917
        %v919 = vpop.f32.mrf.mxu0
        %v920 = vadd.f32 0.0, %v919
        %921 = vmatprep.mubr.bf16.mxu0 0
        %922 = vmatmul.mubr.bf16.gmra.mxu0 %v639
        %v923 = vpop.f32.mrf.mxu0
        %v924 = vadd.f32 0.0, %v923
        %v925 = vpop.f32.mrf.mxu0
        %v926 = vadd.f32 0.0, %v925
        %v927 = vpop.f32.mrf.mxu0
        %v928 = vadd.f32 0.0, %v927
        %v929 = vpop.f32.mrf.mxu0
        %v930 = vadd.f32 0.0, %v929
        %931 = vmatprep.mubr.bf16.mxu0 0
        %932 = vmatmul.mubr.bf16.gmra.mxu0 %v640
        %v933 = vpop.f32.mrf.mxu0
        %v934 = vadd.f32 0.0, %v933
        %v935 = vpop.f32.mrf.mxu0
        %v936 = vadd.f32 0.0, %v935
        %v937 = vpop.f32.mrf.mxu0
        %v938 = vadd.f32 0.0, %v937
        %v939 = vpop.f32.mrf.mxu0
        %v940 = vadd.f32 0.0, %v939
        %941 = vmatprep.mubr.bf16.mxu0 0
        %942 = vmatmul.mubr.bf16.gmra.mxu0 %v641
        %v943 = vpop.f32.mrf.mxu0
        %v944 = vadd.f32 0.0, %v943
        %v945 = vpop.f32.mrf.mxu0
        %v946 = vadd.f32 0.0, %v945
        %v947 = vpop.f32.mrf.mxu0
        %v948 = vadd.f32 0.0, %v947
        %v949 = vpop.f32.mrf.mxu0
        %v950 = vadd.f32 0.0, %v949
        %951 = vdwg.mxu0
        %952 = vst [vmem:[#allocation2] sm:$0xff] %v841
        %953 = vst [vmem:[#allocation2 + $0x8] sm:$0xff] %v843
        %954 = vst [vmem:[#allocation2 + $0x10] sm:$0xff] %v914
        %955 = vst [vmem:[#allocation2 + $0x18] sm:$0xff] %v916
        %956 = vst [vmem:[#allocation2 + $0x20] sm:$0xff] %v845
        %957 = vst [vmem:[#allocation2 + $0x28] sm:$0xff] %v847
        %958 = vst [vmem:[#allocation2 + $0x30] sm:$0xff] %v918
        %959 = vst [vmem:[#allocation2 + $0x38] sm:$0xff] %v920
        %960 = vst [vmem:[#allocation2 + $0x40] sm:$0xff] %v851
        %961 = vst [vmem:[#allocation2 + $0x48] sm:$0xff] %v853
        %962 = vst [vmem:[#allocation2 + $0x50] sm:$0xff] %v924
        %963 = vst [vmem:[#allocation2 + $0x58] sm:$0xff] %v926
        %964 = vst [vmem:[#allocation2 + $0x60] sm:$0xff] %v855
        %965 = vst [vmem:[#allocation2 + $0x68] sm:$0xff] %v857
        %966 = vst [vmem:[#allocation2 + $0x70] sm:$0xff] %v928
        %967 = vst [vmem:[#allocation2 + $0x78] sm:$0xff] %v930
        %968 = vst [vmem:[#allocation2 + $0x80] sm:$0xff] %v861
        %969 = vst [vmem:[#allocation2 + $0x88] sm:$0xff] %v863
        %970 = vst [vmem:[#allocation2 + $0x90] sm:$0xff] %v934
        %971 = vst [vmem:[#allocation2 + $0x98] sm:$0xff] %v936
        %972 = vst [vmem:[#allocation2 + $0xa0] sm:$0xff] %v865
        %973 = vst [vmem:[#allocation2 + $0xa8] sm:$0xff] %v867
        %974 = vst [vmem:[#allocation2 + $0xb0] sm:$0xff] %v938
        %975 = vst [vmem:[#allocation2 + $0xb8] sm:$0xff] %v940
        %976 = vst [vmem:[#allocation2 + $0xc0] sm:$0xff] %v871
        %977 = vst [vmem:[#allocation2 + $0xc8] sm:$0xff] %v873
        %978 = vst [vmem:[#allocation2 + $0xd0] sm:$0xff] %v944
        %979 = vst [vmem:[#allocation2 + $0xd8] sm:$0xff] %v946
        %980 = vst [vmem:[#allocation2 + $0xe0] sm:$0xff] %v875
        %981 = vst [vmem:[#allocation2 + $0xe8] sm:$0xff] %v877
        %982 = vst [vmem:[#allocation2 + $0xf0] sm:$0xff] %v948
        %983 = vst [vmem:[#allocation2 + $0xf8] sm:$0xff] %v950
        %v984 = vld [vmem:[#allocation15] sm:$0xff]
        %v985 = vld [vmem:[#allocation15 + $0x8] sm:$0xff]
        %v986 = vld [vmem:[#allocation15 + $0x10] sm:$0xff]
        %v987 = vld [vmem:[#allocation15 + $0x18] sm:$0xff]
        %v988 = vld [vmem:[#allocation15 + $0x20] sm:$0xff]
        %v989 = vld [vmem:[#allocation15 + $0x28] sm:$0xff]
        %v990 = vld [vmem:[#allocation15 + $0x30] sm:$0xff]
        %v991 = vld [vmem:[#allocation15 + $0x38] sm:$0xff]
        %v992 = vld [vmem:[#allocation15 + $0x40] sm:$0xff]
        %v993 = vld [vmem:[#allocation15 + $0x48] sm:$0xff]
        %v994 = vld [vmem:[#allocation15 + $0x50] sm:$0xff]
        %v995 = vld [vmem:[#allocation15 + $0x58] sm:$0xff]
        %v996 = vld [vmem:[#allocation15 + $0x60] sm:$0xff]
        %v997 = vld [vmem:[#allocation15 + $0x68] sm:$0xff]
        %v998 = vld [vmem:[#allocation15 + $0x70] sm:$0xff]
        %v999 = vld [vmem:[#allocation15 + $0x78] sm:$0xff]
        %v1000 = vld [vmem:[#allocation15 + $0x80] sm:$0xff]
        %v1001 = vld [vmem:[#allocation15 + $0x88] sm:$0xff]
        %v1002 = vld [vmem:[#allocation15 + $0x90] sm:$0xff]
        %v1003 = vld [vmem:[#allocation15 + $0x98] sm:$0xff]
        %v1004 = vld [vmem:[#allocation15 + $0xa0] sm:$0xff]
        %v1005 = vld [vmem:[#allocation15 + $0xa8] sm:$0xff]
        %v1006 = vld [vmem:[#allocation15 + $0xb0] sm:$0xff]
        %v1007 = vld [vmem:[#allocation15 + $0xb8] sm:$0xff]
        %v1008 = vld [vmem:[#allocation15 + $0xc0] sm:$0xff]
        %v1009 = vld [vmem:[#allocation15 + $0xc8] sm:$0xff]
        %v1010 = vld [vmem:[#allocation15 + $0xd0] sm:$0xff]
        %v1011 = vld [vmem:[#allocation15 + $0xd8] sm:$0xff]
        %v1012 = vld [vmem:[#allocation15 + $0xe0] sm:$0xff]
        %v1013 = vld [vmem:[#allocation15 + $0xe8] sm:$0xff]
        %v1014 = vld [vmem:[#allocation15 + $0xf0] sm:$0xff]
        %v1015 = vld [vmem:[#allocation15 + $0xf8] sm:$0xff]
        %v1016 = vld [vmem:[%s554] sm:$0xff]
        %v1017 = vld [vmem:[#allocation4] sm:$0xff]
        %v1018 = vld [vmem:[#allocation5] sm:$0xff]
        %v1019 = vld [vmem:[#allocation2] sm:$0xff]
        %v1020 = vld [vmem:[#allocation2 + $0x8] sm:$0xff]
        %v1021 = vld [vmem:[#allocation2 + $0x10] sm:$0xff]
        %v1022 = vld [vmem:[#allocation2 + $0x18] sm:$0xff]
        %v1023 = vpack.c.bf16 %v1017, %v1017
        %v1056 = vunpack.c.l.b16 %v984
        %v1057 = vunpack.c.h.b16 %v984
        %v1058 = vunpack.c.l.b16 %v985
        %v1059 = vunpack.c.h.b16 %v985
        %v1060 = vunpack.c.l.b16 %v986
        %v1061 = vunpack.c.h.b16 %v986
        %v1062 = vunpack.c.l.b16 %v987
        %v1063 = vunpack.c.h.b16 %v987
        %v1064 = vunpack.c.l.b16 %v988
        %v1065 = vunpack.c.h.b16 %v988
        %v1066 = vunpack.c.l.b16 %v989
        %v1067 = vunpack.c.h.b16 %v989
        %v1068 = vunpack.c.l.b16 %v990
        %v1069 = vunpack.c.h.b16 %v990
        %v1070 = vunpack.c.l.b16 %v991
        %v1071 = vunpack.c.h.b16 %v991
        %v1072 = vunpack.c.l.b16 %v992
        %v1073 = vunpack.c.h.b16 %v992
        %v1074 = vunpack.c.l.b16 %v993
        %v1075 = vunpack.c.h.b16 %v993
        %v1076 = vunpack.c.l.b16 %v994
        %v1077 = vunpack.c.h.b16 %v994
        %v1078 = vunpack.c.l.b16 %v995
        %v1079 = vunpack.c.h.b16 %v995
        %v1080 = vunpack.c.l.b16 %v996
        %v1081 = vunpack.c.h.b16 %v996
        %v1082 = vunpack.c.l.b16 %v997
        %v1083 = vunpack.c.h.b16 %v997
        %v1084 = vunpack.c.l.b16 %v998
        %v1085 = vunpack.c.h.b16 %v998
        %v1086 = vunpack.c.l.b16 %v999
        %v1087 = vunpack.c.h.b16 %v999
        %v1088 = vunpack.c.l.b16 %v1000
        %v1089 = vunpack.c.h.b16 %v1000
        %v1090 = vunpack.c.l.b16 %v1001
        %v1091 = vunpack.c.h.b16 %v1001
        %v1092 = vunpack.c.l.b16 %v1002
        %v1093 = vunpack.c.h.b16 %v1002
        %v1094 = vunpack.c.l.b16 %v1003
        %v1095 = vunpack.c.h.b16 %v1003
        %v1096 = vunpack.c.l.b16 %v1004
        %v1097 = vunpack.c.h.b16 %v1004
        %v1098 = vunpack.c.l.b16 %v1005
        %v1099 = vunpack.c.h.b16 %v1005
        %v1100 = vunpack.c.l.b16 %v1006
        %v1101 = vunpack.c.h.b16 %v1006
        %v1102 = vunpack.c.l.b16 %v1007
        %v1103 = vunpack.c.h.b16 %v1007
        %v1104 = vunpack.c.l.b16 %v1008
        %v1105 = vunpack.c.h.b16 %v1008
        %v1106 = vunpack.c.l.b16 %v1009
        %v1107 = vunpack.c.h.b16 %v1009
        %v1108 = vunpack.c.l.b16 %v1010
        %v1109 = vunpack.c.h.b16 %v1010
        %v1110 = vunpack.c.l.b16 %v1011
        %v1111 = vunpack.c.h.b16 %v1011
        %v1112 = vunpack.c.l.b16 %v1012
        %v1113 = vunpack.c.h.b16 %v1012
        %v1114 = vunpack.c.l.b16 %v1013
        %v1115 = vunpack.c.h.b16 %v1013
        %v1116 = vunpack.c.l.b16 %v1014
        %v1117 = vunpack.c.h.b16 %v1014
        %v1118 = vunpack.c.l.b16 %v1015
        %v1119 = vunpack.c.h.b16 %v1015
        %v1120 = vpack.c.b16 %v1060, %v1056
        %v1121 = vpack.c.b16 %v1061, %v1057
        %v1122 = vpack.c.b16 %v1062, %v1058
        %v1123 = vpack.c.b16 %v1063, %v1059
        %v1124 = vpack.c.b16 %v1068, %v1064
        %v1125 = vpack.c.b16 %v1069, %v1065
        %v1126 = vpack.c.b16 %v1070, %v1066
        %v1127 = vpack.c.b16 %v1071, %v1067
        %v1128 = vpack.c.b16 %v1076, %v1072
        %v1129 = vpack.c.b16 %v1077, %v1073
        %v1130 = vpack.c.b16 %v1078, %v1074
        %v1131 = vpack.c.b16 %v1079, %v1075
        %v1132 = vpack.c.b16 %v1084, %v1080
        %v1133 = vpack.c.b16 %v1085, %v1081
        %v1134 = vpack.c.b16 %v1086, %v1082
        %v1135 = vpack.c.b16 %v1087, %v1083
        %v1136 = vpack.c.b16 %v1092, %v1088
        %v1137 = vpack.c.b16 %v1093, %v1089
        %v1138 = vpack.c.b16 %v1094, %v1090
        %v1139 = vpack.c.b16 %v1095, %v1091
        %v1140 = vpack.c.b16 %v1100, %v1096
        %v1141 = vpack.c.b16 %v1101, %v1097
        %v1142 = vpack.c.b16 %v1102, %v1098
        %v1143 = vpack.c.b16 %v1103, %v1099
        %v1144 = vpack.c.b16 %v1108, %v1104
        %v1145 = vpack.c.b16 %v1109, %v1105
        %v1146 = vpack.c.b16 %v1110, %v1106
        %v1147 = vpack.c.b16 %v1111, %v1107
        %v1148 = vpack.c.b16 %v1116, %v1112
        %v1149 = vpack.c.b16 %v1117, %v1113
        %v1150 = vpack.c.b16 %v1118, %v1114
        %v1151 = vpack.c.b16 %v1119, %v1115
        %1184 = vmatprep.subr.bf16.mxu0 %v1149
        %1185 = vmatpush1.bf16.msra.mxu0 %v1148
        %1186 = vmatprep.subr.bf16.mxu0 %v1145
        %1187 = vmatpush1.bf16.msra.mxu0 %v1144
        %1188 = vmatprep.subr.bf16.mxu0 %v1141
        %1189 = vmatpush1.bf16.msra.mxu0 %v1140
        %1190 = vmatprep.subr.bf16.mxu0 %v1137
        %1191 = vmatpush1.bf16.msra.mxu0 %v1136
        %1192 = vmatprep.subr.bf16.mxu0 %v1133
        %1193 = vmatpush1.bf16.msra.mxu0 %v1132
        %1194 = vmatprep.subr.bf16.mxu0 %v1129
        %1195 = vmatpush1.bf16.msra.mxu0 %v1128
        %1196 = vmatprep.subr.bf16.mxu0 %v1125
        %1197 = vmatpush1.bf16.msra.mxu0 %v1124
        %1198 = vmatprep.subr.bf16.mxu0 %v1121
        %1199 = vmatpush1.bf16.msra.mxu0 %v1120
        %1200 = vmatprep.subr.bf16.mxu0 0
        %1201 = vmatpush2.bf16.msra.mxu0 0
        %1202 = vmatprep.subr.bf16.mxu0 0
        %1203 = vmatpush2.bf16.msra.mxu0 0
        %1204 = vmatprep.subr.bf16.mxu0 0
        %1205 = vmatpush2.bf16.msra.mxu0 0
        %1206 = vmatprep.subr.bf16.mxu0 0
        %1207 = vmatpush2.bf16.msra.mxu0 0
        %1208 = vmatprep.subr.bf16.mxu0 0
        %1209 = vmatpush2.bf16.msra.mxu0 0
        %1210 = vmatprep.subr.bf16.mxu0 0
        %1211 = vmatpush2.bf16.msra.mxu0 0
        %1212 = vmatprep.subr.bf16.mxu0 0
        %1213 = vmatpush2.bf16.msra.mxu0 0
        %1214 = vmatprep.subr.bf16.mxu0 0
        %1215 = vmatpush2.bf16.msra.mxu0 0
        %1216 = vmatprep.mubr.bf16.mxu0 0
        %1217 = vmatmul.mubr.bf16.gmra.mxu0 %v1023
        %v1218 = vpop.f32.mrf.mxu0
        %v1219 = vadd.f32 0.0, %v1218
        %v1220 = vpop.f32.mrf.mxu0
        %v1221 = vadd.f32 0.0, %v1220
        %v1222 = vpop.f32.mrf.mxu0
        %v1223 = vpop.f32.mrf.mxu0
        %1224 = vdwg.mxu0
        %1225 = vmatprep.subr.bf16.mxu0 %v1151
        %1226 = vmatpush1.bf16.msra.mxu0 %v1150
        %1227 = vmatprep.subr.bf16.mxu0 %v1147
        %1228 = vmatpush1.bf16.msra.mxu0 %v1146
        %1229 = vmatprep.subr.bf16.mxu0 %v1143
        %1230 = vmatpush1.bf16.msra.mxu0 %v1142
        %1231 = vmatprep.subr.bf16.mxu0 %v1139
        %1232 = vmatpush1.bf16.msra.mxu0 %v1138
        %1233 = vmatprep.subr.bf16.mxu0 %v1135
        %1234 = vmatpush1.bf16.msra.mxu0 %v1134
        %1235 = vmatprep.subr.bf16.mxu0 %v1131
        %1236 = vmatpush1.bf16.msra.mxu0 %v1130
        %1237 = vmatprep.subr.bf16.mxu0 %v1127
        %1238 = vmatpush1.bf16.msra.mxu0 %v1126
        %1239 = vmatprep.subr.bf16.mxu0 %v1123
        %1240 = vmatpush1.bf16.msra.mxu0 %v1122
        %1241 = vmatprep.subr.bf16.mxu0 0
        %1242 = vmatpush2.bf16.msra.mxu0 0
        %1243 = vmatprep.subr.bf16.mxu0 0
        %1244 = vmatpush2.bf16.msra.mxu0 0
        %1245 = vmatprep.subr.bf16.mxu0 0
        %1246 = vmatpush2.bf16.msra.mxu0 0
        %1247 = vmatprep.subr.bf16.mxu0 0
        %1248 = vmatpush2.bf16.msra.mxu0 0
        %1249 = vmatprep.subr.bf16.mxu0 0
        %1250 = vmatpush2.bf16.msra.mxu0 0
        %1251 = vmatprep.subr.bf16.mxu0 0
        %1252 = vmatpush2.bf16.msra.mxu0 0
        %1253 = vmatprep.subr.bf16.mxu0 0
        %1254 = vmatpush2.bf16.msra.mxu0 0
        %1255 = vmatprep.subr.bf16.mxu0 0
        %1256 = vmatpush2.bf16.msra.mxu0 0
        %1257 = vmatprep.mubr.bf16.mxu0 0
        %1258 = vmatmul.mubr.bf16.gmra.mxu0 %v1023
        %v1259 = vpop.f32.mrf.mxu0
        %v1260 = vadd.f32 0.0, %v1259
        %v1261 = vpop.f32.mrf.mxu0
        %v1262 = vadd.f32 0.0, %v1261
        %v1263 = vpop.f32.mrf.mxu0
        %v1264 = vpop.f32.mrf.mxu0
        %1265 = vdwg.mxu0
        %v1266 = vadd.f32 %v1019, %v1219
        %v1267 = vadd.f32 %v1020, %v1221
        %v1268 = vadd.f32 %v1021, %v1260
        %v1269 = vadd.f32 %v1022, %v1262
        %v1270 = vmul.f32 %v1266, 0.5
        %v1271 = vtanh.pop %v1270
        %v1272 = vmul.f32 %v1271, 0.5
        %v1273 = vadd.f32 %v1272, 0.5
        %v1274 = vmul.f32 %v1267, 0.5
        %v1275 = vtanh.pop %v1274
        %v1276 = vmul.f32 %v1275, 0.5
        %v1277 = vadd.f32 %v1276, 0.5
        %v1278 = vtanh.pop %v1268
        %v1279 = vmul.f32 %v1269, 0.5
        %v1280 = vtanh.pop %v1279
        %v1281 = vmul.f32 %v1280, 0.5
        %v1282 = vadd.f32 %v1281, 0.5
        %v1283 = vmul.f32 %v1277, %v1018
        %v1284 = vmul.f32 %v1273, %v1278
        %v1285 = vadd.f32 %v1283, %v1284
        %v1286 = vtanh.pop %v1285
        %v1287 = vmul.f32 %v1282, %v1286
        %s1288 = smul.u32 %s38, 8
        %v1289 = vstv %s1288
        %vm1290 = vcmp.lt.s32.totalorder %v1289, %v1016
        %v1291 = vsel %vm1290, 1, 0
        %1292 = vset.pattern.permute.xlu0 0
        %1293 = vperm.xlu0 %1292, %v1291
        %v1294 = vpop.permute.xlu0 %1293
        %vm1295 = vcmp.eq.s32.totalorder %v1294, 1
        %v1296 = vsel %vm1295, %v1287, %v1017
        %v1297 = vsel %vm1295, %v1285, %v1018
        %v1298 = vsel %vm1295, %v1287, 0.0
        %1299 = vst [vmem:[#allocation3] sm:$0xff] %v1298
        %v1300 = vld [vmem:[#allocation2 + $0x20] sm:$0xff]
        %v1301 = vld [vmem:[#allocation2 + $0x28] sm:$0xff]
        %v1302 = vld [vmem:[#allocation2 + $0x30] sm:$0xff]
        %v1303 = vld [vmem:[#allocation2 + $0x38] sm:$0xff]
        %v1304 = vpack.c.bf16 %v1296, %v1296
        %1305 = vmatprep.subr.bf16.mxu0 %v1149
        %1306 = vmatpush1.bf16.msra.mxu0 %v1148
        %1307 = vmatprep.subr.bf16.mxu0 %v1145
        %1308 = vmatpush1.bf16.msra.mxu0 %v1144
        %1309 = vmatprep.subr.bf16.mxu0 %v1141
        %1310 = vmatpush1.bf16.msra.mxu0 %v1140
        %1311 = vmatprep.subr.bf16.mxu0 %v1137
        %1312 = vmatpush1.bf16.msra.mxu0 %v1136
        %1313 = vmatprep.subr.bf16.mxu0 %v1133
        %1314 = vmatpush1.bf16.msra.mxu0 %v1132
        %1315 = vmatprep.subr.bf16.mxu0 %v1129
        %1316 = vmatpush1.bf16.msra.mxu0 %v1128
        %1317 = vmatprep.subr.bf16.mxu0 %v1125
        %1318 = vmatpush1.bf16.msra.mxu0 %v1124
        %1319 = vmatprep.subr.bf16.mxu0 %v1121
        %1320 = vmatpush1.bf16.msra.mxu0 %v1120
        %1321 = vmatprep.subr.bf16.mxu0 0
        %1322 = vmatpush2.bf16.msra.mxu0 0
        %1323 = vmatprep.subr.bf16.mxu0 0
        %1324 = vmatpush2.bf16.msra.mxu0 0
        %1325 = vmatprep.subr.bf16.mxu0 0
        %1326 = vmatpush2.bf16.msra.mxu0 0
        %1327 = vmatprep.subr.bf16.mxu0 0
        %1328 = vmatpush2.bf16.msra.mxu0 0
        %1329 = vmatprep.subr.bf16.mxu0 0
        %1330 = vmatpush2.bf16.msra.mxu0 0
        %1331 = vmatprep.subr.bf16.mxu0 0
        %1332 = vmatpush2.bf16.msra.mxu0 0
        %1333 = vmatprep.subr.bf16.mxu0 0
        %1334 = vmatpush2.bf16.msra.mxu0 0
        %1335 = vmatprep.subr.bf16.mxu0 0
        %1336 = vmatpush2.bf16.msra.mxu0 0
        %1337 = vmatprep.mubr.bf16.mxu0 0
        %1338 = vmatmul.mubr.bf16.gmra.mxu0 %v1304
        %v1339 = vpop.f32.mrf.mxu0
        %v1340 = vadd.f32 0.0, %v1339
        %v1341 = vpop.f32.mrf.mxu0
        %v1342 = vadd.f32 0.0, %v1341
        %v1343 = vpop.f32.mrf.mxu0
        %v1344 = vpop.f32.mrf.mxu0
        %1345 = vdwg.mxu0
        %1346 = vmatprep.subr.bf16.mxu0 %v1151
        %1347 = vmatpush1.bf16.msra.mxu0 %v1150
        %1348 = vmatprep.subr.bf16.mxu0 %v1147
        %1349 = vmatpush1.bf16.msra.mxu0 %v1146
        %1350 = vmatprep.subr.bf16.mxu0 %v1143
        %1351 = vmatpush1.bf16.msra.mxu0 %v1142
        %1352 = vmatprep.subr.bf16.mxu0 %v1139
        %1353 = vmatpush1.bf16.msra.mxu0 %v1138
        %1354 = vmatprep.subr.bf16.mxu0 %v1135
        %1355 = vmatpush1.bf16.msra.mxu0 %v1134
        %1356 = vmatprep.subr.bf16.mxu0 %v1131
        %1357 = vmatpush1.bf16.msra.mxu0 %v1130
        %1358 = vmatprep.subr.bf16.mxu0 %v1127
        %1359 = vmatpush1.bf16.msra.mxu0 %v1126
        %1360 = vmatprep.subr.bf16.mxu0 %v1123
        %1361 = vmatpush1.bf16.msra.mxu0 %v1122
        %1362 = vmatprep.subr.bf16.mxu0 0
        %1363 = vmatpush2.bf16.msra.mxu0 0
        %1364 = vmatprep.subr.bf16.mxu0 0
        %1365 = vmatpush2.bf16.msra.mxu0 0
        %1366 = vmatprep.subr.bf16.mxu0 0
        %1367 = vmatpush2.bf16.msra.mxu0 0
        %1368 = vmatprep.subr.bf16.mxu0 0
        %1369 = vmatpush2.bf16.msra.mxu0 0
        %1370 = vmatprep.subr.bf16.mxu0 0
        %1371 = vmatpush2.bf16.msra.mxu0 0
        %1372 = vmatprep.subr.bf16.mxu0 0
        %1373 = vmatpush2.bf16.msra.mxu0 0
        %1374 = vmatprep.subr.bf16.mxu0 0
        %1375 = vmatpush2.bf16.msra.mxu0 0
        %1376 = vmatprep.subr.bf16.mxu0 0
        %1377 = vmatpush2.bf16.msra.mxu0 0
        %1378 = vmatprep.mubr.bf16.mxu0 0
        %1379 = vmatmul.mubr.bf16.gmra.mxu0 %v1304
        %v1380 = vpop.f32.mrf.mxu0
        %v1381 = vadd.f32 0.0, %v1380
        %v1382 = vpop.f32.mrf.mxu0
        %v1383 = vadd.f32 0.0, %v1382
        %v1384 = vpop.f32.mrf.mxu0
        %v1385 = vpop.f32.mrf.mxu0
        %1386 = vdwg.mxu0
        %v1387 = vadd.f32 %v1300, %v1340
        %v1388 = vadd.f32 %v1301, %v1342
        %v1389 = vadd.f32 %v1302, %v1381
        %v1390 = vadd.f32 %v1303, %v1383
        %v1391 = vmul.f32 %v1387, 0.5
        %v1392 = vtanh.pop %v1391
        %v1393 = vmul.f32 %v1392, 0.5
        %v1394 = vadd.f32 %v1393, 0.5
        %v1395 = vmul.f32 %v1388, 0.5
        %v1396 = vtanh.pop %v1395
        %v1397 = vmul.f32 %v1396, 0.5
        %v1398 = vadd.f32 %v1397, 0.5
        %v1399 = vtanh.pop %v1389
        %v1400 = vmul.f32 %v1390, 0.5
        %v1401 = vtanh.pop %v1400
        %v1402 = vmul.f32 %v1401, 0.5
        %v1403 = vadd.f32 %v1402, 0.5
        %v1404 = vmul.f32 %v1398, %v1297
        %v1405 = vmul.f32 %v1394, %v1399
        %v1406 = vadd.f32 %v1404, %v1405
        %v1407 = vtanh.pop %v1406
        %v1408 = vmul.f32 %v1403, %v1407
        %s1409 = sadd.s32 %s1288, 1
        %v1410 = vstv %s1409
        %vm1411 = vcmp.lt.s32.totalorder %v1410, %v1016
        %v1412 = vsel %vm1411, 1, 0
        %1413 = vset.pattern.permute.xlu0 0
        %1414 = vperm.xlu0 %1413, %v1412
        %v1415 = vpop.permute.xlu0 %1414
        %vm1416 = vcmp.eq.s32.totalorder %v1415, 1
        %v1417 = vsel %vm1416, %v1408, %v1296
        %v1418 = vsel %vm1416, %v1406, %v1297
        %v1419 = vsel %vm1416, %v1408, 0.0
        %1420 = vst [vmem:[#allocation3 + $0x8] sm:$0xff] %v1419
        %v1421 = vld [vmem:[#allocation2 + $0x40] sm:$0xff]
        %v1422 = vld [vmem:[#allocation2 + $0x48] sm:$0xff]
        %v1423 = vld [vmem:[#allocation2 + $0x50] sm:$0xff]
        %v1424 = vld [vmem:[#allocation2 + $0x58] sm:$0xff]
        %v1425 = vpack.c.bf16 %v1417, %v1417
        %1426 = vmatprep.subr.bf16.mxu0 %v1149
        %1427 = vmatpush1.bf16.msra.mxu0 %v1148
        %1428 = vmatprep.subr.bf16.mxu0 %v1145
        %1429 = vmatpush1.bf16.msra.mxu0 %v1144
        %1430 = vmatprep.subr.bf16.mxu0 %v1141
        %1431 = vmatpush1.bf16.msra.mxu0 %v1140
        %1432 = vmatprep.subr.bf16.mxu0 %v1137
        %1433 = vmatpush1.bf16.msra.mxu0 %v1136
        %1434 = vmatprep.subr.bf16.mxu0 %v1133
        %1435 = vmatpush1.bf16.msra.mxu0 %v1132
        %1436 = vmatprep.subr.bf16.mxu0 %v1129
        %1437 = vmatpush1.bf16.msra.mxu0 %v1128
        %1438 = vmatprep.subr.bf16.mxu0 %v1125
        %1439 = vmatpush1.bf16.msra.mxu0 %v1124
        %1440 = vmatprep.subr.bf16.mxu0 %v1121
        %1441 = vmatpush1.bf16.msra.mxu0 %v1120
        %1442 = vmatprep.subr.bf16.mxu0 0
        %1443 = vmatpush2.bf16.msra.mxu0 0
        %1444 = vmatprep.subr.bf16.mxu0 0
        %1445 = vmatpush2.bf16.msra.mxu0 0
        %1446 = vmatprep.subr.bf16.mxu0 0
        %1447 = vmatpush2.bf16.msra.mxu0 0
        %1448 = vmatprep.subr.bf16.mxu0 0
        %1449 = vmatpush2.bf16.msra.mxu0 0
        %1450 = vmatprep.subr.bf16.mxu0 0
        %1451 = vmatpush2.bf16.msra.mxu0 0
        %1452 = vmatprep.subr.bf16.mxu0 0
        %1453 = vmatpush2.bf16.msra.mxu0 0
        %1454 = vmatprep.subr.bf16.mxu0 0
        %1455 = vmatpush2.bf16.msra.mxu0 0
        %1456 = vmatprep.subr.bf16.mxu0 0
        %1457 = vmatpush2.bf16.msra.mxu0 0
        %1458 = vmatprep.mubr.bf16.mxu0 0
        %1459 = vmatmul.mubr.bf16.gmra.mxu0 %v1425
        %v1460 = vpop.f32.mrf.mxu0
        %v1461 = vadd.f32 0.0, %v1460
        %v1462 = vpop.f32.mrf.mxu0
        %v1463 = vadd.f32 0.0, %v1462
        %v1464 = vpop.f32.mrf.mxu0
        %v1465 = vpop.f32.mrf.mxu0
        %1466 = vdwg.mxu0
        %1467 = vmatprep.subr.bf16.mxu0 %v1151
        %1468 = vmatpush1.bf16.msra.mxu0 %v1150
        %1469 = vmatprep.subr.bf16.mxu0 %v1147
        %1470 = vmatpush1.bf16.msra.mxu0 %v1146
        %1471 = vmatprep.subr.bf16.mxu0 %v1143
        %1472 = vmatpush1.bf16.msra.mxu0 %v1142
        %1473 = vmatprep.subr.bf16.mxu0 %v1139
        %1474 = vmatpush1.bf16.msra.mxu0 %v1138
        %1475 = vmatprep.subr.bf16.mxu0 %v1135
        %1476 = vmatpush1.bf16.msra.mxu0 %v1134
        %1477 = vmatprep.subr.bf16.mxu0 %v1131
        %1478 = vmatpush1.bf16.msra.mxu0 %v1130
        %1479 = vmatprep.subr.bf16.mxu0 %v1127
        %1480 = vmatpush1.bf16.msra.mxu0 %v1126
        %1481 = vmatprep.subr.bf16.mxu0 %v1123
        %1482 = vmatpush1.bf16.msra.mxu0 %v1122
        %1483 = vmatprep.subr.bf16.mxu0 0
        %1484 = vmatpush2.bf16.msra.mxu0 0
        %1485 = vmatprep.subr.bf16.mxu0 0
        %1486 = vmatpush2.bf16.msra.mxu0 0
        %1487 = vmatprep.subr.bf16.mxu0 0
        %1488 = vmatpush2.bf16.msra.mxu0 0
        %1489 = vmatprep.subr.bf16.mxu0 0
        %1490 = vmatpush2.bf16.msra.mxu0 0
        %1491 = vmatprep.subr.bf16.mxu0 0
        %1492 = vmatpush2.bf16.msra.mxu0 0
        %1493 = vmatprep.subr.bf16.mxu0 0
        %1494 = vmatpush2.bf16.msra.mxu0 0
        %1495 = vmatprep.subr.bf16.mxu0 0
        %1496 = vmatpush2.bf16.msra.mxu0 0
        %1497 = vmatprep.subr.bf16.mxu0 0
        %1498 = vmatpush2.bf16.msra.mxu0 0
        %1499 = vmatprep.mubr.bf16.mxu0 0
        %1500 = vmatmul.mubr.bf16.gmra.mxu0 %v1425
        %v1501 = vpop.f32.mrf.mxu0
        %v1502 = vadd.f32 0.0, %v1501
        %v1503 = vpop.f32.mrf.mxu0
        %v1504 = vadd.f32 0.0, %v1503
        %v1505 = vpop.f32.mrf.mxu0
        %v1506 = vpop.f32.mrf.mxu0
        %1507 = vdwg.mxu0
        %v1508 = vadd.f32 %v1421, %v1461
        %v1509 = vadd.f32 %v1422, %v1463
        %v1510 = vadd.f32 %v1423, %v1502
        %v1511 = vadd.f32 %v1424, %v1504
        %v1512 = vmul.f32 %v1508, 0.5
        %v1513 = vtanh.pop %v1512
        %v1514 = vmul.f32 %v1513, 0.5
        %v1515 = vadd.f32 %v1514, 0.5
        %v1516 = vmul.f32 %v1509, 0.5
        %v1517 = vtanh.pop %v1516
        %v1518 = vmul.f32 %v1517, 0.5
        %v1519 = vadd.f32 %v1518, 0.5
        %v1520 = vtanh.pop %v1510
        %v1521 = vmul.f32 %v1511, 0.5
        %v1522 = vtanh.pop %v1521
        %v1523 = vmul.f32 %v1522, 0.5
        %v1524 = vadd.f32 %v1523, 0.5
        %v1525 = vmul.f32 %v1519, %v1418
        %v1526 = vmul.f32 %v1515, %v1520
        %v1527 = vadd.f32 %v1525, %v1526
        %v1528 = vtanh.pop %v1527
        %v1529 = vmul.f32 %v1524, %v1528
        %s1530 = sadd.s32 %s1288, 2
        %v1531 = vstv %s1530
        %vm1532 = vcmp.lt.s32.totalorder %v1531, %v1016
        %v1533 = vsel %vm1532, 1, 0
        %1534 = vset.pattern.permute.xlu0 0
        %1535 = vperm.xlu0 %1534, %v1533
        %v1536 = vpop.permute.xlu0 %1535
        %vm1537 = vcmp.eq.s32.totalorder %v1536, 1
        %v1538 = vsel %vm1537, %v1529, %v1417
        %v1539 = vsel %vm1537, %v1527, %v1418
        %v1540 = vsel %vm1537, %v1529, 0.0
        %1541 = vst [vmem:[#allocation3 + $0x10] sm:$0xff] %v1540
        %v1542 = vld [vmem:[#allocation2 + $0x60] sm:$0xff]
        %v1543 = vld [vmem:[#allocation2 + $0x68] sm:$0xff]
        %v1544 = vld [vmem:[#allocation2 + $0x70] sm:$0xff]
        %v1545 = vld [vmem:[#allocation2 + $0x78] sm:$0xff]
        %v1546 = vpack.c.bf16 %v1538, %v1538
        %1547 = vmatprep.subr.bf16.mxu0 %v1149
        %1548 = vmatpush1.bf16.msra.mxu0 %v1148
        %1549 = vmatprep.subr.bf16.mxu0 %v1145
        %1550 = vmatpush1.bf16.msra.mxu0 %v1144
        %1551 = vmatprep.subr.bf16.mxu0 %v1141
        %1552 = vmatpush1.bf16.msra.mxu0 %v1140
        %1553 = vmatprep.subr.bf16.mxu0 %v1137
        %1554 = vmatpush1.bf16.msra.mxu0 %v1136
        %1555 = vmatprep.subr.bf16.mxu0 %v1133
        %1556 = vmatpush1.bf16.msra.mxu0 %v1132
        %1557 = vmatprep.subr.bf16.mxu0 %v1129
        %1558 = vmatpush1.bf16.msra.mxu0 %v1128
        %1559 = vmatprep.subr.bf16.mxu0 %v1125
        %1560 = vmatpush1.bf16.msra.mxu0 %v1124
        %1561 = vmatprep.subr.bf16.mxu0 %v1121
        %1562 = vmatpush1.bf16.msra.mxu0 %v1120
        %1563 = vmatprep.subr.bf16.mxu0 0
        %1564 = vmatpush2.bf16.msra.mxu0 0
        %1565 = vmatprep.subr.bf16.mxu0 0
        %1566 = vmatpush2.bf16.msra.mxu0 0
        %1567 = vmatprep.subr.bf16.mxu0 0
        %1568 = vmatpush2.bf16.msra.mxu0 0
        %1569 = vmatprep.subr.bf16.mxu0 0
        %1570 = vmatpush2.bf16.msra.mxu0 0
        %1571 = vmatprep.subr.bf16.mxu0 0
        %1572 = vmatpush2.bf16.msra.mxu0 0
        %1573 = vmatprep.subr.bf16.mxu0 0
        %1574 = vmatpush2.bf16.msra.mxu0 0
        %1575 = vmatprep.subr.bf16.mxu0 0
        %1576 = vmatpush2.bf16.msra.mxu0 0
        %1577 = vmatprep.subr.bf16.mxu0 0
        %1578 = vmatpush2.bf16.msra.mxu0 0
        %1579 = vmatprep.mubr.bf16.mxu0 0
        %1580 = vmatmul.mubr.bf16.gmra.mxu0 %v1546
        %v1581 = vpop.f32.mrf.mxu0
        %v1582 = vadd.f32 0.0, %v1581
        %v1583 = vpop.f32.mrf.mxu0
        %v1584 = vadd.f32 0.0, %v1583
        %v1585 = vpop.f32.mrf.mxu0
        %v1586 = vpop.f32.mrf.mxu0
        %1587 = vdwg.mxu0
        %1588 = vmatprep.subr.bf16.mxu0 %v1151
        %1589 = vmatpush1.bf16.msra.mxu0 %v1150
        %1590 = vmatprep.subr.bf16.mxu0 %v1147
        %1591 = vmatpush1.bf16.msra.mxu0 %v1146
        %1592 = vmatprep.subr.bf16.mxu0 %v1143
        %1593 = vmatpush1.bf16.msra.mxu0 %v1142
        %1594 = vmatprep.subr.bf16.mxu0 %v1139
        %1595 = vmatpush1.bf16.msra.mxu0 %v1138
        %1596 = vmatprep.subr.bf16.mxu0 %v1135
        %1597 = vmatpush1.bf16.msra.mxu0 %v1134
        %1598 = vmatprep.subr.bf16.mxu0 %v1131
        %1599 = vmatpush1.bf16.msra.mxu0 %v1130
        %1600 = vmatprep.subr.bf16.mxu0 %v1127
        %1601 = vmatpush1.bf16.msra.mxu0 %v1126
        %1602 = vmatprep.subr.bf16.mxu0 %v1123
        %1603 = vmatpush1.bf16.msra.mxu0 %v1122
        %1604 = vmatprep.subr.bf16.mxu0 0
        %1605 = vmatpush2.bf16.msra.mxu0 0
        %1606 = vmatprep.subr.bf16.mxu0 0
        %1607 = vmatpush2.bf16.msra.mxu0 0
        %1608 = vmatprep.subr.bf16.mxu0 0
        %1609 = vmatpush2.bf16.msra.mxu0 0
        %1610 = vmatprep.subr.bf16.mxu0 0
        %1611 = vmatpush2.bf16.msra.mxu0 0
        %1612 = vmatprep.subr.bf16.mxu0 0
        %1613 = vmatpush2.bf16.msra.mxu0 0
        %1614 = vmatprep.subr.bf16.mxu0 0
        %1615 = vmatpush2.bf16.msra.mxu0 0
        %1616 = vmatprep.subr.bf16.mxu0 0
        %1617 = vmatpush2.bf16.msra.mxu0 0
        %1618 = vmatprep.subr.bf16.mxu0 0
        %1619 = vmatpush2.bf16.msra.mxu0 0
        %1620 = vmatprep.mubr.bf16.mxu0 0
        %1621 = vmatmul.mubr.bf16.gmra.mxu0 %v1546
        %v1622 = vpop.f32.mrf.mxu0
        %v1623 = vadd.f32 0.0, %v1622
        %v1624 = vpop.f32.mrf.mxu0
        %v1625 = vadd.f32 0.0, %v1624
        %v1626 = vpop.f32.mrf.mxu0
        %v1627 = vpop.f32.mrf.mxu0
        %1628 = vdwg.mxu0
        %v1629 = vadd.f32 %v1542, %v1582
        %v1630 = vadd.f32 %v1543, %v1584
        %v1631 = vadd.f32 %v1544, %v1623
        %v1632 = vadd.f32 %v1545, %v1625
        %v1633 = vmul.f32 %v1629, 0.5
        %v1634 = vtanh.pop %v1633
        %v1635 = vmul.f32 %v1634, 0.5
        %v1636 = vadd.f32 %v1635, 0.5
        %v1637 = vmul.f32 %v1630, 0.5
        %v1638 = vtanh.pop %v1637
        %v1639 = vmul.f32 %v1638, 0.5
        %v1640 = vadd.f32 %v1639, 0.5
        %v1641 = vtanh.pop %v1631
        %v1642 = vmul.f32 %v1632, 0.5
        %v1643 = vtanh.pop %v1642
        %v1644 = vmul.f32 %v1643, 0.5
        %v1645 = vadd.f32 %v1644, 0.5
        %v1646 = vmul.f32 %v1640, %v1539
        %v1647 = vmul.f32 %v1636, %v1641
        %v1648 = vadd.f32 %v1646, %v1647
        %v1649 = vtanh.pop %v1648
        %v1650 = vmul.f32 %v1645, %v1649
        %s1651 = sadd.s32 %s1288, 3
        %v1652 = vstv %s1651
        %vm1653 = vcmp.lt.s32.totalorder %v1652, %v1016
        %v1654 = vsel %vm1653, 1, 0
        %1655 = vset.pattern.permute.xlu0 0
        %1656 = vperm.xlu0 %1655, %v1654
        %v1657 = vpop.permute.xlu0 %1656
        %vm1658 = vcmp.eq.s32.totalorder %v1657, 1
        %v1659 = vsel %vm1658, %v1650, %v1538
        %v1660 = vsel %vm1658, %v1648, %v1539
        %v1661 = vsel %vm1658, %v1650, 0.0
        %1662 = vst [vmem:[#allocation3 + $0x18] sm:$0xff] %v1661
        %v1663 = vld [vmem:[#allocation2 + $0x80] sm:$0xff]
        %v1664 = vld [vmem:[#allocation2 + $0x88] sm:$0xff]
        %v1665 = vld [vmem:[#allocation2 + $0x90] sm:$0xff]
        %v1666 = vld [vmem:[#allocation2 + $0x98] sm:$0xff]
        %v1667 = vpack.c.bf16 %v1659, %v1659
        %1668 = vmatprep.subr.bf16.mxu0 %v1149
        %1669 = vmatpush1.bf16.msra.mxu0 %v1148
        %1670 = vmatprep.subr.bf16.mxu0 %v1145
        %1671 = vmatpush1.bf16.msra.mxu0 %v1144
        %1672 = vmatprep.subr.bf16.mxu0 %v1141
        %1673 = vmatpush1.bf16.msra.mxu0 %v1140
        %1674 = vmatprep.subr.bf16.mxu0 %v1137
        %1675 = vmatpush1.bf16.msra.mxu0 %v1136
        %1676 = vmatprep.subr.bf16.mxu0 %v1133
        %1677 = vmatpush1.bf16.msra.mxu0 %v1132
        %1678 = vmatprep.subr.bf16.mxu0 %v1129
        %1679 = vmatpush1.bf16.msra.mxu0 %v1128
        %1680 = vmatprep.subr.bf16.mxu0 %v1125
        %1681 = vmatpush1.bf16.msra.mxu0 %v1124
        %1682 = vmatprep.subr.bf16.mxu0 %v1121
        %1683 = vmatpush1.bf16.msra.mxu0 %v1120
        %1684 = vmatprep.subr.bf16.mxu0 0
        %1685 = vmatpush2.bf16.msra.mxu0 0
        %1686 = vmatprep.subr.bf16.mxu0 0
        %1687 = vmatpush2.bf16.msra.mxu0 0
        %1688 = vmatprep.subr.bf16.mxu0 0
        %1689 = vmatpush2.bf16.msra.mxu0 0
        %1690 = vmatprep.subr.bf16.mxu0 0
        %1691 = vmatpush2.bf16.msra.mxu0 0
        %1692 = vmatprep.subr.bf16.mxu0 0
        %1693 = vmatpush2.bf16.msra.mxu0 0
        %1694 = vmatprep.subr.bf16.mxu0 0
        %1695 = vmatpush2.bf16.msra.mxu0 0
        %1696 = vmatprep.subr.bf16.mxu0 0
        %1697 = vmatpush2.bf16.msra.mxu0 0
        %1698 = vmatprep.subr.bf16.mxu0 0
        %1699 = vmatpush2.bf16.msra.mxu0 0
        %1700 = vmatprep.mubr.bf16.mxu0 0
        %1701 = vmatmul.mubr.bf16.gmra.mxu0 %v1667
        %v1702 = vpop.f32.mrf.mxu0
        %v1703 = vadd.f32 0.0, %v1702
        %v1704 = vpop.f32.mrf.mxu0
        %v1705 = vadd.f32 0.0, %v1704
        %v1706 = vpop.f32.mrf.mxu0
        %v1707 = vpop.f32.mrf.mxu0
        %1708 = vdwg.mxu0
        %1709 = vmatprep.subr.bf16.mxu0 %v1151
        %1710 = vmatpush1.bf16.msra.mxu0 %v1150
        %1711 = vmatprep.subr.bf16.mxu0 %v1147
        %1712 = vmatpush1.bf16.msra.mxu0 %v1146
        %1713 = vmatprep.subr.bf16.mxu0 %v1143
        %1714 = vmatpush1.bf16.msra.mxu0 %v1142
        %1715 = vmatprep.subr.bf16.mxu0 %v1139
        %1716 = vmatpush1.bf16.msra.mxu0 %v1138
        %1717 = vmatprep.subr.bf16.mxu0 %v1135
        %1718 = vmatpush1.bf16.msra.mxu0 %v1134
        %1719 = vmatprep.subr.bf16.mxu0 %v1131
        %1720 = vmatpush1.bf16.msra.mxu0 %v1130
        %1721 = vmatprep.subr.bf16.mxu0 %v1127
        %1722 = vmatpush1.bf16.msra.mxu0 %v1126
        %1723 = vmatprep.subr.bf16.mxu0 %v1123
        %1724 = vmatpush1.bf16.msra.mxu0 %v1122
        %1725 = vmatprep.subr.bf16.mxu0 0
        %1726 = vmatpush2.bf16.msra.mxu0 0
        %1727 = vmatprep.subr.bf16.mxu0 0
        %1728 = vmatpush2.bf16.msra.mxu0 0
        %1729 = vmatprep.subr.bf16.mxu0 0
        %1730 = vmatpush2.bf16.msra.mxu0 0
        %1731 = vmatprep.subr.bf16.mxu0 0
        %1732 = vmatpush2.bf16.msra.mxu0 0
        %1733 = vmatprep.subr.bf16.mxu0 0
        %1734 = vmatpush2.bf16.msra.mxu0 0
        %1735 = vmatprep.subr.bf16.mxu0 0
        %1736 = vmatpush2.bf16.msra.mxu0 0
        %1737 = vmatprep.subr.bf16.mxu0 0
        %1738 = vmatpush2.bf16.msra.mxu0 0
        %1739 = vmatprep.subr.bf16.mxu0 0
        %1740 = vmatpush2.bf16.msra.mxu0 0
        %1741 = vmatprep.mubr.bf16.mxu0 0
        %1742 = vmatmul.mubr.bf16.gmra.mxu0 %v1667
        %v1743 = vpop.f32.mrf.mxu0
        %v1744 = vadd.f32 0.0, %v1743
        %v1745 = vpop.f32.mrf.mxu0
        %v1746 = vadd.f32 0.0, %v1745
        %v1747 = vpop.f32.mrf.mxu0
        %v1748 = vpop.f32.mrf.mxu0
        %1749 = vdwg.mxu0
        %v1750 = vadd.f32 %v1663, %v1703
        %v1751 = vadd.f32 %v1664, %v1705
        %v1752 = vadd.f32 %v1665, %v1744
        %v1753 = vadd.f32 %v1666, %v1746
        %v1754 = vmul.f32 %v1750, 0.5
        %v1755 = vtanh.pop %v1754
        %v1756 = vmul.f32 %v1755, 0.5
        %v1757 = vadd.f32 %v1756, 0.5
        %v1758 = vmul.f32 %v1751, 0.5
        %v1759 = vtanh.pop %v1758
        %v1760 = vmul.f32 %v1759, 0.5
        %v1761 = vadd.f32 %v1760, 0.5
        %v1762 = vtanh.pop %v1752
        %v1763 = vmul.f32 %v1753, 0.5
        %v1764 = vtanh.pop %v1763
        %v1765 = vmul.f32 %v1764, 0.5
        %v1766 = vadd.f32 %v1765, 0.5
        %v1767 = vmul.f32 %v1761, %v1660
        %v1768 = vmul.f32 %v1757, %v1762
        %v1769 = vadd.f32 %v1767, %v1768
        %v1770 = vtanh.pop %v1769
        %v1771 = vmul.f32 %v1766, %v1770
        %s1772 = sadd.s32 %s1288, 4
        %v1773 = vstv %s1772
        %vm1774 = vcmp.lt.s32.totalorder %v1773, %v1016
        %v1775 = vsel %vm1774, 1, 0
        %1776 = vset.pattern.permute.xlu0 0
        %1777 = vperm.xlu0 %1776, %v1775
        %v1778 = vpop.permute.xlu0 %1777
        %vm1779 = vcmp.eq.s32.totalorder %v1778, 1
        %v1780 = vsel %vm1779, %v1771, %v1659
        %v1781 = vsel %vm1779, %v1769, %v1660
        %v1782 = vsel %vm1779, %v1771, 0.0
        %1783 = vst [vmem:[#allocation3 + $0x20] sm:$0xff] %v1782
        %v1784 = vld [vmem:[#allocation2 + $0xa0] sm:$0xff]
        %v1785 = vld [vmem:[#allocation2 + $0xa8] sm:$0xff]
        %v1786 = vld [vmem:[#allocation2 + $0xb0] sm:$0xff]
        %v1787 = vld [vmem:[#allocation2 + $0xb8] sm:$0xff]
        %v1788 = vpack.c.bf16 %v1780, %v1780
        %1789 = vmatprep.subr.bf16.mxu0 %v1149
        %1790 = vmatpush1.bf16.msra.mxu0 %v1148
        %1791 = vmatprep.subr.bf16.mxu0 %v1145
        %1792 = vmatpush1.bf16.msra.mxu0 %v1144
        %1793 = vmatprep.subr.bf16.mxu0 %v1141
        %1794 = vmatpush1.bf16.msra.mxu0 %v1140
        %1795 = vmatprep.subr.bf16.mxu0 %v1137
        %1796 = vmatpush1.bf16.msra.mxu0 %v1136
        %1797 = vmatprep.subr.bf16.mxu0 %v1133
        %1798 = vmatpush1.bf16.msra.mxu0 %v1132
        %1799 = vmatprep.subr.bf16.mxu0 %v1129
        %1800 = vmatpush1.bf16.msra.mxu0 %v1128
        %1801 = vmatprep.subr.bf16.mxu0 %v1125
        %1802 = vmatpush1.bf16.msra.mxu0 %v1124
        %1803 = vmatprep.subr.bf16.mxu0 %v1121
        %1804 = vmatpush1.bf16.msra.mxu0 %v1120
        %1805 = vmatprep.subr.bf16.mxu0 0
        %1806 = vmatpush2.bf16.msra.mxu0 0
        %1807 = vmatprep.subr.bf16.mxu0 0
        %1808 = vmatpush2.bf16.msra.mxu0 0
        %1809 = vmatprep.subr.bf16.mxu0 0
        %1810 = vmatpush2.bf16.msra.mxu0 0
        %1811 = vmatprep.subr.bf16.mxu0 0
        %1812 = vmatpush2.bf16.msra.mxu0 0
        %1813 = vmatprep.subr.bf16.mxu0 0
        %1814 = vmatpush2.bf16.msra.mxu0 0
        %1815 = vmatprep.subr.bf16.mxu0 0
        %1816 = vmatpush2.bf16.msra.mxu0 0
        %1817 = vmatprep.subr.bf16.mxu0 0
        %1818 = vmatpush2.bf16.msra.mxu0 0
        %1819 = vmatprep.subr.bf16.mxu0 0
        %1820 = vmatpush2.bf16.msra.mxu0 0
        %1821 = vmatprep.mubr.bf16.mxu0 0
        %1822 = vmatmul.mubr.bf16.gmra.mxu0 %v1788
        %v1823 = vpop.f32.mrf.mxu0
        %v1824 = vadd.f32 0.0, %v1823
        %v1825 = vpop.f32.mrf.mxu0
        %v1826 = vadd.f32 0.0, %v1825
        %v1827 = vpop.f32.mrf.mxu0
        %v1828 = vpop.f32.mrf.mxu0
        %1829 = vdwg.mxu0
        %1830 = vmatprep.subr.bf16.mxu0 %v1151
        %1831 = vmatpush1.bf16.msra.mxu0 %v1150
        %1832 = vmatprep.subr.bf16.mxu0 %v1147
        %1833 = vmatpush1.bf16.msra.mxu0 %v1146
        %1834 = vmatprep.subr.bf16.mxu0 %v1143
        %1835 = vmatpush1.bf16.msra.mxu0 %v1142
        %1836 = vmatprep.subr.bf16.mxu0 %v1139
        %1837 = vmatpush1.bf16.msra.mxu0 %v1138
        %1838 = vmatprep.subr.bf16.mxu0 %v1135
        %1839 = vmatpush1.bf16.msra.mxu0 %v1134
        %1840 = vmatprep.subr.bf16.mxu0 %v1131
        %1841 = vmatpush1.bf16.msra.mxu0 %v1130
        %1842 = vmatprep.subr.bf16.mxu0 %v1127
        %1843 = vmatpush1.bf16.msra.mxu0 %v1126
        %1844 = vmatprep.subr.bf16.mxu0 %v1123
        %1845 = vmatpush1.bf16.msra.mxu0 %v1122
        %1846 = vmatprep.subr.bf16.mxu0 0
        %1847 = vmatpush2.bf16.msra.mxu0 0
        %1848 = vmatprep.subr.bf16.mxu0 0
        %1849 = vmatpush2.bf16.msra.mxu0 0
        %1850 = vmatprep.subr.bf16.mxu0 0
        %1851 = vmatpush2.bf16.msra.mxu0 0
        %1852 = vmatprep.subr.bf16.mxu0 0
        %1853 = vmatpush2.bf16.msra.mxu0 0
        %1854 = vmatprep.subr.bf16.mxu0 0
        %1855 = vmatpush2.bf16.msra.mxu0 0
        %1856 = vmatprep.subr.bf16.mxu0 0
        %1857 = vmatpush2.bf16.msra.mxu0 0
        %1858 = vmatprep.subr.bf16.mxu0 0
        %1859 = vmatpush2.bf16.msra.mxu0 0
        %1860 = vmatprep.subr.bf16.mxu0 0
        %1861 = vmatpush2.bf16.msra.mxu0 0
        %1862 = vmatprep.mubr.bf16.mxu0 0
        %1863 = vmatmul.mubr.bf16.gmra.mxu0 %v1788
        %v1864 = vpop.f32.mrf.mxu0
        %v1865 = vadd.f32 0.0, %v1864
        %v1866 = vpop.f32.mrf.mxu0
        %v1867 = vadd.f32 0.0, %v1866
        %v1868 = vpop.f32.mrf.mxu0
        %v1869 = vpop.f32.mrf.mxu0
        %1870 = vdwg.mxu0
        %v1871 = vadd.f32 %v1784, %v1824
        %v1872 = vadd.f32 %v1785, %v1826
        %v1873 = vadd.f32 %v1786, %v1865
        %v1874 = vadd.f32 %v1787, %v1867
        %v1875 = vmul.f32 %v1871, 0.5
        %v1876 = vtanh.pop %v1875
        %v1877 = vmul.f32 %v1876, 0.5
        %v1878 = vadd.f32 %v1877, 0.5
        %v1879 = vmul.f32 %v1872, 0.5
        %v1880 = vtanh.pop %v1879
        %v1881 = vmul.f32 %v1880, 0.5
        %v1882 = vadd.f32 %v1881, 0.5
        %v1883 = vtanh.pop %v1873
        %v1884 = vmul.f32 %v1874, 0.5
        %v1885 = vtanh.pop %v1884
        %v1886 = vmul.f32 %v1885, 0.5
        %v1887 = vadd.f32 %v1886, 0.5
        %v1888 = vmul.f32 %v1882, %v1781
        %v1889 = vmul.f32 %v1878, %v1883
        %v1890 = vadd.f32 %v1888, %v1889
        %v1891 = vtanh.pop %v1890
        %v1892 = vmul.f32 %v1887, %v1891
        %s1893 = sadd.s32 %s1288, 5
        %v1894 = vstv %s1893
        %vm1895 = vcmp.lt.s32.totalorder %v1894, %v1016
        %v1896 = vsel %vm1895, 1, 0
        %1897 = vset.pattern.permute.xlu0 0
        %1898 = vperm.xlu0 %1897, %v1896
        %v1899 = vpop.permute.xlu0 %1898
        %vm1900 = vcmp.eq.s32.totalorder %v1899, 1
        %v1901 = vsel %vm1900, %v1892, %v1780
        %v1902 = vsel %vm1900, %v1890, %v1781
        %v1903 = vsel %vm1900, %v1892, 0.0
        %1904 = vst [vmem:[#allocation3 + $0x28] sm:$0xff] %v1903
        %v1905 = vld [vmem:[#allocation2 + $0xc0] sm:$0xff]
        %v1906 = vld [vmem:[#allocation2 + $0xc8] sm:$0xff]
        %v1907 = vld [vmem:[#allocation2 + $0xd0] sm:$0xff]
        %v1908 = vld [vmem:[#allocation2 + $0xd8] sm:$0xff]
        %v1909 = vpack.c.bf16 %v1901, %v1901
        %1910 = vmatprep.subr.bf16.mxu0 %v1149
        %1911 = vmatpush1.bf16.msra.mxu0 %v1148
        %1912 = vmatprep.subr.bf16.mxu0 %v1145
        %1913 = vmatpush1.bf16.msra.mxu0 %v1144
        %1914 = vmatprep.subr.bf16.mxu0 %v1141
        %1915 = vmatpush1.bf16.msra.mxu0 %v1140
        %1916 = vmatprep.subr.bf16.mxu0 %v1137
        %1917 = vmatpush1.bf16.msra.mxu0 %v1136
        %1918 = vmatprep.subr.bf16.mxu0 %v1133
        %1919 = vmatpush1.bf16.msra.mxu0 %v1132
        %1920 = vmatprep.subr.bf16.mxu0 %v1129
        %1921 = vmatpush1.bf16.msra.mxu0 %v1128
        %1922 = vmatprep.subr.bf16.mxu0 %v1125
        %1923 = vmatpush1.bf16.msra.mxu0 %v1124
        %1924 = vmatprep.subr.bf16.mxu0 %v1121
        %1925 = vmatpush1.bf16.msra.mxu0 %v1120
        %1926 = vmatprep.subr.bf16.mxu0 0
        %1927 = vmatpush2.bf16.msra.mxu0 0
        %1928 = vmatprep.subr.bf16.mxu0 0
        %1929 = vmatpush2.bf16.msra.mxu0 0
        %1930 = vmatprep.subr.bf16.mxu0 0
        %1931 = vmatpush2.bf16.msra.mxu0 0
        %1932 = vmatprep.subr.bf16.mxu0 0
        %1933 = vmatpush2.bf16.msra.mxu0 0
        %1934 = vmatprep.subr.bf16.mxu0 0
        %1935 = vmatpush2.bf16.msra.mxu0 0
        %1936 = vmatprep.subr.bf16.mxu0 0
        %1937 = vmatpush2.bf16.msra.mxu0 0
        %1938 = vmatprep.subr.bf16.mxu0 0
        %1939 = vmatpush2.bf16.msra.mxu0 0
        %1940 = vmatprep.subr.bf16.mxu0 0
        %1941 = vmatpush2.bf16.msra.mxu0 0
        %1942 = vmatprep.mubr.bf16.mxu0 0
        %1943 = vmatmul.mubr.bf16.gmra.mxu0 %v1909
        %v1944 = vpop.f32.mrf.mxu0
        %v1945 = vadd.f32 0.0, %v1944
        %v1946 = vpop.f32.mrf.mxu0
        %v1947 = vadd.f32 0.0, %v1946
        %v1948 = vpop.f32.mrf.mxu0
        %v1949 = vpop.f32.mrf.mxu0
        %1950 = vdwg.mxu0
        %1951 = vmatprep.subr.bf16.mxu0 %v1151
        %1952 = vmatpush1.bf16.msra.mxu0 %v1150
        %1953 = vmatprep.subr.bf16.mxu0 %v1147
        %1954 = vmatpush1.bf16.msra.mxu0 %v1146
        %1955 = vmatprep.subr.bf16.mxu0 %v1143
        %1956 = vmatpush1.bf16.msra.mxu0 %v1142
        %1957 = vmatprep.subr.bf16.mxu0 %v1139
        %1958 = vmatpush1.bf16.msra.mxu0 %v1138
        %1959 = vmatprep.subr.bf16.mxu0 %v1135
        %1960 = vmatpush1.bf16.msra.mxu0 %v1134
        %1961 = vmatprep.subr.bf16.mxu0 %v1131
        %1962 = vmatpush1.bf16.msra.mxu0 %v1130
        %1963 = vmatprep.subr.bf16.mxu0 %v1127
        %1964 = vmatpush1.bf16.msra.mxu0 %v1126
        %1965 = vmatprep.subr.bf16.mxu0 %v1123
        %1966 = vmatpush1.bf16.msra.mxu0 %v1122
        %1967 = vmatprep.subr.bf16.mxu0 0
        %1968 = vmatpush2.bf16.msra.mxu0 0
        %1969 = vmatprep.subr.bf16.mxu0 0
        %1970 = vmatpush2.bf16.msra.mxu0 0
        %1971 = vmatprep.subr.bf16.mxu0 0
        %1972 = vmatpush2.bf16.msra.mxu0 0
        %1973 = vmatprep.subr.bf16.mxu0 0
        %1974 = vmatpush2.bf16.msra.mxu0 0
        %1975 = vmatprep.subr.bf16.mxu0 0
        %1976 = vmatpush2.bf16.msra.mxu0 0
        %1977 = vmatprep.subr.bf16.mxu0 0
        %1978 = vmatpush2.bf16.msra.mxu0 0
        %1979 = vmatprep.subr.bf16.mxu0 0
        %1980 = vmatpush2.bf16.msra.mxu0 0
        %1981 = vmatprep.subr.bf16.mxu0 0
        %1982 = vmatpush2.bf16.msra.mxu0 0
        %1983 = vmatprep.mubr.bf16.mxu0 0
        %1984 = vmatmul.mubr.bf16.gmra.mxu0 %v1909
        %v1985 = vpop.f32.mrf.mxu0
        %v1986 = vadd.f32 0.0, %v1985
        %v1987 = vpop.f32.mrf.mxu0
        %v1988 = vadd.f32 0.0, %v1987
        %v1989 = vpop.f32.mrf.mxu0
        %v1990 = vpop.f32.mrf.mxu0
        %1991 = vdwg.mxu0
        %v1992 = vadd.f32 %v1905, %v1945
        %v1993 = vadd.f32 %v1906, %v1947
        %v1994 = vadd.f32 %v1907, %v1986
        %v1995 = vadd.f32 %v1908, %v1988
        %v1996 = vmul.f32 %v1992, 0.5
        %v1997 = vtanh.pop %v1996
        %v1998 = vmul.f32 %v1997, 0.5
        %v1999 = vadd.f32 %v1998, 0.5
        %v2000 = vmul.f32 %v1993, 0.5
        %v2001 = vtanh.pop %v2000
        %v2002 = vmul.f32 %v2001, 0.5
        %v2003 = vadd.f32 %v2002, 0.5
        %v2004 = vtanh.pop %v1994
        %v2005 = vmul.f32 %v1995, 0.5
        %v2006 = vtanh.pop %v2005
        %v2007 = vmul.f32 %v2006, 0.5
        %v2008 = vadd.f32 %v2007, 0.5
        %v2009 = vmul.f32 %v2003, %v1902
        %v2010 = vmul.f32 %v1999, %v2004
        %v2011 = vadd.f32 %v2009, %v2010
        %v2012 = vtanh.pop %v2011
        %v2013 = vmul.f32 %v2008, %v2012
        %s2014 = sadd.s32 %s1288, 6
        %v2015 = vstv %s2014
        %vm2016 = vcmp.lt.s32.totalorder %v2015, %v1016
        %v2017 = vsel %vm2016, 1, 0
        %2018 = vset.pattern.permute.xlu0 0
        %2019 = vperm.xlu0 %2018, %v2017
        %v2020 = vpop.permute.xlu0 %2019
        %vm2021 = vcmp.eq.s32.totalorder %v2020, 1
        %v2022 = vsel %vm2021, %v2013, %v1901
        %v2023 = vsel %vm2021, %v2011, %v1902
        %v2024 = vsel %vm2021, %v2013, 0.0
        %2025 = vst [vmem:[#allocation3 + $0x30] sm:$0xff] %v2024
        %v2026 = vld [vmem:[#allocation2 + $0xe0] sm:$0xff]
        %v2027 = vld [vmem:[#allocation2 + $0xe8] sm:$0xff]
        %v2028 = vld [vmem:[#allocation2 + $0xf0] sm:$0xff]
        %v2029 = vld [vmem:[#allocation2 + $0xf8] sm:$0xff]
        %v2030 = vpack.c.bf16 %v2022, %v2022
        %2031 = vmatprep.subr.bf16.mxu0 %v1149
        %2032 = vmatpush1.bf16.msra.mxu0 %v1148
        %2033 = vmatprep.subr.bf16.mxu0 %v1145
        %2034 = vmatpush1.bf16.msra.mxu0 %v1144
        %2035 = vmatprep.subr.bf16.mxu0 %v1141
        %2036 = vmatpush1.bf16.msra.mxu0 %v1140
        %2037 = vmatprep.subr.bf16.mxu0 %v1137
        %2038 = vmatpush1.bf16.msra.mxu0 %v1136
        %2039 = vmatprep.subr.bf16.mxu0 %v1133
        %2040 = vmatpush1.bf16.msra.mxu0 %v1132
        %2041 = vmatprep.subr.bf16.mxu0 %v1129
        %2042 = vmatpush1.bf16.msra.mxu0 %v1128
        %2043 = vmatprep.subr.bf16.mxu0 %v1125
        %2044 = vmatpush1.bf16.msra.mxu0 %v1124
        %2045 = vmatprep.subr.bf16.mxu0 %v1121
        %2046 = vmatpush1.bf16.msra.mxu0 %v1120
        %2047 = vmatprep.subr.bf16.mxu0 0
        %2048 = vmatpush2.bf16.msra.mxu0 0
        %2049 = vmatprep.subr.bf16.mxu0 0
        %2050 = vmatpush2.bf16.msra.mxu0 0
        %2051 = vmatprep.subr.bf16.mxu0 0
        %2052 = vmatpush2.bf16.msra.mxu0 0
        %2053 = vmatprep.subr.bf16.mxu0 0
        %2054 = vmatpush2.bf16.msra.mxu0 0
        %2055 = vmatprep.subr.bf16.mxu0 0
        %2056 = vmatpush2.bf16.msra.mxu0 0
        %2057 = vmatprep.subr.bf16.mxu0 0
        %2058 = vmatpush2.bf16.msra.mxu0 0
        %2059 = vmatprep.subr.bf16.mxu0 0
        %2060 = vmatpush2.bf16.msra.mxu0 0
        %2061 = vmatprep.subr.bf16.mxu0 0
        %2062 = vmatpush2.bf16.msra.mxu0 0
        %2063 = vmatprep.mubr.bf16.mxu0 0
        %2064 = vmatmul.mubr.bf16.gmra.mxu0 %v2030
        %v2065 = vpop.f32.mrf.mxu0
        %v2066 = vadd.f32 0.0, %v2065
        %v2067 = vpop.f32.mrf.mxu0
        %v2068 = vadd.f32 0.0, %v2067
        %v2069 = vpop.f32.mrf.mxu0
        %v2070 = vpop.f32.mrf.mxu0
        %2071 = vdwg.mxu0
        %2072 = vmatprep.subr.bf16.mxu0 %v1151
        %2073 = vmatpush1.bf16.msra.mxu0 %v1150
        %2074 = vmatprep.subr.bf16.mxu0 %v1147
        %2075 = vmatpush1.bf16.msra.mxu0 %v1146
        %2076 = vmatprep.subr.bf16.mxu0 %v1143
        %2077 = vmatpush1.bf16.msra.mxu0 %v1142
        %2078 = vmatprep.subr.bf16.mxu0 %v1139
        %2079 = vmatpush1.bf16.msra.mxu0 %v1138
        %2080 = vmatprep.subr.bf16.mxu0 %v1135
        %2081 = vmatpush1.bf16.msra.mxu0 %v1134
        %2082 = vmatprep.subr.bf16.mxu0 %v1131
        %2083 = vmatpush1.bf16.msra.mxu0 %v1130
        %2084 = vmatprep.subr.bf16.mxu0 %v1127
        %2085 = vmatpush1.bf16.msra.mxu0 %v1126
        %2086 = vmatprep.subr.bf16.mxu0 %v1123
        %2087 = vmatpush1.bf16.msra.mxu0 %v1122
        %2088 = vmatprep.subr.bf16.mxu0 0
        %2089 = vmatpush2.bf16.msra.mxu0 0
        %2090 = vmatprep.subr.bf16.mxu0 0
        %2091 = vmatpush2.bf16.msra.mxu0 0
        %2092 = vmatprep.subr.bf16.mxu0 0
        %2093 = vmatpush2.bf16.msra.mxu0 0
        %2094 = vmatprep.subr.bf16.mxu0 0
        %2095 = vmatpush2.bf16.msra.mxu0 0
        %2096 = vmatprep.subr.bf16.mxu0 0
        %2097 = vmatpush2.bf16.msra.mxu0 0
        %2098 = vmatprep.subr.bf16.mxu0 0
        %2099 = vmatpush2.bf16.msra.mxu0 0
        %2100 = vmatprep.subr.bf16.mxu0 0
        %2101 = vmatpush2.bf16.msra.mxu0 0
        %2102 = vmatprep.subr.bf16.mxu0 0
        %2103 = vmatpush2.bf16.msra.mxu0 0
        %2104 = vmatprep.mubr.bf16.mxu0 0
        %2105 = vmatmul.mubr.bf16.gmra.mxu0 %v2030
        %v2106 = vpop.f32.mrf.mxu0
        %v2107 = vadd.f32 0.0, %v2106
        %v2108 = vpop.f32.mrf.mxu0
        %v2109 = vadd.f32 0.0, %v2108
        %v2110 = vpop.f32.mrf.mxu0
        %v2111 = vpop.f32.mrf.mxu0
        %2112 = vdwg.mxu0
        %v2113 = vadd.f32 %v2026, %v2066
        %v2114 = vadd.f32 %v2027, %v2068
        %v2115 = vadd.f32 %v2028, %v2107
        %v2116 = vadd.f32 %v2029, %v2109
        %v2117 = vmul.f32 %v2113, 0.5
        %v2118 = vtanh.pop %v2117
        %v2119 = vmul.f32 %v2118, 0.5
        %v2120 = vadd.f32 %v2119, 0.5
        %v2121 = vmul.f32 %v2114, 0.5
        %v2122 = vtanh.pop %v2121
        %v2123 = vmul.f32 %v2122, 0.5
        %v2124 = vadd.f32 %v2123, 0.5
        %v2125 = vtanh.pop %v2115
        %v2126 = vmul.f32 %v2116, 0.5
        %v2127 = vtanh.pop %v2126
        %v2128 = vmul.f32 %v2127, 0.5
        %v2129 = vadd.f32 %v2128, 0.5
        %v2130 = vmul.f32 %v2124, %v2023
        %v2131 = vmul.f32 %v2120, %v2125
        %v2132 = vadd.f32 %v2130, %v2131
        %v2133 = vtanh.pop %v2132
        %v2134 = vmul.f32 %v2129, %v2133
        %s2135 = sadd.s32 %s1288, 7
        %v2136 = vstv %s2135
        %vm2137 = vcmp.lt.s32.totalorder %v2136, %v1016
        %v2138 = vsel %vm2137, 1, 0
        %2139 = vset.pattern.permute.xlu0 0
        %2140 = vperm.xlu0 %2139, %v2138
        %v2141 = vpop.permute.xlu0 %2140
        %vm2142 = vcmp.eq.s32.totalorder %v2141, 1
        %v2143 = vsel %vm2142, %v2134, %v2022
        %v2144 = vsel %vm2142, %v2132, %v2023
        %v2145 = vsel %vm2142, %v2134, 0.0
        %2146 = vst [vmem:[#allocation3 + $0x38] sm:$0xff] %v2145
        %2147 = vst [vmem:[#allocation4] sm:$0xff] %v2143
        %2148 = vst [vmem:[#allocation5] sm:$0xff] %v2144
        %v2149 = vld [vmem:[#allocation3] sm:$0xff]
        %v2150 = vld [vmem:[#allocation3 + $0x8] sm:$0xff]
        %v2151 = vld [vmem:[#allocation3 + $0x10] sm:$0xff]
        %v2152 = vld [vmem:[#allocation3 + $0x18] sm:$0xff]
        %v2153 = vld [vmem:[#allocation3 + $0x20] sm:$0xff]
        %v2154 = vld [vmem:[#allocation3 + $0x28] sm:$0xff]
        %v2155 = vld [vmem:[#allocation3 + $0x30] sm:$0xff]
        %v2156 = vld [vmem:[#allocation3 + $0x38] sm:$0xff]
        %v2157 = vld [vmem:[%s6] sm:$0x1]
        %v2159 = vlaneseq
        %v2160 = vshrl.u32 %v2159, 7
        %v2161 = vsub.s32 0, %v2160
        %v2162 = vrot.slane %v2157, %v2161
        %v2164 = vmul.f32 %v2149, %v2162
        %v2165 = vmul.f32 %v2150, %v2162
        %v2166 = vmul.f32 %v2151, %v2162
        %v2167 = vmul.f32 %v2152, %v2162
        %v2168 = vmul.f32 %v2153, %v2162
        %v2169 = vmul.f32 %v2154, %v2162
        %v2170 = vmul.f32 %v2155, %v2162
        %v2171 = vmul.f32 %v2156, %v2162
        %2172 = vadd.xlane.f32.xlu0 %v2164
        %v2173 = vpop.xlane.xlu0 %2172
        %2174 = vadd.xlane.f32.xlu0 %v2165
        %v2175 = vpop.xlane.xlu0 %2174
        %2176 = vadd.xlane.f32.xlu0 %v2166
        %v2177 = vpop.xlane.xlu0 %2176
        %2178 = vadd.xlane.f32.xlu0 %v2167
        %v2179 = vpop.xlane.xlu0 %2178
        %2180 = vadd.xlane.f32.xlu0 %v2168
        %v2181 = vpop.xlane.xlu0 %2180
        %2182 = vadd.xlane.f32.xlu0 %v2169
        %v2183 = vpop.xlane.xlu0 %2182
        %2184 = vadd.xlane.f32.xlu0 %v2170
        %v2185 = vpop.xlane.xlu0 %2184
        %2186 = vadd.xlane.f32.xlu0 %v2171
        %v2187 = vpop.xlane.xlu0 %2186
        %v2188 = vld [vmem:[#allocation9] sm:$0x1]
        %v2190 = vlaneseq
        %v2191 = vshrl.u32 %v2190, 7
        %v2192 = vsub.s32 0, %v2191
        %v2193 = vrot.slane %v2188, %v2192
        %v2195 = vadd.f32 %v2173, %v2193
        %v2196 = vadd.f32 %v2175, %v2193
        %v2197 = vadd.f32 %v2177, %v2193
        %v2198 = vadd.f32 %v2179, %v2193
        %v2199 = vadd.f32 %v2181, %v2193
        %v2200 = vadd.f32 %v2183, %v2193
        %v2201 = vadd.f32 %v2185, %v2193
        %v2202 = vadd.f32 %v2187, %v2193
        %v2203 = vadd.s32 %v1289, 1
        %v2204 = vadd.s32 %v1289, 2
        %v2205 = vadd.s32 %v1289, 3
        %v2206 = vadd.s32 %v1289, 4
        %v2207 = vadd.s32 %v1289, 5
        %v2208 = vadd.s32 %v1289, 6
        %v2209 = vadd.s32 %v1289, 7
        %vm2210 = vcmp.lt.s32.totalorder %v2203, %v1016
        %vm2211 = vcmp.lt.s32.totalorder %v2204, %v1016
        %vm2212 = vcmp.lt.s32.totalorder %v2205, %v1016
        %vm2213 = vcmp.lt.s32.totalorder %v2206, %v1016
        %vm2214 = vcmp.lt.s32.totalorder %v2207, %v1016
        %vm2215 = vcmp.lt.s32.totalorder %v2208, %v1016
        %vm2216 = vcmp.lt.s32.totalorder %v2209, %v1016
        %v2217 = vsel %vm1290, %v2195, -1e+30
        %v2218 = vsel %vm2210, %v2196, -1e+30
        %v2219 = vsel %vm2211, %v2197, -1e+30
        %v2220 = vsel %vm2212, %v2198, -1e+30
        %v2221 = vsel %vm2213, %v2199, -1e+30
        %v2222 = vsel %vm2214, %v2200, -1e+30
        %v2223 = vsel %vm2215, %v2201, -1e+30
        %v2224 = vsel %vm2216, %v2202, -1e+30
        %vm2225 = vcmask 7168
        %v2226 = vsel %vm2225, %v2217, -inf
        %v2227 = vsel %vm2225, %v2218, -inf
        %v2228 = vsel %vm2225, %v2219, -inf
        %v2229 = vsel %vm2225, %v2220, -inf
        %v2230 = vsel %vm2225, %v2221, -inf
        %v2231 = vmax.f32 %v2226, %v2230
        %v2232 = vsel %vm2225, %v2222, -inf
        %v2233 = vmax.f32 %v2227, %v2232
        %v2234 = vsel %vm2225, %v2223, -inf
        %v2235 = vmax.f32 %v2228, %v2234
        %v2236 = vsel %vm2225, %v2224, -inf
        %v2237 = vmax.f32 %v2229, %v2236
        %v2238 = vmax.f32 %v2231, %v2233
        %v2239 = vmax.f32 %v2235, %v2237
        %v2240 = vmax.f32 %v2238, %v2239
        %v2241 = vsub.f32 %v2217, %v2240
        %v2242 = vsub.f32 %v2218, %v2240
        %v2243 = vsub.f32 %v2219, %v2240
        %v2244 = vsub.f32 %v2220, %v2240
        %v2245 = vsub.f32 %v2221, %v2240
        %v2246 = vsub.f32 %v2222, %v2240
        %v2247 = vsub.f32 %v2223, %v2240
        %v2248 = vsub.f32 %v2224, %v2240
        %v2249 = vmul.f32 %v2241, 1.442695
        %v2250 = vpow.pop %v2249
        %v2251 = vmul.f32 %v2242, 1.442695
        %v2252 = vpow.pop %v2251
        %v2253 = vmul.f32 %v2243, 1.442695
        %v2254 = vpow.pop %v2253
        %v2255 = vmul.f32 %v2244, 1.442695
        %v2256 = vpow.pop %v2255
        %v2257 = vmul.f32 %v2245, 1.442695
        %v2258 = vpow.pop %v2257
        %v2259 = vmul.f32 %v2246, 1.442695
        %v2260 = vpow.pop %v2259
        %v2261 = vmul.f32 %v2247, 1.442695
        %v2262 = vpow.pop %v2261
        %v2263 = vmul.f32 %v2248, 1.442695
        %v2264 = vpow.pop %v2263
        %v2265 = vsel %vm1290, %v2250, 0.0
        %v2266 = vsel %vm2210, %v2252, 0.0
        %v2267 = vsel %vm2211, %v2254, 0.0
        %v2268 = vsel %vm2212, %v2256, 0.0
        %v2269 = vsel %vm2213, %v2258, 0.0
        %v2270 = vsel %vm2214, %v2260, 0.0
        %v2271 = vsel %vm2215, %v2262, 0.0
        %v2272 = vsel %vm2216, %v2264, 0.0
        %v2273 = vsel %vm2225, %v2265, 0.0
        %v2274 = vsel %vm2225, %v2266, 0.0
        %v2275 = vadd.f32 %v2273, %v2274
        %v2276 = vsel %vm2225, %v2267, 0.0
        %v2277 = vadd.f32 %v2275, %v2276
        %v2278 = vsel %vm2225, %v2268, 0.0
        %v2279 = vadd.f32 %v2277, %v2278
        %v2280 = vsel %vm2225, %v2269, 0.0
        %v2281 = vadd.f32 %v2279, %v2280
        %v2282 = vsel %vm2225, %v2270, 0.0
        %v2283 = vadd.f32 %v2281, %v2282
        %v2284 = vsel %vm2225, %v2271, 0.0
        %v2285 = vadd.f32 %v2283, %v2284
        %v2286 = vsel %vm2225, %v2272, 0.0
        %v2287 = vadd.f32 %v2285, %v2286
        %2289 = vset.pattern.permute.xlu0 0
        %2290 = vperm.xlu0 %2289, %v2265
        %v2291 = vpop.permute.xlu0 %2290
        %2294 = vset.pattern.permute.xlu0 0
        %2295 = vperm.xlu0 %2294, %v2266
        %v2296 = vpop.permute.xlu0 %2295
        %2299 = vset.pattern.permute.xlu0 0
        %2300 = vperm.xlu0 %2299, %v2267
        %v2301 = vpop.permute.xlu0 %2300
        %2304 = vset.pattern.permute.xlu0 0
        %2305 = vperm.xlu0 %2304, %v2268
        %v2306 = vpop.permute.xlu0 %2305
        %2309 = vset.pattern.permute.xlu0 0
        %2310 = vperm.xlu0 %2309, %v2269
        %v2311 = vpop.permute.xlu0 %2310
        %2314 = vset.pattern.permute.xlu0 0
        %2315 = vperm.xlu0 %2314, %v2270
        %v2316 = vpop.permute.xlu0 %2315
        %2319 = vset.pattern.permute.xlu0 0
        %2320 = vperm.xlu0 %2319, %v2271
        %v2321 = vpop.permute.xlu0 %2320
        %2324 = vset.pattern.permute.xlu0 0
        %2325 = vperm.xlu0 %2324, %v2272
        %v2326 = vpop.permute.xlu0 %2325
        %v2328 = vmul.f32 %v2149, %v2291
        %v2329 = vmul.f32 %v2150, %v2296
        %v2330 = vmul.f32 %v2151, %v2301
        %v2331 = vmul.f32 %v2152, %v2306
        %v2332 = vmul.f32 %v2153, %v2311
        %v2333 = vmul.f32 %v2154, %v2316
        %v2334 = vmul.f32 %v2155, %v2321
        %v2335 = vmul.f32 %v2156, %v2326
        %v2336 = vadd.f32 %v2328, %v2329
        %v2337 = vadd.f32 %v2336, %v2330
        %v2338 = vadd.f32 %v2337, %v2331
        %v2339 = vadd.f32 %v2338, %v2332
        %v2340 = vadd.f32 %v2339, %v2333
        %v2341 = vadd.f32 %v2340, %v2334
        %v2342 = vadd.f32 %v2341, %v2335
        %v2343 = vld [vmem:[#allocation6] sm:$0xff]
        %v2344 = vmax.f32 %v2343, %v2240
        %v2345 = vsub.f32 %v2343, %v2344
        %v2346 = vmul.f32 %v2345, 1.442695
        %v2347 = vpow.pop %v2346
        %v2348 = vsub.f32 %v2240, %v2344
        %v2349 = vmul.f32 %v2348, 1.442695
        %v2350 = vpow.pop %v2349
        %v2351 = vld [vmem:[#allocation7] sm:$0xff]
        %v2352 = vmul.f32 %v2347, %v2351
        %v2353 = vmul.f32 %v2350, %v2287
        %v2354 = vadd.f32 %v2352, %v2353
        %v2355 = vld [vmem:[#allocation8] sm:$0xff]
        %2357 = vset.pattern.permute.xlu0 0
        %2358 = vperm.xlu0 %2357, %v2347
        %v2359 = vpop.permute.xlu0 %2358
        %v2361 = vmul.f32 %v2359, %v2355
        %2363 = vset.pattern.permute.xlu0 0
        %2364 = vperm.xlu0 %2363, %v2350
        %v2365 = vpop.permute.xlu0 %2364
        %v2367 = vmul.f32 %v2365, %v2342
        %v2368 = vadd.f32 %v2361, %v2367
        %2369 = vst.msk [vmem:[#allocation6] sm:$0xff] %vm2225, %v2344
        %2370 = vst.msk [vmem:[#allocation7] sm:$0xff] %vm2225, %v2354
        %2371 = vst [vmem:[#allocation8] sm:$0xff] %v2368
        %p2372 = scmp.eq.s32.totalorder %s38, 1
        // Predicated region
        $region85: #{tpu_custom_call.1} parent=67 // pred_check
          %p2373 = pneg %p2372
        $region86: #{tpu_custom_call.1} parent=67 // pred_check_branch
          %2375 = sbr.rel (%p2373) target = $region88
        $region87: #{tpu_custom_call.1} parent=67 // pred_region
          %vm2376 = vcmp.gt.f32.partialorder %v2354, 0.0
          %v2377 = vsel %vm2376, %v2354, 1.0
          %2379 = vset.pattern.permute.xlu0 0
          %2380 = vperm.xlu0 %2379, %v2377
          %v2381 = vpop.permute.xlu0 %2380
          %v2383 = vrcp.pop %v2381
          %v2384 = vmul.f32 %v2368, %v2383
          %v2385 = vmax.f32 %v2384, 0.0
          %v2386 = vld [vmem:[%s8] sm:$0xff]
          %v2387 = vld [vmem:[%s8 + $0x8] sm:$0xff]
          %v2388 = vld [vmem:[%s8 + $0x10] sm:$0xff]
          %v2389 = vld [vmem:[%s8 + $0x18] sm:$0xff]
          %v2390 = vld [vmem:[%s8 + $0x20] sm:$0xff]
          %v2391 = vld [vmem:[%s8 + $0x28] sm:$0xff]
          %v2392 = vld [vmem:[%s8 + $0x30] sm:$0xff]
          %v2393 = vld [vmem:[%s8 + $0x38] sm:$0xff]
          %v2394 = vld [vmem:[%s8 + $0x40] sm:$0xff]
          %v2395 = vld [vmem:[%s8 + $0x48] sm:$0xff]
          %v2396 = vld [vmem:[%s8 + $0x50] sm:$0xff]
          %v2397 = vld [vmem:[%s8 + $0x58] sm:$0xff]
          %v2398 = vld [vmem:[%s8 + $0x60] sm:$0xff]
          %v2399 = vld [vmem:[%s8 + $0x68] sm:$0xff]
          %v2400 = vld [vmem:[%s8 + $0x70] sm:$0xff]
          %v2401 = vld [vmem:[%s8 + $0x78] sm:$0xff]
          %v2402 = vld [vmem:[%s9] sm:$0x1]
          %v2404 = vlaneseq
          %v2405 = vshrl.u32 %v2404, 7
          %v2406 = vsub.s32 0, %v2405
          %v2407 = vrot.slane %v2402, %v2406
          %2409 = vmatprep.subr.mxu0 0.0
          %2410 = vmatpush1.msra.mxu0 %v2401
          %2411 = vmatprep.subr.mxu0 0.0
          %2412 = vmatpush1.msra.mxu0 %v2400
          %2413 = vmatprep.subr.mxu0 0.0
          %2414 = vmatpush1.msra.mxu0 %v2399
          %2415 = vmatprep.subr.mxu0 0.0
          %2416 = vmatpush1.msra.mxu0 %v2398
          %2417 = vmatprep.subr.mxu0 0.0
          %2418 = vmatpush1.msra.mxu0 %v2397
          %2419 = vmatprep.subr.mxu0 0.0
          %2420 = vmatpush1.msra.mxu0 %v2396
          %2421 = vmatprep.subr.mxu0 0.0
          %2422 = vmatpush1.msra.mxu0 %v2395
          %2423 = vmatprep.subr.mxu0 0.0
          %2424 = vmatpush1.msra.mxu0 %v2394
          %2425 = vmatprep.subr.mxu0 0.0
          %2426 = vmatpush1.msra.mxu0 %v2393
          %2427 = vmatprep.subr.mxu0 0.0
          %2428 = vmatpush1.msra.mxu0 %v2392
          %2429 = vmatprep.subr.mxu0 0.0
          %2430 = vmatpush1.msra.mxu0 %v2391
          %2431 = vmatprep.subr.mxu0 0.0
          %2432 = vmatpush1.msra.mxu0 %v2390
          %2433 = vmatprep.subr.mxu0 0.0
          %2434 = vmatpush1.msra.mxu0 %v2389
          %2435 = vmatprep.subr.mxu0 0.0
          %2436 = vmatpush1.msra.mxu0 %v2388
          %2437 = vmatprep.subr.mxu0 0.0
          %2438 = vmatpush1.msra.mxu0 %v2387
          %2439 = vmatprep.subr.mxu0 0.0
          %2440 = vmatpush1.msra.mxu0 %v2386
          %2441 = vmatprep.subr.mxu0 0.0
          %2442 = vmatpush2.msra.mxu0 0.0
          %2443 = vmatprep.subr.mxu0 0.0
          %2444 = vmatpush2.msra.mxu0 0.0
          %2445 = vmatprep.subr.mxu0 0.0
          %2446 = vmatpush2.msra.mxu0 0.0
          %2447 = vmatprep.subr.mxu0 0.0
          %2448 = vmatpush2.msra.mxu0 0.0
          %2449 = vmatprep.subr.mxu0 0.0
          %2450 = vmatpush2.msra.mxu0 0.0
          %2451 = vmatprep.subr.mxu0 0.0
          %2452 = vmatpush2.msra.mxu0 0.0
          %2453 = vmatprep.subr.mxu0 0.0
          %2454 = vmatpush2.msra.mxu0 0.0
          %2455 = vmatprep.subr.mxu0 0.0
          %2456 = vmatpush2.msra.mxu0 0.0
          %2457 = vmatprep.subr.mxu0 0.0
          %2458 = vmatpush2.msra.mxu0 0.0
          %2459 = vmatprep.subr.mxu0 0.0
          %2460 = vmatpush2.msra.mxu0 0.0
          %2461 = vmatprep.subr.mxu0 0.0
          %2462 = vmatpush2.msra.mxu0 0.0
          %2463 = vmatprep.subr.mxu0 0.0
          %2464 = vmatpush2.msra.mxu0 0.0
          %2465 = vmatprep.subr.mxu0 0.0
          %2466 = vmatpush2.msra.mxu0 0.0
          %2467 = vmatprep.subr.mxu0 0.0
          %2468 = vmatpush2.msra.mxu0 0.0
          %2469 = vmatprep.subr.mxu0 0.0
          %2470 = vmatpush2.msra.mxu0 0.0
          %2471 = vmatprep.subr.mxu0 0.0
          %2472 = vmatpush2.msra.mxu0 0.0
          %2473 = vmatprep.mubr.f32.mxu0 0.0
          %2474 = vmatmul.mubr.f32.gmra.mxu0 %v2385
          %v2475 = vpop.f32.mrf.mxu0
          %v2476 = vadd.f32 %v2407, %v2475
          %v2477 = vpop.f32.mrf.mxu0
          %2478 = vdwg.mxu0
          %v2479 = vld [vmem:[%s10] sm:$0xff]
          %v2480 = vld [vmem:[%s10 + $0x8] sm:$0xff]
          %v2481 = vld [vmem:[%s10 + $0x10] sm:$0xff]
          %v2482 = vld [vmem:[%s10 + $0x18] sm:$0xff]
          %v2483 = vld [vmem:[%s10 + $0x20] sm:$0xff]
          %v2484 = vld [vmem:[%s10 + $0x28] sm:$0xff]
          %v2485 = vld [vmem:[%s10 + $0x30] sm:$0xff]
          %v2486 = vld [vmem:[%s10 + $0x38] sm:$0xff]
          %v2487 = vld [vmem:[%s10 + $0x40] sm:$0xff]
          %v2488 = vld [vmem:[%s10 + $0x48] sm:$0xff]
          %v2489 = vld [vmem:[%s10 + $0x50] sm:$0xff]
          %v2490 = vld [vmem:[%s10 + $0x58] sm:$0xff]
          %v2491 = vld [vmem:[%s10 + $0x60] sm:$0xff]
          %v2492 = vld [vmem:[%s10 + $0x68] sm:$0xff]
          %v2493 = vld [vmem:[%s10 + $0x70] sm:$0xff]
          %v2494 = vld [vmem:[%s10 + $0x78] sm:$0xff]
          %v2495 = vld [vmem:[#allocation10] sm:$0x1]
          %v2497 = vlaneseq
          %v2498 = vshrl.u32 %v2497, 7
          %v2499 = vsub.s32 0, %v2498
          %v2500 = vrot.slane %v2495, %v2499
          %2502 = vmatprep.subr.mxu0 0.0
          %2503 = vmatpush1.msra.mxu0 %v2494
          %2504 = vmatprep.subr.mxu0 0.0
          %2505 = vmatpush1.msra.mxu0 %v2493
          %2506 = vmatprep.subr.mxu0 0.0
          %2507 = vmatpush1.msra.mxu0 %v2492
          %2508 = vmatprep.subr.mxu0 0.0
          %2509 = vmatpush1.msra.mxu0 %v2491
          %2510 = vmatprep.subr.mxu0 0.0
          %2511 = vmatpush1.msra.mxu0 %v2490
          %2512 = vmatprep.subr.mxu0 0.0
          %2513 = vmatpush1.msra.mxu0 %v2489
          %2514 = vmatprep.subr.mxu0 0.0
          %2515 = vmatpush1.msra.mxu0 %v2488
          %2516 = vmatprep.subr.mxu0 0.0
          %2517 = vmatpush1.msra.mxu0 %v2487
          %2518 = vmatprep.subr.mxu0 0.0
          %2519 = vmatpush1.msra.mxu0 %v2486
          %2520 = vmatprep.subr.mxu0 0.0
          %2521 = vmatpush1.msra.mxu0 %v2485
          %2522 = vmatprep.subr.mxu0 0.0
          %2523 = vmatpush1.msra.mxu0 %v2484
          %2524 = vmatprep.subr.mxu0 0.0
          %2525 = vmatpush1.msra.mxu0 %v2483
          %2526 = vmatprep.subr.mxu0 0.0
          %2527 = vmatpush1.msra.mxu0 %v2482
          %2528 = vmatprep.subr.mxu0 0.0
          %2529 = vmatpush1.msra.mxu0 %v2481
          %2530 = vmatprep.subr.mxu0 0.0
          %2531 = vmatpush1.msra.mxu0 %v2480
          %2532 = vmatprep.subr.mxu0 0.0
          %2533 = vmatpush1.msra.mxu0 %v2479
          %2534 = vmatprep.subr.mxu0 0.0
          %2535 = vmatpush2.msra.mxu0 0.0
          %2536 = vmatprep.subr.mxu0 0.0
          %2537 = vmatpush2.msra.mxu0 0.0
          %2538 = vmatprep.subr.mxu0 0.0
          %2539 = vmatpush2.msra.mxu0 0.0
          %2540 = vmatprep.subr.mxu0 0.0
          %2541 = vmatpush2.msra.mxu0 0.0
          %2542 = vmatprep.subr.mxu0 0.0
          %2543 = vmatpush2.msra.mxu0 0.0
          %2544 = vmatprep.subr.mxu0 0.0
          %2545 = vmatpush2.msra.mxu0 0.0
          %2546 = vmatprep.subr.mxu0 0.0
          %2547 = vmatpush2.msra.mxu0 0.0
          %2548 = vmatprep.subr.mxu0 0.0
          %2549 = vmatpush2.msra.mxu0 0.0
          %2550 = vmatprep.subr.mxu0 0.0
          %2551 = vmatpush2.msra.mxu0 0.0
          %2552 = vmatprep.subr.mxu0 0.0
          %2553 = vmatpush2.msra.mxu0 0.0
          %2554 = vmatprep.subr.mxu0 0.0
          %2555 = vmatpush2.msra.mxu0 0.0
          %2556 = vmatprep.subr.mxu0 0.0
          %2557 = vmatpush2.msra.mxu0 0.0
          %2558 = vmatprep.subr.mxu0 0.0
          %2559 = vmatpush2.msra.mxu0 0.0
          %2560 = vmatprep.subr.mxu0 0.0
          %2561 = vmatpush2.msra.mxu0 0.0
          %2562 = vmatprep.subr.mxu0 0.0
          %2563 = vmatpush2.msra.mxu0 0.0
          %2564 = vmatprep.subr.mxu0 0.0
          %2565 = vmatpush2.msra.mxu0 0.0
          %2566 = vmatprep.mubr.f32.mxu0 0.0
          %2567 = vmatmul.mubr.f32.gmra.mxu0 %v2476
          %v2568 = vpop.f32.mrf.mxu0
          %v2569 = vadd.f32 %v2500, %v2568
          %v2570 = vpop.f32.mrf.mxu0
          %2571 = vdwg.mxu0
          %2572 = vst.msk [vmem:[%s570] sm:$0xff] %vm2225, %v2569
          %v2573 = vld [vmem:[%s558] sm:$0xff]
          %v2574 = vmax.f32 %v2569, 0.0
          %v2575 = vmul.f32 %v2569, %v2573
          %v2576 = vsub.f32 %v2574, %v2575
          %v2577 = vand.u32 2147483647, %v2569
          %v2578 = vsub.f32 0.0, %v2577
          %v2579 = vmul.f32 %v2578, 1.442695
          %v2580 = vpow.pop %v2579
          %v2581 = vadd.f32 %v2580, 1.0
          %v2582 = vlog2.pop %v2581
          %v2583 = vmul.f32 %v2582, 0.6931472
          %v2584 = vadd.f32 %v2576, %v2583
          %v2585 = vld [vmem:[%s562] sm:$0xff]
          %v2586 = vmul.f32 %v2584, %v2585
          %2587 = vst.msk [vmem:[%s566] sm:$0xff] %vm2225, %v2586
        $region88: #{tpu_custom_call.1} parent=67 // pred_fallthru
          _
        %p2588 = scmp.lt.s32.totalorder %s37, 0
        %s2589 = scalar_select %p2588, %s37, 0
        %s2590 = smul.addr %s2589, 8
        %s2591 = scalar_lea.vmem %s12, %s2590
        %p2592 = scmp.lt.s32.totalorder %s37, 0
        %s2593 = scalar_select %p2592, %s37, 0
        %s2594 = smul.addr %s2593, 8
        %s2595 = scalar_lea.vmem %s13, %s2594
        // Predicated region
        $region89: #{tpu_custom_call.1} parent=67 // pred_check
          %p2596 = pneg %p337
        $region90: #{tpu_custom_call.1} parent=67 // pred_check_branch
          %2598 = sbr.rel (%p2596) target = $region92
        $region91: #{tpu_custom_call.1} parent=67 // pred_region
          _
        $region92: #{tpu_custom_call.1} parent=67 // pred_fallthru
          _
        // Predicated region
        $region93: #{tpu_custom_call.1} parent=67 // pred_check
          %p2599 = pneg %p363
        $region94: #{tpu_custom_call.1} parent=67 // pred_check_branch
          %2601 = sbr.rel (%p2599) target = $region96
        $region95: #{tpu_custom_call.1} parent=67 // pred_region
          _
        $region96: #{tpu_custom_call.1} parent=67 // pred_fallthru
          _
        // Predicated region
        $region97: #{tpu_custom_call.1} parent=67 // pred_check
          %p2602 = pneg %p337
        $region98: #{tpu_custom_call.1} parent=67 // pred_check_branch
          %2604 = sbr.rel (%p2602) target = $region100
        $region99: #{tpu_custom_call.1} parent=67 // pred_region
          %p2605 = scmp.lt.s32.totalorder %s37, 0
          %s2606 = scalar_select %p2605, %s37, 0
          %s2607 = smul.addr %s2606, 8
          %s2608 = scalar_lea.vmem %s12, %s2607
        $region100: #{tpu_custom_call.1} parent=67 // pred_fallthru
          _
        // Predicated region
        $region101: #{tpu_custom_call.1} parent=67 // pred_check
          %p2609 = pneg %p363
        $region102: #{tpu_custom_call.1} parent=67 // pred_check_branch
          %2611 = sbr.rel (%p2609) target = $region104
        $region103: #{tpu_custom_call.1} parent=67 // pred_region
          %p2612 = scmp.lt.s32.totalorder %s37, 0
          %s2613 = scalar_select %p2612, %s37, 0
          %s2614 = smul.addr %s2613, 8
          %s2615 = scalar_lea.vmem %s13, %s2614
        $region104: #{tpu_custom_call.1} parent=67 // pred_fallthru
          _
      $region68: #{tpu_custom_call.1} parent=5 // pred_fallthru
        _
      %p2616 = scmp.le.s32.totalorder 2, %s28
      // Predicated region
      $region105: #{tpu_custom_call.1} parent=5 // pred_check
        %p2617 = pneg %p2616
      $region106: #{tpu_custom_call.1} parent=5 // pred_check_branch
        %2619 = sbr.rel (%p2617) target = $region108
      $region107: #{tpu_custom_call.1} parent=5 // pred_region
        %s2620 = ssub.s32 %s28, 2
      $region108: #{tpu_custom_call.1} parent=5 // pred_fallthru
        _
    $region6: #{tpu_custom_call.1} parent=1 // loop_footer
      %s32 = sadd.s32 1, %s28
    $region7: #{tpu_custom_call.1} parent=1 // loop_footer_branch
      %27 = sbr.rel target = $region3
    $region8: #{tpu_custom_call.1} parent=1 // loop_exit
      _
    %2621 = vsyncpa [#allocation12], 1
    %s2622 = scalar_lea.sflag [#allocation12], 1
    %2623 = vsyncpa %s2622, 1
    %2624 = vsyncpa [#allocation14], 1

</llo_original>
